<compile_context>
chip_gen: v7x
topology: tpu7x:2x2x1
jax: 0.10.0
libtpu: 0.0.40
codegen_flags: <defaults>
</compile_context>

<pallas_src>
import math

import jax
import jax.numpy as jnp
from jax.experimental import pallas as pl
from jax.experimental.pallas import tpu as pltpu

# ----------------------------- model config ---------------------------------
VOCAB = 128
HIDDEN = 64
N_LAYERS = 2
N_HEADS = 4
HEAD_DIM = HIDDEN // N_HEADS
INTERMEDIATE = 128
MAX_POS = 32
NUM_LABELS = 3          # entailment / neutral / contradiction
LANE_PAD = 128          # classifier output padded to a full lane width
LN_EPS = 1e-7           # DeBERTa layer_norm_eps
BATCH = 2
SEQ = 16


# ----------------------------- fused kernel ---------------------------------
def _deberta_fwd_kernel(x_ref, bias_ref, eg_ref, eb_ref,
                        wqkv_ref, bqkv_ref, wo_ref, bo_ref,
                        ln1g_ref, ln1b_ref, w1_ref, b1_ref,
                        w2_ref, b2_ref, ln2g_ref, ln2b_ref,
                        poolw_ref, poolb_ref, clsw_ref, clsb_ref,
                        out_ref):
    """Whole DeBERTa forward on VMEM-resident tensors (single grid step)."""
    f32 = jnp.float32
    bf16 = jnp.bfloat16

    def layer_norm(v, g, b):
        mean = jnp.mean(v, axis=-1, keepdims=True)
        var = jnp.mean((v - mean) ** 2, axis=-1, keepdims=True)
        return (v - mean) * jax.lax.rsqrt(var + LN_EPS) * g + b

    def matmul(a, w):
        # bf16 operands, f32 MXU accumulation.
        return jnp.dot(a.astype(bf16), w.astype(bf16),
                       preferred_element_type=f32)

    bias = bias_ref[...]                                     # (T, T) f32
    x = layer_norm(x_ref[...].astype(f32), eg_ref[...], eb_ref[...])
    num_tok = x.shape[0]

    # TODO(synk): DeBERTa's disentangled (content<->position) relative attention
    # and its sqrt(d * scale_factor) scaling are not reproduced; standard scaled
    # dot-product attention with the padding mask is used instead.
    scale = 1.0 / math.sqrt(HEAD_DIM)

    for l in range(N_LAYERS):
        # Fused QKV projection: one lane-dense (T, 3H) matmul.
        qkv = matmul(x, wqkv_ref[l]) + bqkv_ref[l]           # (T, 3H) f32
        wo_l = wo_ref[l].astype(bf16)                        # (H, H) bf16

        attn = jnp.zeros((num_tok, HIDDEN), f32)
        for h in range(N_HEADS):
            q = qkv[:, h * HEAD_DIM:(h + 1) * HEAD_DIM]
            k = qkv[:, HIDDEN + h * HEAD_DIM:HIDDEN + (h + 1) * HEAD_DIM]
            v = qkv[:, 2 * HIDDEN + h * HEAD_DIM:2 * HIDDEN + (h + 1) * HEAD_DIM]
            # scores over all tokens; cross-sequence pairs + padded keys are
            # disabled by the precomputed additive bias (kept in f32).
            s = jax.lax.dot_general(
                q.astype(bf16), k.astype(bf16),
                (((1,), (1,)), ((), ())),
                preferred_element_type=f32) * scale + bias   # (T, T)
            s = s - jnp.max(s, axis=-1, keepdims=True)
            p = jnp.exp(s)
            p = p * pl.reciprocal(jnp.sum(p, axis=-1, keepdims=True),
                                  approx=True)
            ctx = jnp.dot(p.astype(bf16), v.astype(bf16),
                          preferred_element_type=f32)        # (T, D)
            # Fold the per-head output projection into the head loop.
            attn = attn + jnp.dot(ctx.astype(bf16),
                                  wo_l[h * HEAD_DIM:(h + 1) * HEAD_DIM, :],
                                  preferred_element_type=f32)
        attn = attn + bo_ref[l]

        # Residual + LayerNorm fused here (dropout is identity at inference).
        x = layer_norm(attn + x, ln1g_ref[l], ln1b_ref[l])

        # Feed-forward (lane-dense INTERMEDIATE=128) + residual + LayerNorm.
        hmid = jax.nn.gelu(matmul(x, w1_ref[l]) + b1_ref[l])
        ffn = matmul(hmid, w2_ref[l]) + b2_ref[l]
        x = layer_norm(ffn + x, ln2g_ref[l], ln2b_ref[l])

    # Context pooler + classifier, computed for all tokens (trivial at these
    # sizes) with a 128-lane padded classifier so the single output store is
    # lane-dense.  The first token of each sequence is selected outside.
    pooled = jax.nn.gelu(matmul(x, poolw_ref[...]) + poolb_ref[...])
    logits = matmul(pooled, clsw_ref[...]) + clsb_ref[...]   # (T, LANE_PAD)
    out_ref[...] = logits.astype(out_ref.dtype)


def _full_block_spec(arr):
    nd = arr.ndim
    return pl.BlockSpec(arr.shape, lambda i, _nd=nd: (0,) * _nd)


# ----------------------------- parameter init -------------------------------
def init_params(key):
    keys = jax.random.split(key, 10)

    def rand(k, shape):
        return jax.random.normal(k, shape, jnp.float32) * 0.02

    cls_core = rand(keys[8], (HIDDEN, NUM_LABELS))
    cls_w = jnp.zeros((HIDDEN, LANE_PAD), jnp.float32).at[:, :NUM_LABELS].set(cls_core)

    params = {
        "word_emb": rand(keys[0], (VOCAB, HIDDEN)),
        "pos_emb": rand(keys[1], (MAX_POS, HIDDEN)),
        "emb_ln_g": jnp.ones((1, HIDDEN), jnp.float32),
        "emb_ln_b": jnp.zeros((1, HIDDEN), jnp.float32),
        # Per-layer weights stacked along a leading layer axis; matmul weights
        # stored in bf16 (f32 accumulation inside the kernel).
        "wqkv": rand(keys[2], (N_LAYERS, HIDDEN, 3 * HIDDEN)).astype(jnp.bfloat16),
        "bqkv": jnp.zeros((N_LAYERS, 1, 3 * HIDDEN), jnp.float32),
        "wo": rand(keys[3], (N_LAYERS, HIDDEN, HIDDEN)).astype(jnp.bfloat16),
        "bo": jnp.zeros((N_LAYERS, 1, HIDDEN), jnp.float32),
        "ln1_g": jnp.ones((N_LAYERS, 1, HIDDEN), jnp.float32),
        "ln1_b": jnp.zeros((N_LAYERS, 1, HIDDEN), jnp.float32),
        "w1": rand(keys[4], (N_LAYERS, HIDDEN, INTERMEDIATE)).astype(jnp.bfloat16),
        "b1": jnp.zeros((N_LAYERS, 1, INTERMEDIATE), jnp.float32),
        "w2": rand(keys[5], (N_LAYERS, INTERMEDIATE, HIDDEN)).astype(jnp.bfloat16),
        "b2": jnp.zeros((N_LAYERS, 1, HIDDEN), jnp.float32),
        "ln2_g": jnp.ones((N_LAYERS, 1, HIDDEN), jnp.float32),
        "ln2_b": jnp.zeros((N_LAYERS, 1, HIDDEN), jnp.float32),
        "pool_w": rand(keys[6], (HIDDEN, HIDDEN)).astype(jnp.bfloat16),
        "pool_b": jnp.zeros((1, HIDDEN), jnp.float32),
        "cls_w": cls_w.astype(jnp.bfloat16),                  # padded to 128 lanes
        "cls_b": jnp.zeros((1, LANE_PAD), jnp.float32),
    }
    return params


# ----------------------------- forward pass ---------------------------------
def deberta_forward(params, input_ids, attention_mask):
    B, S = input_ids.shape
    T = B * S

    # Embedding gather (glue, plain JAX) — the rest runs in one Pallas kernel.
    pos = jnp.arange(S)
    x = jnp.take(params["word_emb"], input_ids, axis=0) + params["pos_emb"][pos][None]
    x = x.reshape(T, HIDDEN).astype(jnp.float32)

    # Combined additive attention bias over flattened tokens: blocks tokens
    # from other sequences and padded keys (kept in f32; -1e9 entries vanish
    # after the max-subtracted softmax).
    tok_seq = jnp.arange(T) // S
    same_seq = tok_seq[:, None] == tok_seq[None, :]
    key_valid = attention_mask.reshape(T) > 0
    allowed = same_seq & key_valid[None, :]
    bias = jnp.where(allowed, 0.0, -1e9).astype(jnp.float32)  # (T, T)

    args = (x, bias, params["emb_ln_g"], params["emb_ln_b"],
            params["wqkv"], params["bqkv"], params["wo"], params["bo"],
            params["ln1_g"], params["ln1_b"], params["w1"], params["b1"],
            params["w2"], params["b2"], params["ln2_g"], params["ln2_b"],
            params["pool_w"], params["pool_b"], params["cls_w"], params["cls_b"])

    logits_all = pl.pallas_call(
        _deberta_fwd_kernel,
        out_shape=jax.ShapeDtypeStruct((T, LANE_PAD), jnp.float32),
        grid=(1,),
        in_specs=[_full_block_spec(a) for a in args],
        out_specs=pl.BlockSpec((T, LANE_PAD), lambda i: (0, 0)),
        compiler_params=pltpu.CompilerParams(
            dimension_semantics=("arbitrary",)),
    )(*args)

    # DeBERTa ContextPooler uses the first token of each sequence; classifier
    # output was lane-padded to 128 — slice the real labels here.
    logits = logits_all.reshape(B, S, LANE_PAD)[:, 0, :NUM_LABELS]
    return logits


# --------------------------------- main --------------------------------------
if __name__ == "__main__":
    key = jax.random.PRNGKey(0)
    k_param, k_ids = jax.random.split(key)

    params = init_params(k_param)

    input_ids = jax.random.randint(k_ids, (BATCH, SEQ), 0, VOCAB, dtype=jnp.int32)
    attention_mask = jnp.ones((BATCH, SEQ), dtype=jnp.int32)
    # pad out the tail of sequence 1 to exercise the mask
    attention_mask = attention_mask.at[1, SEQ - 4:].set(0)

    logits = jax.jit(deberta_forward)(params, input_ids, attention_mask)
    logits = jax.block_until_ready(logits)

    assert logits.shape == (BATCH, NUM_LABELS)
    assert bool(jnp.all(jnp.isfinite(logits)))
    print("KERNEL_OK")
</pallas_src>

<mosaic_0001>
module attributes {stable_mosaic.version = 11 : i64} {
  func.func @_deberta_fwd_kernel(%arg0: i32, %arg1: memref<32x64xf32, #tpu.memory_space<vmem>>, %arg2: memref<32x32xf32, #tpu.memory_space<vmem>>, %arg3: memref<1x64xf32, #tpu.memory_space<vmem>>, %arg4: memref<1x64xf32, #tpu.memory_space<vmem>>, %arg5: memref<2x64x192xbf16, #tpu.memory_space<vmem>>, %arg6: memref<2x1x192xf32, #tpu.memory_space<vmem>>, %arg7: memref<2x64x64xbf16, #tpu.memory_space<vmem>>, %arg8: memref<2x1x64xf32, #tpu.memory_space<vmem>>, %arg9: memref<2x1x64xf32, #tpu.memory_space<vmem>>, %arg10: memref<2x1x64xf32, #tpu.memory_space<vmem>>, %arg11: memref<2x64x128xbf16, #tpu.memory_space<vmem>>, %arg12: memref<2x1x128xf32, #tpu.memory_space<vmem>>, %arg13: memref<2x128x64xbf16, #tpu.memory_space<vmem>>, %arg14: memref<2x1x64xf32, #tpu.memory_space<vmem>>, %arg15: memref<2x1x64xf32, #tpu.memory_space<vmem>>, %arg16: memref<2x1x64xf32, #tpu.memory_space<vmem>>, %arg17: memref<64x64xbf16, #tpu.memory_space<vmem>>, %arg18: memref<1x64xf32, #tpu.memory_space<vmem>>, %arg19: memref<64x128xbf16, #tpu.memory_space<vmem>>, %arg20: memref<1x128xf32, #tpu.memory_space<vmem>>, %arg21: memref<32x128xf32, #tpu.memory_space<vmem>>) attributes {dimension_semantics = [#tpu.dimension_semantics<arbitrary>], iteration_bounds = array<i64: 1>, scalar_prefetch = 0 : i64, scratch_operands = 0 : i64, tpu.core_type = #tpu.core_type<tc>, window_params = [{pipeline_mode = #tpu.pipeline_mode<synchronous>, transform_indices = @transform_0, window_bounds = array<i64: 32, 64>}, {pipeline_mode = #tpu.pipeline_mode<synchronous>, transform_indices = @transform_1, window_bounds = array<i64: 32, 32>}, {pipeline_mode = #tpu.pipeline_mode<synchronous>, transform_indices = @transform_2, window_bounds = array<i64: 1, 64>}, {pipeline_mode = #tpu.pipeline_mode<synchronous>, transform_indices = @transform_3, window_bounds = array<i64: 1, 64>}, {pipeline_mode = #tpu.pipeline_mode<synchronous>, transform_indices = @transform_4, window_bounds = array<i64: 2, 64, 192>}, {pipeline_mode = #tpu.pipeline_mode<synchronous>, transform_indices = @transform_5, window_bounds = array<i64: 2, 1, 192>}, {pipeline_mode = #tpu.pipeline_mode<synchronous>, transform_indices = @transform_6, window_bounds = array<i64: 2, 64, 64>}, {pipeline_mode = #tpu.pipeline_mode<synchronous>, transform_indices = @transform_7, window_bounds = array<i64: 2, 1, 64>}, {pipeline_mode = #tpu.pipeline_mode<synchronous>, transform_indices = @transform_8, window_bounds = array<i64: 2, 1, 64>}, {pipeline_mode = #tpu.pipeline_mode<synchronous>, transform_indices = @transform_9, window_bounds = array<i64: 2, 1, 64>}, {pipeline_mode = #tpu.pipeline_mode<synchronous>, transform_indices = @transform_10, window_bounds = array<i64: 2, 64, 128>}, {pipeline_mode = #tpu.pipeline_mode<synchronous>, transform_indices = @transform_11, window_bounds = array<i64: 2, 1, 128>}, {pipeline_mode = #tpu.pipeline_mode<synchronous>, transform_indices = @transform_12, window_bounds = array<i64: 2, 128, 64>}, {pipeline_mode = #tpu.pipeline_mode<synchronous>, transform_indices = @transform_13, window_bounds = array<i64: 2, 1, 64>}, {pipeline_mode = #tpu.pipeline_mode<synchronous>, transform_indices = @transform_14, window_bounds = array<i64: 2, 1, 64>}, {pipeline_mode = #tpu.pipeline_mode<synchronous>, transform_indices = @transform_15, window_bounds = array<i64: 2, 1, 64>}, {pipeline_mode = #tpu.pipeline_mode<synchronous>, transform_indices = @transform_16, window_bounds = array<i64: 64, 64>}, {pipeline_mode = #tpu.pipeline_mode<synchronous>, transform_indices = @transform_17, window_bounds = array<i64: 1, 64>}, {pipeline_mode = #tpu.pipeline_mode<synchronous>, transform_indices = @transform_18, window_bounds = array<i64: 64, 128>}, {pipeline_mode = #tpu.pipeline_mode<synchronous>, transform_indices = @transform_19, window_bounds = array<i64: 1, 128>}, {pipeline_mode = #tpu.pipeline_mode<synchronous>, transform_indices = @transform_20, window_bounds = array<i64: 32, 128>}]} {
    %c0 = arith.constant 0 : index
    %c0_0 = arith.constant 0 : index
    %0 = vector.load %arg2[%c0, %c0_0] : memref<32x32xf32, #tpu.memory_space<vmem>>, vector<32x32xf32>
    %c0_1 = arith.constant 0 : index
    %c0_2 = arith.constant 0 : index
    %1 = vector.load %arg1[%c0_1, %c0_2] : memref<32x64xf32, #tpu.memory_space<vmem>>, vector<32x64xf32>
    %c0_3 = arith.constant 0 : index
    %c0_4 = arith.constant 0 : index
    %2 = vector.load %arg3[%c0_3, %c0_4] : memref<1x64xf32, #tpu.memory_space<vmem>>, vector<1x64xf32>
    %c0_5 = arith.constant 0 : index
    %c0_6 = arith.constant 0 : index
    %3 = vector.load %arg4[%c0_5, %c0_6] : memref<1x64xf32, #tpu.memory_space<vmem>>, vector<1x64xf32>
    %cst = arith.constant dense<0.000000e+00> : vector<32xf32>
    %4 = vector.multi_reduction <add>, %1, %cst [1] : vector<32x64xf32> to vector<32xf32>
    %5 = vector.shape_cast %4 : vector<32xf32> to vector<32x1xf32>
    %cst_7 = arith.constant 6.400000e+01 : f32
    %6 = vector.broadcast %cst_7 : f32 to vector<32x1xf32>
    %7 = arith.divf %5, %6 : vector<32x1xf32>
    %8 = vector.broadcast %7 : vector<32x1xf32> to vector<32x64xf32>
    %9 = arith.subf %1, %8 : vector<32x64xf32>
    %10 = arith.mulf %9, %9 : vector<32x64xf32>
    %cst_8 = arith.constant dense<0.000000e+00> : vector<32xf32>
    %11 = vector.multi_reduction <add>, %10, %cst_8 [1] : vector<32x64xf32> to vector<32xf32>
    %12 = vector.shape_cast %11 : vector<32xf32> to vector<32x1xf32>
    %cst_9 = arith.constant 6.400000e+01 : f32
    %13 = vector.broadcast %cst_9 : f32 to vector<32x1xf32>
    %14 = arith.divf %12, %13 : vector<32x1xf32>
    %15 = vector.broadcast %7 : vector<32x1xf32> to vector<32x64xf32>
    %16 = arith.subf %1, %15 : vector<32x64xf32>
    %cst_10 = arith.constant 1.000000e-07 : f32
    %17 = vector.broadcast %cst_10 : f32 to vector<32x1xf32>
    %18 = arith.addf %14, %17 : vector<32x1xf32>
    %19 = math.rsqrt %18 : vector<32x1xf32>
    %20 = vector.broadcast %19 : vector<32x1xf32> to vector<32x64xf32>
    %21 = arith.mulf %16, %20 : vector<32x64xf32>
    %22 = vector.broadcast %2 : vector<1x64xf32> to vector<32x64xf32>
    %23 = arith.mulf %21, %22 : vector<32x64xf32>
    %24 = vector.broadcast %3 : vector<1x64xf32> to vector<32x64xf32>
    %25 = arith.addf %23, %24 : vector<32x64xf32>
    %c0_11 = arith.constant 0 : index
    %c0_12 = arith.constant 0 : index
    %c0_13 = arith.constant 0 : index
    %26 = vector.load %arg5[%c0_11, %c0_12, %c0_13] : memref<2x64x192xbf16, #tpu.memory_space<vmem>>, vector<1x64x192xbf16>
    %27 = vector.shape_cast %26 : vector<1x64x192xbf16> to vector<64x192xbf16>
    %28 = arith.truncf %25 : vector<32x64xf32> to vector<32x64xbf16>
    %cst_14 = arith.constant dense<0.000000e+00> : vector<32x192xf32>
    %29 = tpu.matmul %28, %27, %cst_14 {dimension_numbers = #tpu.dot_dimension_numbers<[1], [0], [0], [1], [0, 0, 1, 1], [], []>} : vector<32x64xbf16>, vector<64x192xbf16>, vector<32x192xf32> -> vector<32x192xf32>
    %c0_15 = arith.constant 0 : index
    %c0_16 = arith.constant 0 : index
    %c0_17 = arith.constant 0 : index
    %30 = vector.load %arg6[%c0_15, %c0_16, %c0_17] : memref<2x1x192xf32, #tpu.memory_space<vmem>>, vector<1x1x192xf32>
    %31 = vector.shape_cast %30 : vector<1x1x192xf32> to vector<1x192xf32>
    %32 = vector.broadcast %31 : vector<1x192xf32> to vector<32x192xf32>
    %33 = arith.addf %29, %32 : vector<32x192xf32>
    %c0_18 = arith.constant 0 : index
    %c0_19 = arith.constant 0 : index
    %c0_20 = arith.constant 0 : index
    %34 = vector.load %arg7[%c0_18, %c0_19, %c0_20] : memref<2x64x64xbf16, #tpu.memory_space<vmem>>, vector<1x64x64xbf16>
    %35 = vector.shape_cast %34 : vector<1x64x64xbf16> to vector<64x64xbf16>
    %cst_21 = arith.constant 0.000000e+00 : f32
    %36 = vector.broadcast %cst_21 : f32 to vector<32x64xf32>
    %37 = vector.extract_strided_slice %33 {offsets = [0, 0], sizes = [32, 16], strides = [1, 1]} : vector<32x192xf32> to vector<32x16xf32>
    %38 = vector.extract_strided_slice %33 {offsets = [0, 64], sizes = [32, 16], strides = [1, 1]} : vector<32x192xf32> to vector<32x16xf32>
    %39 = vector.extract_strided_slice %33 {offsets = [0, 128], sizes = [32, 16], strides = [1, 1]} : vector<32x192xf32> to vector<32x16xf32>
    %40 = arith.truncf %37 : vector<32x16xf32> to vector<32x16xbf16>
    %41 = arith.truncf %38 : vector<32x16xf32> to vector<32x16xbf16>
    %cst_22 = arith.constant dense<0.000000e+00> : vector<32x32xf32>
    %42 = tpu.matmul %40, %41, %cst_22 {dimension_numbers = #tpu.dot_dimension_numbers<[1], [1], [0], [0], [0, 0, 1, 0], [], []>} : vector<32x16xbf16>, vector<32x16xbf16>, vector<32x32xf32> -> vector<32x32xf32>
    %cst_23 = arith.constant 2.500000e-01 : f32
    %43 = vector.broadcast %cst_23 : f32 to vector<32x32xf32>
    %44 = arith.mulf %42, %43 : vector<32x32xf32>
    %45 = arith.addf %44, %0 : vector<32x32xf32>
    %cst_24 = arith.constant dense<0xFF800000> : vector<32xf32>
    %46 = vector.multi_reduction <maximumf>, %45, %cst_24 [1] : vector<32x32xf32> to vector<32xf32>
    %47 = vector.shape_cast %46 : vector<32xf32> to vector<32x1xf32>
    %48 = vector.broadcast %47 : vector<32x1xf32> to vector<32x32xf32>
    %49 = arith.subf %45, %48 : vector<32x32xf32>
    %50 = math.exp %49 : vector<32x32xf32>
    %cst_25 = arith.constant dense<0.000000e+00> : vector<32xf32>
    %51 = vector.multi_reduction <add>, %50, %cst_25 [1] : vector<32x32xf32> to vector<32xf32>
    %52 = vector.shape_cast %51 : vector<32xf32> to vector<32x1xf32>
    %53 = tpu.reciprocal %52 {approx = true} : vector<32x1xf32> -> vector<32x1xf32>
    %54 = vector.broadcast %53 : vector<32x1xf32> to vector<32x32xf32>
    %55 = arith.mulf %50, %54 : vector<32x32xf32>
    %56 = arith.truncf %55 : vector<32x32xf32> to vector<32x32xbf16>
    %57 = arith.truncf %39 : vector<32x16xf32> to vector<32x16xbf16>
    %cst_26 = arith.constant dense<0.000000e+00> : vector<32x16xf32>
    %58 = tpu.matmul %56, %57, %cst_26 {dimension_numbers = #tpu.dot_dimension_numbers<[1], [0], [0], [1], [0, 0, 1, 1], [], []>} : vector<32x32xbf16>, vector<32x16xbf16>, vector<32x16xf32> -> vector<32x16xf32>
    %59 = arith.truncf %58 : vector<32x16xf32> to vector<32x16xbf16>
    %60 = vector.extract_strided_slice %35 {offsets = [0, 0], sizes = [16, 64], strides = [1, 1]} : vector<64x64xbf16> to vector<16x64xbf16>
    %cst_27 = arith.constant dense<0.000000e+00> : vector<32x64xf32>
    %61 = tpu.matmul %59, %60, %cst_27 {dimension_numbers = #tpu.dot_dimension_numbers<[1], [0], [0], [1], [0, 0, 1, 1], [], []>} : vector<32x16xbf16>, vector<16x64xbf16>, vector<32x64xf32> -> vector<32x64xf32>
    %62 = arith.addf %36, %61 : vector<32x64xf32>
    %63 = vector.extract_strided_slice %33 {offsets = [0, 16], sizes = [32, 16], strides = [1, 1]} : vector<32x192xf32> to vector<32x16xf32>
    %64 = vector.extract_strided_slice %33 {offsets = [0, 80], sizes = [32, 16], strides = [1, 1]} : vector<32x192xf32> to vector<32x16xf32>
    %65 = vector.extract_strided_slice %33 {offsets = [0, 144], sizes = [32, 16], strides = [1, 1]} : vector<32x192xf32> to vector<32x16xf32>
    %66 = arith.truncf %63 : vector<32x16xf32> to vector<32x16xbf16>
    %67 = arith.truncf %64 : vector<32x16xf32> to vector<32x16xbf16>
    %cst_28 = arith.constant dense<0.000000e+00> : vector<32x32xf32>
    %68 = tpu.matmul %66, %67, %cst_28 {dimension_numbers = #tpu.dot_dimension_numbers<[1], [1], [0], [0], [0, 0, 1, 0], [], []>} : vector<32x16xbf16>, vector<32x16xbf16>, vector<32x32xf32> -> vector<32x32xf32>
    %cst_29 = arith.constant 2.500000e-01 : f32
    %69 = vector.broadcast %cst_29 : f32 to vector<32x32xf32>
    %70 = arith.mulf %68, %69 : vector<32x32xf32>
    %71 = arith.addf %70, %0 : vector<32x32xf32>
    %cst_30 = arith.constant dense<0xFF800000> : vector<32xf32>
    %72 = vector.multi_reduction <maximumf>, %71, %cst_30 [1] : vector<32x32xf32> to vector<32xf32>
    %73 = vector.shape_cast %72 : vector<32xf32> to vector<32x1xf32>
    %74 = vector.broadcast %73 : vector<32x1xf32> to vector<32x32xf32>
    %75 = arith.subf %71, %74 : vector<32x32xf32>
    %76 = math.exp %75 : vector<32x32xf32>
    %cst_31 = arith.constant dense<0.000000e+00> : vector<32xf32>
    %77 = vector.multi_reduction <add>, %76, %cst_31 [1] : vector<32x32xf32> to vector<32xf32>
    %78 = vector.shape_cast %77 : vector<32xf32> to vector<32x1xf32>
    %79 = tpu.reciprocal %78 {approx = true} : vector<32x1xf32> -> vector<32x1xf32>
    %80 = vector.broadcast %79 : vector<32x1xf32> to vector<32x32xf32>
    %81 = arith.mulf %76, %80 : vector<32x32xf32>
    %82 = arith.truncf %81 : vector<32x32xf32> to vector<32x32xbf16>
    %83 = arith.truncf %65 : vector<32x16xf32> to vector<32x16xbf16>
    %cst_32 = arith.constant dense<0.000000e+00> : vector<32x16xf32>
    %84 = tpu.matmul %82, %83, %cst_32 {dimension_numbers = #tpu.dot_dimension_numbers<[1], [0], [0], [1], [0, 0, 1, 1], [], []>} : vector<32x32xbf16>, vector<32x16xbf16>, vector<32x16xf32> -> vector<32x16xf32>
    %85 = arith.truncf %84 : vector<32x16xf32> to vector<32x16xbf16>
    %86 = vector.extract_strided_slice %35 {offsets = [16, 0], sizes = [16, 64], strides = [1, 1]} : vector<64x64xbf16> to vector<16x64xbf16>
    %cst_33 = arith.constant dense<0.000000e+00> : vector<32x64xf32>
    %87 = tpu.matmul %85, %86, %cst_33 {dimension_numbers = #tpu.dot_dimension_numbers<[1], [0], [0], [1], [0, 0, 1, 1], [], []>} : vector<32x16xbf16>, vector<16x64xbf16>, vector<32x64xf32> -> vector<32x64xf32>
    %88 = arith.addf %62, %87 : vector<32x64xf32>
    %89 = vector.extract_strided_slice %33 {offsets = [0, 32], sizes = [32, 16], strides = [1, 1]} : vector<32x192xf32> to vector<32x16xf32>
    %90 = vector.extract_strided_slice %33 {offsets = [0, 96], sizes = [32, 16], strides = [1, 1]} : vector<32x192xf32> to vector<32x16xf32>
    %91 = vector.extract_strided_slice %33 {offsets = [0, 160], sizes = [32, 16], strides = [1, 1]} : vector<32x192xf32> to vector<32x16xf32>
    %92 = arith.truncf %89 : vector<32x16xf32> to vector<32x16xbf16>
    %93 = arith.truncf %90 : vector<32x16xf32> to vector<32x16xbf16>
    %cst_34 = arith.constant dense<0.000000e+00> : vector<32x32xf32>
    %94 = tpu.matmul %92, %93, %cst_34 {dimension_numbers = #tpu.dot_dimension_numbers<[1], [1], [0], [0], [0, 0, 1, 0], [], []>} : vector<32x16xbf16>, vector<32x16xbf16>, vector<32x32xf32> -> vector<32x32xf32>
    %cst_35 = arith.constant 2.500000e-01 : f32
    %95 = vector.broadcast %cst_35 : f32 to vector<32x32xf32>
    %96 = arith.mulf %94, %95 : vector<32x32xf32>
    %97 = arith.addf %96, %0 : vector<32x32xf32>
    %cst_36 = arith.constant dense<0xFF800000> : vector<32xf32>
    %98 = vector.multi_reduction <maximumf>, %97, %cst_36 [1] : vector<32x32xf32> to vector<32xf32>
    %99 = vector.shape_cast %98 : vector<32xf32> to vector<32x1xf32>
    %100 = vector.broadcast %99 : vector<32x1xf32> to vector<32x32xf32>
    %101 = arith.subf %97, %100 : vector<32x32xf32>
    %102 = math.exp %101 : vector<32x32xf32>
    %cst_37 = arith.constant dense<0.000000e+00> : vector<32xf32>
    %103 = vector.multi_reduction <add>, %102, %cst_37 [1] : vector<32x32xf32> to vector<32xf32>
    %104 = vector.shape_cast %103 : vector<32xf32> to vector<32x1xf32>
    %105 = tpu.reciprocal %104 {approx = true} : vector<32x1xf32> -> vector<32x1xf32>
    %106 = vector.broadcast %105 : vector<32x1xf32> to vector<32x32xf32>
    %107 = arith.mulf %102, %106 : vector<32x32xf32>
    %108 = arith.truncf %107 : vector<32x32xf32> to vector<32x32xbf16>
    %109 = arith.truncf %91 : vector<32x16xf32> to vector<32x16xbf16>
    %cst_38 = arith.constant dense<0.000000e+00> : vector<32x16xf32>
    %110 = tpu.matmul %108, %109, %cst_38 {dimension_numbers = #tpu.dot_dimension_numbers<[1], [0], [0], [1], [0, 0, 1, 1], [], []>} : vector<32x32xbf16>, vector<32x16xbf16>, vector<32x16xf32> -> vector<32x16xf32>
    %111 = arith.truncf %110 : vector<32x16xf32> to vector<32x16xbf16>
    %112 = vector.extract_strided_slice %35 {offsets = [32, 0], sizes = [16, 64], strides = [1, 1]} : vector<64x64xbf16> to vector<16x64xbf16>
    %cst_39 = arith.constant dense<0.000000e+00> : vector<32x64xf32>
    %113 = tpu.matmul %111, %112, %cst_39 {dimension_numbers = #tpu.dot_dimension_numbers<[1], [0], [0], [1], [0, 0, 1, 1], [], []>} : vector<32x16xbf16>, vector<16x64xbf16>, vector<32x64xf32> -> vector<32x64xf32>
    %114 = arith.addf %88, %113 : vector<32x64xf32>
    %115 = vector.extract_strided_slice %33 {offsets = [0, 48], sizes = [32, 16], strides = [1, 1]} : vector<32x192xf32> to vector<32x16xf32>
    %116 = vector.extract_strided_slice %33 {offsets = [0, 112], sizes = [32, 16], strides = [1, 1]} : vector<32x192xf32> to vector<32x16xf32>
    %117 = vector.extract_strided_slice %33 {offsets = [0, 176], sizes = [32, 16], strides = [1, 1]} : vector<32x192xf32> to vector<32x16xf32>
    %118 = arith.truncf %115 : vector<32x16xf32> to vector<32x16xbf16>
    %119 = arith.truncf %116 : vector<32x16xf32> to vector<32x16xbf16>
    %cst_40 = arith.constant dense<0.000000e+00> : vector<32x32xf32>
    %120 = tpu.matmul %118, %119, %cst_40 {dimension_numbers = #tpu.dot_dimension_numbers<[1], [1], [0], [0], [0, 0, 1, 0], [], []>} : vector<32x16xbf16>, vector<32x16xbf16>, vector<32x32xf32> -> vector<32x32xf32>
    %cst_41 = arith.constant 2.500000e-01 : f32
    %121 = vector.broadcast %cst_41 : f32 to vector<32x32xf32>
    %122 = arith.mulf %120, %121 : vector<32x32xf32>
    %123 = arith.addf %122, %0 : vector<32x32xf32>
    %cst_42 = arith.constant dense<0xFF800000> : vector<32xf32>
    %124 = vector.multi_reduction <maximumf>, %123, %cst_42 [1] : vector<32x32xf32> to vector<32xf32>
    %125 = vector.shape_cast %124 : vector<32xf32> to vector<32x1xf32>
    %126 = vector.broadcast %125 : vector<32x1xf32> to vector<32x32xf32>
    %127 = arith.subf %123, %126 : vector<32x32xf32>
    %128 = math.exp %127 : vector<32x32xf32>
    %cst_43 = arith.constant dense<0.000000e+00> : vector<32xf32>
    %129 = vector.multi_reduction <add>, %128, %cst_43 [1] : vector<32x32xf32> to vector<32xf32>
    %130 = vector.shape_cast %129 : vector<32xf32> to vector<32x1xf32>
    %131 = tpu.reciprocal %130 {approx = true} : vector<32x1xf32> -> vector<32x1xf32>
    %132 = vector.broadcast %131 : vector<32x1xf32> to vector<32x32xf32>
    %133 = arith.mulf %128, %132 : vector<32x32xf32>
    %134 = arith.truncf %133 : vector<32x32xf32> to vector<32x32xbf16>
    %135 = arith.truncf %117 : vector<32x16xf32> to vector<32x16xbf16>
    %cst_44 = arith.constant dense<0.000000e+00> : vector<32x16xf32>
    %136 = tpu.matmul %134, %135, %cst_44 {dimension_numbers = #tpu.dot_dimension_numbers<[1], [0], [0], [1], [0, 0, 1, 1], [], []>} : vector<32x32xbf16>, vector<32x16xbf16>, vector<32x16xf32> -> vector<32x16xf32>
    %137 = arith.truncf %136 : vector<32x16xf32> to vector<32x16xbf16>
    %138 = vector.extract_strided_slice %35 {offsets = [48, 0], sizes = [16, 64], strides = [1, 1]} : vector<64x64xbf16> to vector<16x64xbf16>
    %cst_45 = arith.constant dense<0.000000e+00> : vector<32x64xf32>
    %139 = tpu.matmul %137, %138, %cst_45 {dimension_numbers = #tpu.dot_dimension_numbers<[1], [0], [0], [1], [0, 0, 1, 1], [], []>} : vector<32x16xbf16>, vector<16x64xbf16>, vector<32x64xf32> -> vector<32x64xf32>
    %140 = arith.addf %114, %139 : vector<32x64xf32>
    %c0_46 = arith.constant 0 : index
    %c0_47 = arith.constant 0 : index
    %c0_48 = arith.constant 0 : index
    %141 = vector.load %arg8[%c0_46, %c0_47, %c0_48] : memref<2x1x64xf32, #tpu.memory_space<vmem>>, vector<1x1x64xf32>
    %142 = vector.shape_cast %141 : vector<1x1x64xf32> to vector<1x64xf32>
    %143 = vector.broadcast %142 : vector<1x64xf32> to vector<32x64xf32>
    %144 = arith.addf %140, %143 : vector<32x64xf32>
    %145 = arith.addf %144, %25 : vector<32x64xf32>
    %c0_49 = arith.constant 0 : index
    %c0_50 = arith.constant 0 : index
    %c0_51 = arith.constant 0 : index
    %146 = vector.load %arg9[%c0_49, %c0_50, %c0_51] : memref<2x1x64xf32, #tpu.memory_space<vmem>>, vector<1x1x64xf32>
    %147 = vector.shape_cast %146 : vector<1x1x64xf32> to vector<1x64xf32>
    %c0_52 = arith.constant 0 : index
    %c0_53 = arith.constant 0 : index
    %c0_54 = arith.constant 0 : index
    %148 = vector.load %arg10[%c0_52, %c0_53, %c0_54] : memref<2x1x64xf32, #tpu.memory_space<vmem>>, vector<1x1x64xf32>
    %149 = vector.shape_cast %148 : vector<1x1x64xf32> to vector<1x64xf32>
    %cst_55 = arith.constant dense<0.000000e+00> : vector<32xf32>
    %150 = vector.multi_reduction <add>, %145, %cst_55 [1] : vector<32x64xf32> to vector<32xf32>
    %151 = vector.shape_cast %150 : vector<32xf32> to vector<32x1xf32>
    %cst_56 = arith.constant 6.400000e+01 : f32
    %152 = vector.broadcast %cst_56 : f32 to vector<32x1xf32>
    %153 = arith.divf %151, %152 : vector<32x1xf32>
    %154 = vector.broadcast %153 : vector<32x1xf32> to vector<32x64xf32>
    %155 = arith.subf %145, %154 : vector<32x64xf32>
    %156 = arith.mulf %155, %155 : vector<32x64xf32>
    %cst_57 = arith.constant dense<0.000000e+00> : vector<32xf32>
    %157 = vector.multi_reduction <add>, %156, %cst_57 [1] : vector<32x64xf32> to vector<32xf32>
    %158 = vector.shape_cast %157 : vector<32xf32> to vector<32x1xf32>
    %cst_58 = arith.constant 6.400000e+01 : f32
    %159 = vector.broadcast %cst_58 : f32 to vector<32x1xf32>
    %160 = arith.divf %158, %159 : vector<32x1xf32>
    %161 = vector.broadcast %153 : vector<32x1xf32> to vector<32x64xf32>
    %162 = arith.subf %145, %161 : vector<32x64xf32>
    %cst_59 = arith.constant 1.000000e-07 : f32
    %163 = vector.broadcast %cst_59 : f32 to vector<32x1xf32>
    %164 = arith.addf %160, %163 : vector<32x1xf32>
    %165 = math.rsqrt %164 : vector<32x1xf32>
    %166 = vector.broadcast %165 : vector<32x1xf32> to vector<32x64xf32>
    %167 = arith.mulf %162, %166 : vector<32x64xf32>
    %168 = vector.broadcast %147 : vector<1x64xf32> to vector<32x64xf32>
    %169 = arith.mulf %167, %168 : vector<32x64xf32>
    %170 = vector.broadcast %149 : vector<1x64xf32> to vector<32x64xf32>
    %171 = arith.addf %169, %170 : vector<32x64xf32>
    %c0_60 = arith.constant 0 : index
    %c0_61 = arith.constant 0 : index
    %c0_62 = arith.constant 0 : index
    %172 = vector.load %arg11[%c0_60, %c0_61, %c0_62] : memref<2x64x128xbf16, #tpu.memory_space<vmem>>, vector<1x64x128xbf16>
    %173 = vector.shape_cast %172 : vector<1x64x128xbf16> to vector<64x128xbf16>
    %174 = arith.truncf %171 : vector<32x64xf32> to vector<32x64xbf16>
    %cst_63 = arith.constant dense<0.000000e+00> : vector<32x128xf32>
    %175 = tpu.matmul %174, %173, %cst_63 {dimension_numbers = #tpu.dot_dimension_numbers<[1], [0], [0], [1], [0, 0, 1, 1], [], []>} : vector<32x64xbf16>, vector<64x128xbf16>, vector<32x128xf32> -> vector<32x128xf32>
    %c0_64 = arith.constant 0 : index
    %c0_65 = arith.constant 0 : index
    %c0_66 = arith.constant 0 : index
    %176 = vector.load %arg12[%c0_64, %c0_65, %c0_66] : memref<2x1x128xf32, #tpu.memory_space<vmem>>, vector<1x1x128xf32>
    %177 = vector.shape_cast %176 : vector<1x1x128xf32> to vector<1x128xf32>
    %178 = vector.broadcast %177 : vector<1x128xf32> to vector<32x128xf32>
    %179 = arith.addf %175, %178 : vector<32x128xf32>
    %180 = arith.mulf %179, %179 : vector<32x128xf32>
    %181 = arith.mulf %179, %180 : vector<32x128xf32>
    %cst_67 = arith.constant 4.471500e-02 : f32
    %182 = vector.broadcast %cst_67 : f32 to vector<32x128xf32>
    %183 = arith.mulf %182, %181 : vector<32x128xf32>
    %184 = arith.addf %179, %183 : vector<32x128xf32>
    %cst_68 = arith.constant 0.797884583 : f32
    %185 = vector.broadcast %cst_68 : f32 to vector<32x128xf32>
    %186 = arith.mulf %185, %184 : vector<32x128xf32>
    %187 = math.tanh %186 : vector<32x128xf32>
    %cst_69 = arith.constant 1.000000e+00 : f32
    %188 = vector.broadcast %cst_69 : f32 to vector<32x128xf32>
    %189 = arith.addf %188, %187 : vector<32x128xf32>
    %cst_70 = arith.constant 5.000000e-01 : f32
    %190 = vector.broadcast %cst_70 : f32 to vector<32x128xf32>
    %191 = arith.mulf %190, %189 : vector<32x128xf32>
    %192 = arith.mulf %179, %191 : vector<32x128xf32>
    %c0_71 = arith.constant 0 : index
    %c0_72 = arith.constant 0 : index
    %c0_73 = arith.constant 0 : index
    %193 = vector.load %arg13[%c0_71, %c0_72, %c0_73] : memref<2x128x64xbf16, #tpu.memory_space<vmem>>, vector<1x128x64xbf16>
    %194 = vector.shape_cast %193 : vector<1x128x64xbf16> to vector<128x64xbf16>
    %195 = arith.truncf %192 : vector<32x128xf32> to vector<32x128xbf16>
    %cst_74 = arith.constant dense<0.000000e+00> : vector<32x64xf32>
    %196 = tpu.matmul %195, %194, %cst_74 {dimension_numbers = #tpu.dot_dimension_numbers<[1], [0], [0], [1], [0, 0, 1, 1], [], []>} : vector<32x128xbf16>, vector<128x64xbf16>, vector<32x64xf32> -> vector<32x64xf32>
    %c0_75 = arith.constant 0 : index
    %c0_76 = arith.constant 0 : index
    %c0_77 = arith.constant 0 : index
    %197 = vector.load %arg14[%c0_75, %c0_76, %c0_77] : memref<2x1x64xf32, #tpu.memory_space<vmem>>, vector<1x1x64xf32>
    %198 = vector.shape_cast %197 : vector<1x1x64xf32> to vector<1x64xf32>
    %199 = vector.broadcast %198 : vector<1x64xf32> to vector<32x64xf32>
    %200 = arith.addf %196, %199 : vector<32x64xf32>
    %201 = arith.addf %200, %171 : vector<32x64xf32>
    %c0_78 = arith.constant 0 : index
    %c0_79 = arith.constant 0 : index
    %c0_80 = arith.constant 0 : index
    %202 = vector.load %arg15[%c0_78, %c0_79, %c0_80] : memref<2x1x64xf32, #tpu.memory_space<vmem>>, vector<1x1x64xf32>
    %203 = vector.shape_cast %202 : vector<1x1x64xf32> to vector<1x64xf32>
    %c0_81 = arith.constant 0 : index
    %c0_82 = arith.constant 0 : index
    %c0_83 = arith.constant 0 : index
    %204 = vector.load %arg16[%c0_81, %c0_82, %c0_83] : memref<2x1x64xf32, #tpu.memory_space<vmem>>, vector<1x1x64xf32>
    %205 = vector.shape_cast %204 : vector<1x1x64xf32> to vector<1x64xf32>
    %cst_84 = arith.constant dense<0.000000e+00> : vector<32xf32>
    %206 = vector.multi_reduction <add>, %201, %cst_84 [1] : vector<32x64xf32> to vector<32xf32>
    %207 = vector.shape_cast %206 : vector<32xf32> to vector<32x1xf32>
    %cst_85 = arith.constant 6.400000e+01 : f32
    %208 = vector.broadcast %cst_85 : f32 to vector<32x1xf32>
    %209 = arith.divf %207, %208 : vector<32x1xf32>
    %210 = vector.broadcast %209 : vector<32x1xf32> to vector<32x64xf32>
    %211 = arith.subf %201, %210 : vector<32x64xf32>
    %212 = arith.mulf %211, %211 : vector<32x64xf32>
    %cst_86 = arith.constant dense<0.000000e+00> : vector<32xf32>
    %213 = vector.multi_reduction <add>, %212, %cst_86 [1] : vector<32x64xf32> to vector<32xf32>
    %214 = vector.shape_cast %213 : vector<32xf32> to vector<32x1xf32>
    %cst_87 = arith.constant 6.400000e+01 : f32
    %215 = vector.broadcast %cst_87 : f32 to vector<32x1xf32>
    %216 = arith.divf %214, %215 : vector<32x1xf32>
    %217 = vector.broadcast %209 : vector<32x1xf32> to vector<32x64xf32>
    %218 = arith.subf %201, %217 : vector<32x64xf32>
    %cst_88 = arith.constant 1.000000e-07 : f32
    %219 = vector.broadcast %cst_88 : f32 to vector<32x1xf32>
    %220 = arith.addf %216, %219 : vector<32x1xf32>
    %221 = math.rsqrt %220 : vector<32x1xf32>
    %222 = vector.broadcast %221 : vector<32x1xf32> to vector<32x64xf32>
    %223 = arith.mulf %218, %222 : vector<32x64xf32>
    %224 = vector.broadcast %203 : vector<1x64xf32> to vector<32x64xf32>
    %225 = arith.mulf %223, %224 : vector<32x64xf32>
    %226 = vector.broadcast %205 : vector<1x64xf32> to vector<32x64xf32>
    %227 = arith.addf %225, %226 : vector<32x64xf32>
    %c1 = arith.constant 1 : index
    %c0_89 = arith.constant 0 : index
    %c0_90 = arith.constant 0 : index
    %228 = vector.load %arg5[%c1, %c0_89, %c0_90] : memref<2x64x192xbf16, #tpu.memory_space<vmem>>, vector<1x64x192xbf16>
    %229 = vector.shape_cast %228 : vector<1x64x192xbf16> to vector<64x192xbf16>
    %230 = arith.truncf %227 : vector<32x64xf32> to vector<32x64xbf16>
    %cst_91 = arith.constant dense<0.000000e+00> : vector<32x192xf32>
    %231 = tpu.matmul %230, %229, %cst_91 {dimension_numbers = #tpu.dot_dimension_numbers<[1], [0], [0], [1], [0, 0, 1, 1], [], []>} : vector<32x64xbf16>, vector<64x192xbf16>, vector<32x192xf32> -> vector<32x192xf32>
    %c1_92 = arith.constant 1 : index
    %c0_93 = arith.constant 0 : index
    %c0_94 = arith.constant 0 : index
    %232 = vector.load %arg6[%c1_92, %c0_93, %c0_94] : memref<2x1x192xf32, #tpu.memory_space<vmem>>, vector<1x1x192xf32>
    %233 = vector.shape_cast %232 : vector<1x1x192xf32> to vector<1x192xf32>
    %234 = vector.broadcast %233 : vector<1x192xf32> to vector<32x192xf32>
    %235 = arith.addf %231, %234 : vector<32x192xf32>
    %c1_95 = arith.constant 1 : index
    %c0_96 = arith.constant 0 : index
    %c0_97 = arith.constant 0 : index
    %236 = vector.load %arg7[%c1_95, %c0_96, %c0_97] : memref<2x64x64xbf16, #tpu.memory_space<vmem>>, vector<1x64x64xbf16>
    %237 = vector.shape_cast %236 : vector<1x64x64xbf16> to vector<64x64xbf16>
    %cst_98 = arith.constant 0.000000e+00 : f32
    %238 = vector.broadcast %cst_98 : f32 to vector<32x64xf32>
    %239 = vector.extract_strided_slice %235 {offsets = [0, 0], sizes = [32, 16], strides = [1, 1]} : vector<32x192xf32> to vector<32x16xf32>
    %240 = vector.extract_strided_slice %235 {offsets = [0, 64], sizes = [32, 16], strides = [1, 1]} : vector<32x192xf32> to vector<32x16xf32>
    %241 = vector.extract_strided_slice %235 {offsets = [0, 128], sizes = [32, 16], strides = [1, 1]} : vector<32x192xf32> to vector<32x16xf32>
    %242 = arith.truncf %239 : vector<32x16xf32> to vector<32x16xbf16>
    %243 = arith.truncf %240 : vector<32x16xf32> to vector<32x16xbf16>
    %cst_99 = arith.constant dense<0.000000e+00> : vector<32x32xf32>
    %244 = tpu.matmul %242, %243, %cst_99 {dimension_numbers = #tpu.dot_dimension_numbers<[1], [1], [0], [0], [0, 0, 1, 0], [], []>} : vector<32x16xbf16>, vector<32x16xbf16>, vector<32x32xf32> -> vector<32x32xf32>
    %cst_100 = arith.constant 2.500000e-01 : f32
    %245 = vector.broadcast %cst_100 : f32 to vector<32x32xf32>
    %246 = arith.mulf %244, %245 : vector<32x32xf32>
    %247 = arith.addf %246, %0 : vector<32x32xf32>
    %cst_101 = arith.constant dense<0xFF800000> : vector<32xf32>
    %248 = vector.multi_reduction <maximumf>, %247, %cst_101 [1] : vector<32x32xf32> to vector<32xf32>
    %249 = vector.shape_cast %248 : vector<32xf32> to vector<32x1xf32>
    %250 = vector.broadcast %249 : vector<32x1xf32> to vector<32x32xf32>
    %251 = arith.subf %247, %250 : vector<32x32xf32>
    %252 = math.exp %251 : vector<32x32xf32>
    %cst_102 = arith.constant dense<0.000000e+00> : vector<32xf32>
    %253 = vector.multi_reduction <add>, %252, %cst_102 [1] : vector<32x32xf32> to vector<32xf32>
    %254 = vector.shape_cast %253 : vector<32xf32> to vector<32x1xf32>
    %255 = tpu.reciprocal %254 {approx = true} : vector<32x1xf32> -> vector<32x1xf32>
    %256 = vector.broadcast %255 : vector<32x1xf32> to vector<32x32xf32>
    %257 = arith.mulf %252, %256 : vector<32x32xf32>
    %258 = arith.truncf %257 : vector<32x32xf32> to vector<32x32xbf16>
    %259 = arith.truncf %241 : vector<32x16xf32> to vector<32x16xbf16>
    %cst_103 = arith.constant dense<0.000000e+00> : vector<32x16xf32>
    %260 = tpu.matmul %258, %259, %cst_103 {dimension_numbers = #tpu.dot_dimension_numbers<[1], [0], [0], [1], [0, 0, 1, 1], [], []>} : vector<32x32xbf16>, vector<32x16xbf16>, vector<32x16xf32> -> vector<32x16xf32>
    %261 = arith.truncf %260 : vector<32x16xf32> to vector<32x16xbf16>
    %262 = vector.extract_strided_slice %237 {offsets = [0, 0], sizes = [16, 64], strides = [1, 1]} : vector<64x64xbf16> to vector<16x64xbf16>
    %cst_104 = arith.constant dense<0.000000e+00> : vector<32x64xf32>
    %263 = tpu.matmul %261, %262, %cst_104 {dimension_numbers = #tpu.dot_dimension_numbers<[1], [0], [0], [1], [0, 0, 1, 1], [], []>} : vector<32x16xbf16>, vector<16x64xbf16>, vector<32x64xf32> -> vector<32x64xf32>
    %264 = arith.addf %238, %263 : vector<32x64xf32>
    %265 = vector.extract_strided_slice %235 {offsets = [0, 16], sizes = [32, 16], strides = [1, 1]} : vector<32x192xf32> to vector<32x16xf32>
    %266 = vector.extract_strided_slice %235 {offsets = [0, 80], sizes = [32, 16], strides = [1, 1]} : vector<32x192xf32> to vector<32x16xf32>
    %267 = vector.extract_strided_slice %235 {offsets = [0, 144], sizes = [32, 16], strides = [1, 1]} : vector<32x192xf32> to vector<32x16xf32>
    %268 = arith.truncf %265 : vector<32x16xf32> to vector<32x16xbf16>
    %269 = arith.truncf %266 : vector<32x16xf32> to vector<32x16xbf16>
    %cst_105 = arith.constant dense<0.000000e+00> : vector<32x32xf32>
    %270 = tpu.matmul %268, %269, %cst_105 {dimension_numbers = #tpu.dot_dimension_numbers<[1], [1], [0], [0], [0, 0, 1, 0], [], []>} : vector<32x16xbf16>, vector<32x16xbf16>, vector<32x32xf32> -> vector<32x32xf32>
    %cst_106 = arith.constant 2.500000e-01 : f32
    %271 = vector.broadcast %cst_106 : f32 to vector<32x32xf32>
    %272 = arith.mulf %270, %271 : vector<32x32xf32>
    %273 = arith.addf %272, %0 : vector<32x32xf32>
    %cst_107 = arith.constant dense<0xFF800000> : vector<32xf32>
    %274 = vector.multi_reduction <maximumf>, %273, %cst_107 [1] : vector<32x32xf32> to vector<32xf32>
    %275 = vector.shape_cast %274 : vector<32xf32> to vector<32x1xf32>
    %276 = vector.broadcast %275 : vector<32x1xf32> to vector<32x32xf32>
    %277 = arith.subf %273, %276 : vector<32x32xf32>
    %278 = math.exp %277 : vector<32x32xf32>
    %cst_108 = arith.constant dense<0.000000e+00> : vector<32xf32>
    %279 = vector.multi_reduction <add>, %278, %cst_108 [1] : vector<32x32xf32> to vector<32xf32>
    %280 = vector.shape_cast %279 : vector<32xf32> to vector<32x1xf32>
    %281 = tpu.reciprocal %280 {approx = true} : vector<32x1xf32> -> vector<32x1xf32>
    %282 = vector.broadcast %281 : vector<32x1xf32> to vector<32x32xf32>
    %283 = arith.mulf %278, %282 : vector<32x32xf32>
    %284 = arith.truncf %283 : vector<32x32xf32> to vector<32x32xbf16>
    %285 = arith.truncf %267 : vector<32x16xf32> to vector<32x16xbf16>
    %cst_109 = arith.constant dense<0.000000e+00> : vector<32x16xf32>
    %286 = tpu.matmul %284, %285, %cst_109 {dimension_numbers = #tpu.dot_dimension_numbers<[1], [0], [0], [1], [0, 0, 1, 1], [], []>} : vector<32x32xbf16>, vector<32x16xbf16>, vector<32x16xf32> -> vector<32x16xf32>
    %287 = arith.truncf %286 : vector<32x16xf32> to vector<32x16xbf16>
    %288 = vector.extract_strided_slice %237 {offsets = [16, 0], sizes = [16, 64], strides = [1, 1]} : vector<64x64xbf16> to vector<16x64xbf16>
    %cst_110 = arith.constant dense<0.000000e+00> : vector<32x64xf32>
    %289 = tpu.matmul %287, %288, %cst_110 {dimension_numbers = #tpu.dot_dimension_numbers<[1], [0], [0], [1], [0, 0, 1, 1], [], []>} : vector<32x16xbf16>, vector<16x64xbf16>, vector<32x64xf32> -> vector<32x64xf32>
    %290 = arith.addf %264, %289 : vector<32x64xf32>
    %291 = vector.extract_strided_slice %235 {offsets = [0, 32], sizes = [32, 16], strides = [1, 1]} : vector<32x192xf32> to vector<32x16xf32>
    %292 = vector.extract_strided_slice %235 {offsets = [0, 96], sizes = [32, 16], strides = [1, 1]} : vector<32x192xf32> to vector<32x16xf32>
    %293 = vector.extract_strided_slice %235 {offsets = [0, 160], sizes = [32, 16], strides = [1, 1]} : vector<32x192xf32> to vector<32x16xf32>
    %294 = arith.truncf %291 : vector<32x16xf32> to vector<32x16xbf16>
    %295 = arith.truncf %292 : vector<32x16xf32> to vector<32x16xbf16>
    %cst_111 = arith.constant dense<0.000000e+00> : vector<32x32xf32>
    %296 = tpu.matmul %294, %295, %cst_111 {dimension_numbers = #tpu.dot_dimension_numbers<[1], [1], [0], [0], [0, 0, 1, 0], [], []>} : vector<32x16xbf16>, vector<32x16xbf16>, vector<32x32xf32> -> vector<32x32xf32>
    %cst_112 = arith.constant 2.500000e-01 : f32
    %297 = vector.broadcast %cst_112 : f32 to vector<32x32xf32>
    %298 = arith.mulf %296, %297 : vector<32x32xf32>
    %299 = arith.addf %298, %0 : vector<32x32xf32>
    %cst_113 = arith.constant dense<0xFF800000> : vector<32xf32>
    %300 = vector.multi_reduction <maximumf>, %299, %cst_113 [1] : vector<32x32xf32> to vector<32xf32>
    %301 = vector.shape_cast %300 : vector<32xf32> to vector<32x1xf32>
    %302 = vector.broadcast %301 : vector<32x1xf32> to vector<32x32xf32>
    %303 = arith.subf %299, %302 : vector<32x32xf32>
    %304 = math.exp %303 : vector<32x32xf32>
    %cst_114 = arith.constant dense<0.000000e+00> : vector<32xf32>
    %305 = vector.multi_reduction <add>, %304, %cst_114 [1] : vector<32x32xf32> to vector<32xf32>
    %306 = vector.shape_cast %305 : vector<32xf32> to vector<32x1xf32>
    %307 = tpu.reciprocal %306 {approx = true} : vector<32x1xf32> -> vector<32x1xf32>
    %308 = vector.broadcast %307 : vector<32x1xf32> to vector<32x32xf32>
    %309 = arith.mulf %304, %308 : vector<32x32xf32>
    %310 = arith.truncf %309 : vector<32x32xf32> to vector<32x32xbf16>
    %311 = arith.truncf %293 : vector<32x16xf32> to vector<32x16xbf16>
    %cst_115 = arith.constant dense<0.000000e+00> : vector<32x16xf32>
    %312 = tpu.matmul %310, %311, %cst_115 {dimension_numbers = #tpu.dot_dimension_numbers<[1], [0], [0], [1], [0, 0, 1, 1], [], []>} : vector<32x32xbf16>, vector<32x16xbf16>, vector<32x16xf32> -> vector<32x16xf32>
    %313 = arith.truncf %312 : vector<32x16xf32> to vector<32x16xbf16>
    %314 = vector.extract_strided_slice %237 {offsets = [32, 0], sizes = [16, 64], strides = [1, 1]} : vector<64x64xbf16> to vector<16x64xbf16>
    %cst_116 = arith.constant dense<0.000000e+00> : vector<32x64xf32>
    %315 = tpu.matmul %313, %314, %cst_116 {dimension_numbers = #tpu.dot_dimension_numbers<[1], [0], [0], [1], [0, 0, 1, 1], [], []>} : vector<32x16xbf16>, vector<16x64xbf16>, vector<32x64xf32> -> vector<32x64xf32>
    %316 = arith.addf %290, %315 : vector<32x64xf32>
    %317 = vector.extract_strided_slice %235 {offsets = [0, 48], sizes = [32, 16], strides = [1, 1]} : vector<32x192xf32> to vector<32x16xf32>
    %318 = vector.extract_strided_slice %235 {offsets = [0, 112], sizes = [32, 16], strides = [1, 1]} : vector<32x192xf32> to vector<32x16xf32>
    %319 = vector.extract_strided_slice %235 {offsets = [0, 176], sizes = [32, 16], strides = [1, 1]} : vector<32x192xf32> to vector<32x16xf32>
    %320 = arith.truncf %317 : vector<32x16xf32> to vector<32x16xbf16>
    %321 = arith.truncf %318 : vector<32x16xf32> to vector<32x16xbf16>
    %cst_117 = arith.constant dense<0.000000e+00> : vector<32x32xf32>
    %322 = tpu.matmul %320, %321, %cst_117 {dimension_numbers = #tpu.dot_dimension_numbers<[1], [1], [0], [0], [0, 0, 1, 0], [], []>} : vector<32x16xbf16>, vector<32x16xbf16>, vector<32x32xf32> -> vector<32x32xf32>
    %cst_118 = arith.constant 2.500000e-01 : f32
    %323 = vector.broadcast %cst_118 : f32 to vector<32x32xf32>
    %324 = arith.mulf %322, %323 : vector<32x32xf32>
    %325 = arith.addf %324, %0 : vector<32x32xf32>
    %cst_119 = arith.constant dense<0xFF800000> : vector<32xf32>
    %326 = vector.multi_reduction <maximumf>, %325, %cst_119 [1] : vector<32x32xf32> to vector<32xf32>
    %327 = vector.shape_cast %326 : vector<32xf32> to vector<32x1xf32>
    %328 = vector.broadcast %327 : vector<32x1xf32> to vector<32x32xf32>
    %329 = arith.subf %325, %328 : vector<32x32xf32>
    %330 = math.exp %329 : vector<32x32xf32>
    %cst_120 = arith.constant dense<0.000000e+00> : vector<32xf32>
    %331 = vector.multi_reduction <add>, %330, %cst_120 [1] : vector<32x32xf32> to vector<32xf32>
    %332 = vector.shape_cast %331 : vector<32xf32> to vector<32x1xf32>
    %333 = tpu.reciprocal %332 {approx = true} : vector<32x1xf32> -> vector<32x1xf32>
    %334 = vector.broadcast %333 : vector<32x1xf32> to vector<32x32xf32>
    %335 = arith.mulf %330, %334 : vector<32x32xf32>
    %336 = arith.truncf %335 : vector<32x32xf32> to vector<32x32xbf16>
    %337 = arith.truncf %319 : vector<32x16xf32> to vector<32x16xbf16>
    %cst_121 = arith.constant dense<0.000000e+00> : vector<32x16xf32>
    %338 = tpu.matmul %336, %337, %cst_121 {dimension_numbers = #tpu.dot_dimension_numbers<[1], [0], [0], [1], [0, 0, 1, 1], [], []>} : vector<32x32xbf16>, vector<32x16xbf16>, vector<32x16xf32> -> vector<32x16xf32>
    %339 = arith.truncf %338 : vector<32x16xf32> to vector<32x16xbf16>
    %340 = vector.extract_strided_slice %237 {offsets = [48, 0], sizes = [16, 64], strides = [1, 1]} : vector<64x64xbf16> to vector<16x64xbf16>
    %cst_122 = arith.constant dense<0.000000e+00> : vector<32x64xf32>
    %341 = tpu.matmul %339, %340, %cst_122 {dimension_numbers = #tpu.dot_dimension_numbers<[1], [0], [0], [1], [0, 0, 1, 1], [], []>} : vector<32x16xbf16>, vector<16x64xbf16>, vector<32x64xf32> -> vector<32x64xf32>
    %342 = arith.addf %316, %341 : vector<32x64xf32>
    %c1_123 = arith.constant 1 : index
    %c0_124 = arith.constant 0 : index
    %c0_125 = arith.constant 0 : index
    %343 = vector.load %arg8[%c1_123, %c0_124, %c0_125] : memref<2x1x64xf32, #tpu.memory_space<vmem>>, vector<1x1x64xf32>
    %344 = vector.shape_cast %343 : vector<1x1x64xf32> to vector<1x64xf32>
    %345 = vector.broadcast %344 : vector<1x64xf32> to vector<32x64xf32>
    %346 = arith.addf %342, %345 : vector<32x64xf32>
    %347 = arith.addf %346, %227 : vector<32x64xf32>
    %c1_126 = arith.constant 1 : index
    %c0_127 = arith.constant 0 : index
    %c0_128 = arith.constant 0 : index
    %348 = vector.load %arg9[%c1_126, %c0_127, %c0_128] : memref<2x1x64xf32, #tpu.memory_space<vmem>>, vector<1x1x64xf32>
    %349 = vector.shape_cast %348 : vector<1x1x64xf32> to vector<1x64xf32>
    %c1_129 = arith.constant 1 : index
    %c0_130 = arith.constant 0 : index
    %c0_131 = arith.constant 0 : index
    %350 = vector.load %arg10[%c1_129, %c0_130, %c0_131] : memref<2x1x64xf32, #tpu.memory_space<vmem>>, vector<1x1x64xf32>
    %351 = vector.shape_cast %350 : vector<1x1x64xf32> to vector<1x64xf32>
    %cst_132 = arith.constant dense<0.000000e+00> : vector<32xf32>
    %352 = vector.multi_reduction <add>, %347, %cst_132 [1] : vector<32x64xf32> to vector<32xf32>
    %353 = vector.shape_cast %352 : vector<32xf32> to vector<32x1xf32>
    %cst_133 = arith.constant 6.400000e+01 : f32
    %354 = vector.broadcast %cst_133 : f32 to vector<32x1xf32>
    %355 = arith.divf %353, %354 : vector<32x1xf32>
    %356 = vector.broadcast %355 : vector<32x1xf32> to vector<32x64xf32>
    %357 = arith.subf %347, %356 : vector<32x64xf32>
    %358 = arith.mulf %357, %357 : vector<32x64xf32>
    %cst_134 = arith.constant dense<0.000000e+00> : vector<32xf32>
    %359 = vector.multi_reduction <add>, %358, %cst_134 [1] : vector<32x64xf32> to vector<32xf32>
    %360 = vector.shape_cast %359 : vector<32xf32> to vector<32x1xf32>
    %cst_135 = arith.constant 6.400000e+01 : f32
    %361 = vector.broadcast %cst_135 : f32 to vector<32x1xf32>
    %362 = arith.divf %360, %361 : vector<32x1xf32>
    %363 = vector.broadcast %355 : vector<32x1xf32> to vector<32x64xf32>
    %364 = arith.subf %347, %363 : vector<32x64xf32>
    %cst_136 = arith.constant 1.000000e-07 : f32
    %365 = vector.broadcast %cst_136 : f32 to vector<32x1xf32>
    %366 = arith.addf %362, %365 : vector<32x1xf32>
    %367 = math.rsqrt %366 : vector<32x1xf32>
    %368 = vector.broadcast %367 : vector<32x1xf32> to vector<32x64xf32>
    %369 = arith.mulf %364, %368 : vector<32x64xf32>
    %370 = vector.broadcast %349 : vector<1x64xf32> to vector<32x64xf32>
    %371 = arith.mulf %369, %370 : vector<32x64xf32>
    %372 = vector.broadcast %351 : vector<1x64xf32> to vector<32x64xf32>
    %373 = arith.addf %371, %372 : vector<32x64xf32>
    %c1_137 = arith.constant 1 : index
    %c0_138 = arith.constant 0 : index
    %c0_139 = arith.constant 0 : index
    %374 = vector.load %arg11[%c1_137, %c0_138, %c0_139] : memref<2x64x128xbf16, #tpu.memory_space<vmem>>, vector<1x64x128xbf16>
    %375 = vector.shape_cast %374 : vector<1x64x128xbf16> to vector<64x128xbf16>
    %376 = arith.truncf %373 : vector<32x64xf32> to vector<32x64xbf16>
    %cst_140 = arith.constant dense<0.000000e+00> : vector<32x128xf32>
    %377 = tpu.matmul %376, %375, %cst_140 {dimension_numbers = #tpu.dot_dimension_numbers<[1], [0], [0], [1], [0, 0, 1, 1], [], []>} : vector<32x64xbf16>, vector<64x128xbf16>, vector<32x128xf32> -> vector<32x128xf32>
    %c1_141 = arith.constant 1 : index
    %c0_142 = arith.constant 0 : index
    %c0_143 = arith.constant 0 : index
    %378 = vector.load %arg12[%c1_141, %c0_142, %c0_143] : memref<2x1x128xf32, #tpu.memory_space<vmem>>, vector<1x1x128xf32>
    %379 = vector.shape_cast %378 : vector<1x1x128xf32> to vector<1x128xf32>
    %380 = vector.broadcast %379 : vector<1x128xf32> to vector<32x128xf32>
    %381 = arith.addf %377, %380 : vector<32x128xf32>
    %382 = arith.mulf %381, %381 : vector<32x128xf32>
    %383 = arith.mulf %381, %382 : vector<32x128xf32>
    %cst_144 = arith.constant 4.471500e-02 : f32
    %384 = vector.broadcast %cst_144 : f32 to vector<32x128xf32>
    %385 = arith.mulf %384, %383 : vector<32x128xf32>
    %386 = arith.addf %381, %385 : vector<32x128xf32>
    %cst_145 = arith.constant 0.797884583 : f32
    %387 = vector.broadcast %cst_145 : f32 to vector<32x128xf32>
    %388 = arith.mulf %387, %386 : vector<32x128xf32>
    %389 = math.tanh %388 : vector<32x128xf32>
    %cst_146 = arith.constant 1.000000e+00 : f32
    %390 = vector.broadcast %cst_146 : f32 to vector<32x128xf32>
    %391 = arith.addf %390, %389 : vector<32x128xf32>
    %cst_147 = arith.constant 5.000000e-01 : f32
    %392 = vector.broadcast %cst_147 : f32 to vector<32x128xf32>
    %393 = arith.mulf %392, %391 : vector<32x128xf32>
    %394 = arith.mulf %381, %393 : vector<32x128xf32>
    %c1_148 = arith.constant 1 : index
    %c0_149 = arith.constant 0 : index
    %c0_150 = arith.constant 0 : index
    %395 = vector.load %arg13[%c1_148, %c0_149, %c0_150] : memref<2x128x64xbf16, #tpu.memory_space<vmem>>, vector<1x128x64xbf16>
    %396 = vector.shape_cast %395 : vector<1x128x64xbf16> to vector<128x64xbf16>
    %397 = arith.truncf %394 : vector<32x128xf32> to vector<32x128xbf16>
    %cst_151 = arith.constant dense<0.000000e+00> : vector<32x64xf32>
    %398 = tpu.matmul %397, %396, %cst_151 {dimension_numbers = #tpu.dot_dimension_numbers<[1], [0], [0], [1], [0, 0, 1, 1], [], []>} : vector<32x128xbf16>, vector<128x64xbf16>, vector<32x64xf32> -> vector<32x64xf32>
    %c1_152 = arith.constant 1 : index
    %c0_153 = arith.constant 0 : index
    %c0_154 = arith.constant 0 : index
    %399 = vector.load %arg14[%c1_152, %c0_153, %c0_154] : memref<2x1x64xf32, #tpu.memory_space<vmem>>, vector<1x1x64xf32>
    %400 = vector.shape_cast %399 : vector<1x1x64xf32> to vector<1x64xf32>
    %401 = vector.broadcast %400 : vector<1x64xf32> to vector<32x64xf32>
    %402 = arith.addf %398, %401 : vector<32x64xf32>
    %403 = arith.addf %402, %373 : vector<32x64xf32>
    %c1_155 = arith.constant 1 : index
    %c0_156 = arith.constant 0 : index
    %c0_157 = arith.constant 0 : index
    %404 = vector.load %arg15[%c1_155, %c0_156, %c0_157] : memref<2x1x64xf32, #tpu.memory_space<vmem>>, vector<1x1x64xf32>
    %405 = vector.shape_cast %404 : vector<1x1x64xf32> to vector<1x64xf32>
    %c1_158 = arith.constant 1 : index
    %c0_159 = arith.constant 0 : index
    %c0_160 = arith.constant 0 : index
    %406 = vector.load %arg16[%c1_158, %c0_159, %c0_160] : memref<2x1x64xf32, #tpu.memory_space<vmem>>, vector<1x1x64xf32>
    %407 = vector.shape_cast %406 : vector<1x1x64xf32> to vector<1x64xf32>
    %cst_161 = arith.constant dense<0.000000e+00> : vector<32xf32>
    %408 = vector.multi_reduction <add>, %403, %cst_161 [1] : vector<32x64xf32> to vector<32xf32>
    %409 = vector.shape_cast %408 : vector<32xf32> to vector<32x1xf32>
    %cst_162 = arith.constant 6.400000e+01 : f32
    %410 = vector.broadcast %cst_162 : f32 to vector<32x1xf32>
    %411 = arith.divf %409, %410 : vector<32x1xf32>
    %412 = vector.broadcast %411 : vector<32x1xf32> to vector<32x64xf32>
    %413 = arith.subf %403, %412 : vector<32x64xf32>
    %414 = arith.mulf %413, %413 : vector<32x64xf32>
    %cst_163 = arith.constant dense<0.000000e+00> : vector<32xf32>
    %415 = vector.multi_reduction <add>, %414, %cst_163 [1] : vector<32x64xf32> to vector<32xf32>
    %416 = vector.shape_cast %415 : vector<32xf32> to vector<32x1xf32>
    %cst_164 = arith.constant 6.400000e+01 : f32
    %417 = vector.broadcast %cst_164 : f32 to vector<32x1xf32>
    %418 = arith.divf %416, %417 : vector<32x1xf32>
    %419 = vector.broadcast %411 : vector<32x1xf32> to vector<32x64xf32>
    %420 = arith.subf %403, %419 : vector<32x64xf32>
    %cst_165 = arith.constant 1.000000e-07 : f32
    %421 = vector.broadcast %cst_165 : f32 to vector<32x1xf32>
    %422 = arith.addf %418, %421 : vector<32x1xf32>
    %423 = math.rsqrt %422 : vector<32x1xf32>
    %424 = vector.broadcast %423 : vector<32x1xf32> to vector<32x64xf32>
    %425 = arith.mulf %420, %424 : vector<32x64xf32>
    %426 = vector.broadcast %405 : vector<1x64xf32> to vector<32x64xf32>
    %427 = arith.mulf %425, %426 : vector<32x64xf32>
    %428 = vector.broadcast %407 : vector<1x64xf32> to vector<32x64xf32>
    %429 = arith.addf %427, %428 : vector<32x64xf32>
    %c0_166 = arith.constant 0 : index
    %c0_167 = arith.constant 0 : index
    %430 = vector.load %arg17[%c0_166, %c0_167] : memref<64x64xbf16, #tpu.memory_space<vmem>>, vector<64x64xbf16>
    %431 = arith.truncf %429 : vector<32x64xf32> to vector<32x64xbf16>
    %cst_168 = arith.constant dense<0.000000e+00> : vector<32x64xf32>
    %432 = tpu.matmul %431, %430, %cst_168 {dimension_numbers = #tpu.dot_dimension_numbers<[1], [0], [0], [1], [0, 0, 1, 1], [], []>} : vector<32x64xbf16>, vector<64x64xbf16>, vector<32x64xf32> -> vector<32x64xf32>
    %c0_169 = arith.constant 0 : index
    %c0_170 = arith.constant 0 : index
    %433 = vector.load %arg18[%c0_169, %c0_170] : memref<1x64xf32, #tpu.memory_space<vmem>>, vector<1x64xf32>
    %434 = vector.broadcast %433 : vector<1x64xf32> to vector<32x64xf32>
    %435 = arith.addf %432, %434 : vector<32x64xf32>
    %436 = arith.mulf %435, %435 : vector<32x64xf32>
    %437 = arith.mulf %435, %436 : vector<32x64xf32>
    %cst_171 = arith.constant 4.471500e-02 : f32
    %438 = vector.broadcast %cst_171 : f32 to vector<32x64xf32>
    %439 = arith.mulf %438, %437 : vector<32x64xf32>
    %440 = arith.addf %435, %439 : vector<32x64xf32>
    %cst_172 = arith.constant 0.797884583 : f32
    %441 = vector.broadcast %cst_172 : f32 to vector<32x64xf32>
    %442 = arith.mulf %441, %440 : vector<32x64xf32>
    %443 = math.tanh %442 : vector<32x64xf32>
    %cst_173 = arith.constant 1.000000e+00 : f32
    %444 = vector.broadcast %cst_173 : f32 to vector<32x64xf32>
    %445 = arith.addf %444, %443 : vector<32x64xf32>
    %cst_174 = arith.constant 5.000000e-01 : f32
    %446 = vector.broadcast %cst_174 : f32 to vector<32x64xf32>
    %447 = arith.mulf %446, %445 : vector<32x64xf32>
    %448 = arith.mulf %435, %447 : vector<32x64xf32>
    %c0_175 = arith.constant 0 : index
    %c0_176 = arith.constant 0 : index
    %449 = vector.load %arg19[%c0_175, %c0_176] : memref<64x128xbf16, #tpu.memory_space<vmem>>, vector<64x128xbf16>
    %450 = arith.truncf %448 : vector<32x64xf32> to vector<32x64xbf16>
    %cst_177 = arith.constant dense<0.000000e+00> : vector<32x128xf32>
    %451 = tpu.matmul %450, %449, %cst_177 {dimension_numbers = #tpu.dot_dimension_numbers<[1], [0], [0], [1], [0, 0, 1, 1], [], []>} : vector<32x64xbf16>, vector<64x128xbf16>, vector<32x128xf32> -> vector<32x128xf32>
    %c0_178 = arith.constant 0 : index
    %c0_179 = arith.constant 0 : index
    %452 = vector.load %arg20[%c0_178, %c0_179] : memref<1x128xf32, #tpu.memory_space<vmem>>, vector<1x128xf32>
    %453 = vector.broadcast %452 : vector<1x128xf32> to vector<32x128xf32>
    %454 = arith.addf %451, %453 : vector<32x128xf32>
    %c0_180 = arith.constant 0 : index
    %c0_181 = arith.constant 0 : index
    %455 = vector.load %arg21[%c0_180, %c0_181] : memref<32x128xf32, #tpu.memory_space<vmem>>, vector<32x128xf32>
    tpu.vector_store %arg21[%c0_180, %c0_181], %454 {strides = array<i32>} : memref<32x128xf32, #tpu.memory_space<vmem>>, vector<32x128xf32>,
    return
  }
  func.func @transform_0(%arg0: i32) -> (i32, i32) {
    %c0_i32 = arith.constant 0 : i32
    %c0_i32_0 = arith.constant 0 : i32
    %c0_i32_1 = arith.constant 0 : i32
    return %c0_i32, %c0_i32_0 : i32, i32
  }
  func.func @transform_1(%arg0: i32) -> (i32, i32) {
    %c0_i32 = arith.constant 0 : i32
    %c0_i32_0 = arith.constant 0 : i32
    %c0_i32_1 = arith.constant 0 : i32
    return %c0_i32, %c0_i32_0 : i32, i32
  }
  func.func @transform_2(%arg0: i32) -> (i32, i32) {
    %c0_i32 = arith.constant 0 : i32
    %c0_i32_0 = arith.constant 0 : i32
    %c0_i32_1 = arith.constant 0 : i32
    return %c0_i32, %c0_i32_0 : i32, i32
  }
  func.func @transform_3(%arg0: i32) -> (i32, i32) {
    %c0_i32 = arith.constant 0 : i32
    %c0_i32_0 = arith.constant 0 : i32
    %c0_i32_1 = arith.constant 0 : i32
    return %c0_i32, %c0_i32_0 : i32, i32
  }
  func.func @transform_4(%arg0: i32) -> (i32, i32, i32) {
    %c0_i32 = arith.constant 0 : i32
    %c0_i32_0 = arith.constant 0 : i32
    %c0_i32_1 = arith.constant 0 : i32
    %c0_i32_2 = arith.constant 0 : i32
    return %c0_i32, %c0_i32_0, %c0_i32_1 : i32, i32, i32
  }
  func.func @transform_5(%arg0: i32) -> (i32, i32, i32) {
    %c0_i32 = arith.constant 0 : i32
    %c0_i32_0 = arith.constant 0 : i32
    %c0_i32_1 = arith.constant 0 : i32
    %c0_i32_2 = arith.constant 0 : i32
    return %c0_i32, %c0_i32_0, %c0_i32_1 : i32, i32, i32
  }
  func.func @transform_6(%arg0: i32) -> (i32, i32, i32) {
    %c0_i32 = arith.constant 0 : i32
    %c0_i32_0 = arith.constant 0 : i32
    %c0_i32_1 = arith.constant 0 : i32
    %c0_i32_2 = arith.constant 0 : i32
    return %c0_i32, %c0_i32_0, %c0_i32_1 : i32, i32, i32
  }
  func.func @transform_7(%arg0: i32) -> (i32, i32, i32) {
    %c0_i32 = arith.constant 0 : i32
    %c0_i32_0 = arith.constant 0 : i32
    %c0_i32_1 = arith.constant 0 : i32
    %c0_i32_2 = arith.constant 0 : i32
    return %c0_i32, %c0_i32_0, %c0_i32_1 : i32, i32, i32
  }
  func.func @transform_8(%arg0: i32) -> (i32, i32, i32) {
    %c0_i32 = arith.constant 0 : i32
    %c0_i32_0 = arith.constant 0 : i32
    %c0_i32_1 = arith.constant 0 : i32
    %c0_i32_2 = arith.constant 0 : i32
    return %c0_i32, %c0_i32_0, %c0_i32_1 : i32, i32, i32
  }
  func.func @transform_9(%arg0: i32) -> (i32, i32, i32) {
    %c0_i32 = arith.constant 0 : i32
    %c0_i32_0 = arith.constant 0 : i32
    %c0_i32_1 = arith.constant 0 : i32
    %c0_i32_2 = arith.constant 0 : i32
    return %c0_i32, %c0_i32_0, %c0_i32_1 : i32, i32, i32
  }
  func.func @transform_10(%arg0: i32) -> (i32, i32, i32) {
    %c0_i32 = arith.constant 0 : i32
    %c0_i32_0 = arith.constant 0 : i32
    %c0_i32_1 = arith.constant 0 : i32
    %c0_i32_2 = arith.constant 0 : i32
    return %c0_i32, %c0_i32_0, %c0_i32_1 : i32, i32, i32
  }
  func.func @transform_11(%arg0: i32) -> (i32, i32, i32) {
    %c0_i32 = arith.constant 0 : i32
    %c0_i32_0 = arith.constant 0 : i32
    %c0_i32_1 = arith.constant 0 : i32
    %c0_i32_2 = arith.constant 0 : i32
    return %c0_i32, %c0_i32_0, %c0_i32_1 : i32, i32, i32
  }
  func.func @transform_12(%arg0: i32) -> (i32, i32, i32) {
    %c0_i32 = arith.constant 0 : i32
    %c0_i32_0 = arith.constant 0 : i32
    %c0_i32_1 = arith.constant 0 : i32
    %c0_i32_2 = arith.constant 0 : i32
    return %c0_i32, %c0_i32_0, %c0_i32_1 : i32, i32, i32
  }
  func.func @transform_13(%arg0: i32) -> (i32, i32, i32) {
    %c0_i32 = arith.constant 0 : i32
    %c0_i32_0 = arith.constant 0 : i32
    %c0_i32_1 = arith.constant 0 : i32
    %c0_i32_2 = arith.constant 0 : i32
    return %c0_i32, %c0_i32_0, %c0_i32_1 : i32, i32, i32
  }
  func.func @transform_14(%arg0: i32) -> (i32, i32, i32) {
    %c0_i32 = arith.constant 0 : i32
    %c0_i32_0 = arith.constant 0 : i32
    %c0_i32_1 = arith.constant 0 : i32
    %c0_i32_2 = arith.constant 0 : i32
    return %c0_i32, %c0_i32_0, %c0_i32_1 : i32, i32, i32
  }
  func.func @transform_15(%arg0: i32) -> (i32, i32, i32) {
    %c0_i32 = arith.constant 0 : i32
    %c0_i32_0 = arith.constant 0 : i32
    %c0_i32_1 = arith.constant 0 : i32
    %c0_i32_2 = arith.constant 0 : i32
    return %c0_i32, %c0_i32_0, %c0_i32_1 : i32, i32, i32
  }
  func.func @transform_16(%arg0: i32) -> (i32, i32) {
    %c0_i32 = arith.constant 0 : i32
    %c0_i32_0 = arith.constant 0 : i32
    %c0_i32_1 = arith.constant 0 : i32
    return %c0_i32, %c0_i32_0 : i32, i32
  }
  func.func @transform_17(%arg0: i32) -> (i32, i32) {
    %c0_i32 = arith.constant 0 : i32
    %c0_i32_0 = arith.constant 0 : i32
    %c0_i32_1 = arith.constant 0 : i32
    return %c0_i32, %c0_i32_0 : i32, i32
  }
  func.func @transform_18(%arg0: i32) -> (i32, i32) {
    %c0_i32 = arith.constant 0 : i32
    %c0_i32_0 = arith.constant 0 : i32
    %c0_i32_1 = arith.constant 0 : i32
    return %c0_i32, %c0_i32_0 : i32, i32
  }
  func.func @transform_19(%arg0: i32) -> (i32, i32) {
    %c0_i32 = arith.constant 0 : i32
    %c0_i32_0 = arith.constant 0 : i32
    %c0_i32_1 = arith.constant 0 : i32
    return %c0_i32, %c0_i32_0 : i32, i32
  }
  func.func @transform_20(%arg0: i32) -> (i32, i32) {
    %c0_i32 = arith.constant 0 : i32
    %c0_i32_0 = arith.constant 0 : i32
    %c0_i32_1 = arith.constant 0 : i32
    return %c0_i32, %c0_i32_0 : i32, i32
  }
}

</mosaic_0001>

<llo_original>
// kernel: deberta_forward.1
$region0: #{deberta_forward.1}
  #allocation0 [shape = 'u32[]', space=smem, size = 0x4, offset = 0x4, fixed_abs, tag = 'smem constant byte address 0x4 - core index']
  #allocation1 [shape = 'u32[144,128]{1,0:T(1,128)}', space=vmem, size = 0x12000, scoped, tag = 'internal scratch']
  %s0 = inlined_call_operand.vmem [shape: f32[32,64], index: 0, kind: input, shape index: {}]
  %s1 = inlined_call_operand.vmem [shape: f32[32,32], index: 1, kind: input, shape index: {}]
  %s2 = inlined_call_operand.vmem [shape: f32[1,64], index: 2, kind: input, shape index: {}]
  %s3 = inlined_call_operand.vmem [shape: f32[1,64], index: 3, kind: input, shape index: {}]
  %s4 = inlined_call_operand.vmem [shape: bf16[2,64,192], index: 4, kind: input, shape index: {}]
  %s5 = inlined_call_operand.vmem [shape: f32[2,1,192], index: 5, kind: input, shape index: {}]
  %s6 = inlined_call_operand.vmem [shape: bf16[2,64,64], index: 6, kind: input, shape index: {}]
  %s7 = inlined_call_operand.vmem [shape: f32[2,1,64], index: 7, kind: input, shape index: {}]
  %s8 = inlined_call_operand.vmem [shape: f32[2,1,64], index: 8, kind: input, shape index: {}]
  %s9 = inlined_call_operand.vmem [shape: f32[2,1,64], index: 9, kind: input, shape index: {}]
  %s10 = inlined_call_operand.vmem [shape: bf16[2,64,128], index: 10, kind: input, shape index: {}]
  %s11 = inlined_call_operand.vmem [shape: f32[2,1,128], index: 11, kind: input, shape index: {}]
  %s12 = inlined_call_operand.vmem [shape: bf16[2,128,64], index: 12, kind: input, shape index: {}]
  %s13 = inlined_call_operand.vmem [shape: f32[2,1,64], index: 13, kind: input, shape index: {}]
  %s14 = inlined_call_operand.vmem [shape: f32[2,1,64], index: 14, kind: input, shape index: {}]
  %s15 = inlined_call_operand.vmem [shape: f32[2,1,64], index: 15, kind: input, shape index: {}]
  %s16 = inlined_call_operand.vmem [shape: bf16[64,64], index: 16, kind: input, shape index: {}]
  %s17 = inlined_call_operand.vmem [shape: f32[1,64], index: 17, kind: input, shape index: {}]
  %s18 = inlined_call_operand.vmem [shape: bf16[64,128], index: 18, kind: input, shape index: {}]
  %s19 = inlined_call_operand.vmem [shape: f32[1,128], index: 19, kind: input, shape index: {}]
  %s20 = inlined_call_operand.vmem [shape: f32[32,128], index: 20, kind: output, shape index: {}]
  %s21 = sld [smem:[#allocation0]]
  $region90: #{deberta_forward.1} parent=0
    _
  %s23 = ssub.s32 1, %s21
  %s24 = scalar_select 0, %s23, %s21
  // Predicated region
  $region2: #{deberta_forward.1} parent=0 // pred_check
    _
  $region3: #{deberta_forward.1} parent=0 // pred_check_branch
    %26 = sbr.rel (0) target = $region5
  $region4: #{deberta_forward.1} parent=0 // pred_region
    _
  $region5: #{deberta_forward.1} parent=0 // pred_fallthru
    _
  // Predicated region
  $region6: #{deberta_forward.1} parent=0 // pred_check
    _
  $region7: #{deberta_forward.1} parent=0 // pred_check_branch
    %28 = sbr.rel (0) target = $region9
  $region8: #{deberta_forward.1} parent=0 // pred_region
    _
  $region9: #{deberta_forward.1} parent=0 // pred_fallthru
    _
  // Predicated region
  $region10: #{deberta_forward.1} parent=0 // pred_check
    _
  $region11: #{deberta_forward.1} parent=0 // pred_check_branch
    %30 = sbr.rel (0) target = $region13
  $region12: #{deberta_forward.1} parent=0 // pred_region
    _
  $region13: #{deberta_forward.1} parent=0 // pred_fallthru
    _
  // Predicated region
  $region14: #{deberta_forward.1} parent=0 // pred_check
    _
  $region15: #{deberta_forward.1} parent=0 // pred_check_branch
    %32 = sbr.rel (0) target = $region17
  $region16: #{deberta_forward.1} parent=0 // pred_region
    _
  $region17: #{deberta_forward.1} parent=0 // pred_fallthru
    _
  // Predicated region
  $region18: #{deberta_forward.1} parent=0 // pred_check
    _
  $region19: #{deberta_forward.1} parent=0 // pred_check_branch
    %34 = sbr.rel (0) target = $region21
  $region20: #{deberta_forward.1} parent=0 // pred_region
    _
  $region21: #{deberta_forward.1} parent=0 // pred_fallthru
    _
  // Predicated region
  $region22: #{deberta_forward.1} parent=0 // pred_check
    _
  $region23: #{deberta_forward.1} parent=0 // pred_check_branch
    %36 = sbr.rel (0) target = $region25
  $region24: #{deberta_forward.1} parent=0 // pred_region
    _
  $region25: #{deberta_forward.1} parent=0 // pred_fallthru
    _
  // Predicated region
  $region26: #{deberta_forward.1} parent=0 // pred_check
    _
  $region27: #{deberta_forward.1} parent=0 // pred_check_branch
    %38 = sbr.rel (0) target = $region29
  $region28: #{deberta_forward.1} parent=0 // pred_region
    _
  $region29: #{deberta_forward.1} parent=0 // pred_fallthru
    _
  // Predicated region
  $region30: #{deberta_forward.1} parent=0 // pred_check
    _
  $region31: #{deberta_forward.1} parent=0 // pred_check_branch
    %40 = sbr.rel (0) target = $region33
  $region32: #{deberta_forward.1} parent=0 // pred_region
    _
  $region33: #{deberta_forward.1} parent=0 // pred_fallthru
    _
  // Predicated region
  $region34: #{deberta_forward.1} parent=0 // pred_check
    _
  $region35: #{deberta_forward.1} parent=0 // pred_check_branch
    %42 = sbr.rel (0) target = $region37
  $region36: #{deberta_forward.1} parent=0 // pred_region
    _
  $region37: #{deberta_forward.1} parent=0 // pred_fallthru
    _
  // Predicated region
  $region38: #{deberta_forward.1} parent=0 // pred_check
    _
  $region39: #{deberta_forward.1} parent=0 // pred_check_branch
    %44 = sbr.rel (0) target = $region41
  $region40: #{deberta_forward.1} parent=0 // pred_region
    _
  $region41: #{deberta_forward.1} parent=0 // pred_fallthru
    _
  // Predicated region
  $region42: #{deberta_forward.1} parent=0 // pred_check
    _
  $region43: #{deberta_forward.1} parent=0 // pred_check_branch
    %46 = sbr.rel (0) target = $region45
  $region44: #{deberta_forward.1} parent=0 // pred_region
    _
  $region45: #{deberta_forward.1} parent=0 // pred_fallthru
    _
  // Predicated region
  $region46: #{deberta_forward.1} parent=0 // pred_check
    _
  $region47: #{deberta_forward.1} parent=0 // pred_check_branch
    %48 = sbr.rel (0) target = $region49
  $region48: #{deberta_forward.1} parent=0 // pred_region
    _
  $region49: #{deberta_forward.1} parent=0 // pred_fallthru
    _
  // Predicated region
  $region50: #{deberta_forward.1} parent=0 // pred_check
    _
  $region51: #{deberta_forward.1} parent=0 // pred_check_branch
    %50 = sbr.rel (0) target = $region53
  $region52: #{deberta_forward.1} parent=0 // pred_region
    _
  $region53: #{deberta_forward.1} parent=0 // pred_fallthru
    _
  // Predicated region
  $region54: #{deberta_forward.1} parent=0 // pred_check
    _
  $region55: #{deberta_forward.1} parent=0 // pred_check_branch
    %52 = sbr.rel (0) target = $region57
  $region56: #{deberta_forward.1} parent=0 // pred_region
    _
  $region57: #{deberta_forward.1} parent=0 // pred_fallthru
    _
  // Predicated region
  $region58: #{deberta_forward.1} parent=0 // pred_check
    _
  $region59: #{deberta_forward.1} parent=0 // pred_check_branch
    %54 = sbr.rel (0) target = $region61
  $region60: #{deberta_forward.1} parent=0 // pred_region
    _
  $region61: #{deberta_forward.1} parent=0 // pred_fallthru
    _
  // Predicated region
  $region62: #{deberta_forward.1} parent=0 // pred_check
    _
  $region63: #{deberta_forward.1} parent=0 // pred_check_branch
    %56 = sbr.rel (0) target = $region65
  $region64: #{deberta_forward.1} parent=0 // pred_region
    _
  $region65: #{deberta_forward.1} parent=0 // pred_fallthru
    _
  // Predicated region
  $region66: #{deberta_forward.1} parent=0 // pred_check
    _
  $region67: #{deberta_forward.1} parent=0 // pred_check_branch
    %58 = sbr.rel (0) target = $region69
  $region68: #{deberta_forward.1} parent=0 // pred_region
    _
  $region69: #{deberta_forward.1} parent=0 // pred_fallthru
    _
  // Predicated region
  $region70: #{deberta_forward.1} parent=0 // pred_check
    _
  $region71: #{deberta_forward.1} parent=0 // pred_check_branch
    %60 = sbr.rel (0) target = $region73
  $region72: #{deberta_forward.1} parent=0 // pred_region
    _
  $region73: #{deberta_forward.1} parent=0 // pred_fallthru
    _
  // Predicated region
  $region74: #{deberta_forward.1} parent=0 // pred_check
    _
  $region75: #{deberta_forward.1} parent=0 // pred_check_branch
    %62 = sbr.rel (0) target = $region77
  $region76: #{deberta_forward.1} parent=0 // pred_region
    _
  $region77: #{deberta_forward.1} parent=0 // pred_fallthru
    _
  // Predicated region
  $region78: #{deberta_forward.1} parent=0 // pred_check
    _
  $region79: #{deberta_forward.1} parent=0 // pred_check_branch
    %64 = sbr.rel (0) target = $region81
  $region80: #{deberta_forward.1} parent=0 // pred_region
    _
  $region81: #{deberta_forward.1} parent=0 // pred_fallthru
    _
  %v66 = vld [vmem:[%s1] sm:$0xff]
  %v67 = vld [vmem:[%s1 + $0x8] sm:$0xff]
  %v68 = vld [vmem:[%s1 + $0x10] sm:$0xff]
  %v69 = vld [vmem:[%s1 + $0x18] sm:$0xff]
  %v70 = vld [vmem:[%s0] sm:$0xff]
  %v71 = vld [vmem:[%s0 + $0x8] sm:$0xff]
  %v72 = vld [vmem:[%s0 + $0x10] sm:$0xff]
  %v73 = vld [vmem:[%s0 + $0x18] sm:$0xff]
  %v74 = vld [vmem:[%s2] sm:$0x1]
  %v75 = vld [vmem:[%s3] sm:$0x1]
  %vm76 = vcmask 523264
  %v77 = vsel %vm76, %v70, 0.0
  %78 = vadd.xlane.f32.xlu0 %v77
  %v79 = vpop.xlane.xlu0 %78
  %v80 = vsel %vm76, %v71, 0.0
  %81 = vadd.xlane.f32.xlu0 %v80
  %v82 = vpop.xlane.xlu0 %81
  %v83 = vsel %vm76, %v72, 0.0
  %84 = vadd.xlane.f32.xlu0 %v83
  %v85 = vpop.xlane.xlu0 %84
  %v86 = vsel %vm76, %v73, 0.0
  %87 = vadd.xlane.f32.xlu0 %v86
  %v88 = vpop.xlane.xlu0 %87
  %v89 = vrcp.pop 64.0
  %v90 = vmul.f32 %v79, %v89
  %v91 = vmul.f32 %v82, %v89
  %v92 = vmul.f32 %v85, %v89
  %v93 = vmul.f32 %v88, %v89
  %v94 = vsub.f32 %v70, %v90
  %v95 = vsub.f32 %v71, %v91
  %v96 = vsub.f32 %v72, %v92
  %v97 = vsub.f32 %v73, %v93
  %v98 = vmul.f32 %v94, %v94
  %v99 = vmul.f32 %v95, %v95
  %v100 = vmul.f32 %v96, %v96
  %v101 = vmul.f32 %v97, %v97
  %v102 = vsel %vm76, %v98, 0.0
  %103 = vadd.xlane.f32.xlu0 %v102
  %v104 = vpop.xlane.xlu0 %103
  %v105 = vsel %vm76, %v99, 0.0
  %106 = vadd.xlane.f32.xlu0 %v105
  %v107 = vpop.xlane.xlu0 %106
  %v108 = vsel %vm76, %v100, 0.0
  %109 = vadd.xlane.f32.xlu0 %v108
  %v110 = vpop.xlane.xlu0 %109
  %v111 = vsel %vm76, %v101, 0.0
  %112 = vadd.xlane.f32.xlu0 %v111
  %v113 = vpop.xlane.xlu0 %112
  %v114 = vmul.f32 %v104, %v89
  %v115 = vmul.f32 %v107, %v89
  %v116 = vmul.f32 %v110, %v89
  %v117 = vmul.f32 %v113, %v89
  %v118 = vadd.f32 %v114, 1e-07
  %v119 = vadd.f32 %v115, 1e-07
  %v120 = vadd.f32 %v116, 1e-07
  %v121 = vadd.f32 %v117, 1e-07
  %v122 = vrsqrt.pop %v118
  %v123 = vrsqrt.pop %v119
  %v124 = vrsqrt.pop %v120
  %v125 = vrsqrt.pop %v121
  %v126 = vmul.f32 %v94, %v122
  %v127 = vmul.f32 %v95, %v123
  %v128 = vmul.f32 %v96, %v124
  %v129 = vmul.f32 %v97, %v125
  %v131 = vlaneseq
  %v132 = vshrl.u32 %v131, 7
  %v133 = vsub.s32 0, %v132
  %v134 = vrot.slane %v74, %v133
  %v136 = vmul.f32 %v126, %v134
  %v137 = vmul.f32 %v127, %v134
  %v138 = vmul.f32 %v128, %v134
  %v139 = vmul.f32 %v129, %v134
  %v141 = vlaneseq
  %v142 = vshrl.u32 %v141, 7
  %v143 = vsub.s32 0, %v142
  %v144 = vrot.slane %v75, %v143
  %v146 = vadd.f32 %v136, %v144
  %v147 = vadd.f32 %v137, %v144
  %v148 = vadd.f32 %v138, %v144
  %v149 = vadd.f32 %v139, %v144
  %v150 = vld [vmem:[%s4] sm:$0xff]
  %v151 = vld [vmem:[%s4 + $0x8] sm:$0xff]
  %v152 = vld [vmem:[%s4 + $0x10] sm:$0xff]
  %v153 = vld [vmem:[%s4 + $0x18] sm:$0xff]
  %v154 = vld [vmem:[%s4 + $0x20] sm:$0xff]
  %v155 = vld [vmem:[%s4 + $0x28] sm:$0xff]
  %v156 = vld [vmem:[%s4 + $0x30] sm:$0xff]
  %v157 = vld [vmem:[%s4 + $0x38] sm:$0xff]
  %v158 = vpack.c.bf16 %v147, %v146
  %v159 = vpack.c.bf16 %v149, %v148
  %v160 = vld [vmem:[%s5] sm:$0x3]
  %v162 = vlaneseq
  %v163 = vshrl.u32 %v162, 7
  %v164 = vsub.s32 0, %v163
  %v165 = vrot.slane %v160, %v164
  %v166 = vlaneseq
  %v167 = vshrl.u32 %v166, 7
  %v168 = vsub.s32 1, %v167
  %v169 = vrot.slane %v160, %v168
  %v180 = vunpack.c.l.b16 %v150
  %v181 = vunpack.c.h.b16 %v150
  %v182 = vunpack.c.l.b16 %v151
  %v183 = vunpack.c.h.b16 %v151
  %v184 = vunpack.c.l.b16 %v152
  %v185 = vunpack.c.h.b16 %v152
  %v186 = vunpack.c.l.b16 %v153
  %v187 = vunpack.c.h.b16 %v153
  %v188 = vunpack.c.l.b16 %v154
  %v189 = vunpack.c.h.b16 %v154
  %v190 = vunpack.c.l.b16 %v155
  %v191 = vunpack.c.h.b16 %v155
  %v192 = vunpack.c.l.b16 %v156
  %v193 = vunpack.c.h.b16 %v156
  %v194 = vunpack.c.l.b16 %v157
  %v195 = vunpack.c.h.b16 %v157
  %v196 = vpack.c.b16 %v182, %v180
  %v197 = vpack.c.b16 %v183, %v181
  %v198 = vpack.c.b16 %v186, %v184
  %v199 = vpack.c.b16 %v187, %v185
  %v200 = vpack.c.b16 %v190, %v188
  %v201 = vpack.c.b16 %v191, %v189
  %v202 = vpack.c.b16 %v194, %v192
  %v203 = vpack.c.b16 %v195, %v193
  %v213 = vsel %vm76, %v158, 0
  %v216 = vsel %vm76, %v159, 0
  %218 = vmatprep.subr.bf16.mxu0 %v197
  %219 = vmatpush1.bf16.msra.mxu0 %v196
  %220 = vmatprep.subr.bf16.mxu0 %v199
  %221 = vmatpush1.bf16.msra.mxu0 %v198
  %222 = vmatprep.subr.bf16.mxu0 %v201
  %223 = vmatpush1.bf16.msra.mxu0 %v200
  %224 = vmatprep.subr.bf16.mxu0 %v203
  %225 = vmatpush1.bf16.msra.mxu0 %v202
  %226 = vmatprep.subr.bf16.mxu0 0
  %227 = vmatpush1.bf16.msra.mxu0 0
  %228 = vmatprep.subr.bf16.mxu0 0
  %229 = vmatpush1.bf16.msra.mxu0 0
  %230 = vmatprep.subr.bf16.mxu0 0
  %231 = vmatpush1.bf16.msra.mxu0 0
  %232 = vmatprep.subr.bf16.mxu0 0
  %233 = vmatpush1.bf16.msra.mxu0 0
  %234 = vmatprep.subr.bf16.mxu0 0
  %235 = vmatpush1.bf16.msra.mxu0 0
  %236 = vmatprep.subr.bf16.mxu0 0
  %237 = vmatpush1.bf16.msra.mxu0 0
  %238 = vmatprep.subr.bf16.mxu0 0
  %239 = vmatpush1.bf16.msra.mxu0 0
  %240 = vmatprep.subr.bf16.mxu0 0
  %241 = vmatpush1.bf16.msra.mxu0 0
  %242 = vmatprep.subr.bf16.mxu0 0
  %243 = vmatpush1.bf16.msra.mxu0 0
  %244 = vmatprep.subr.bf16.mxu0 0
  %245 = vmatpush1.bf16.msra.mxu0 0
  %246 = vmatprep.subr.bf16.mxu0 0
  %247 = vmatpush1.bf16.msra.mxu0 0
  %248 = vmatprep.subr.bf16.mxu0 0
  %249 = vmatpush1.bf16.msra.mxu0 0
  %250 = vmatprep.mubr.bf16.mxu0 0
  %251 = vmatmul.mubr.bf16.gmra.mrb[0].mxu0 %v213
  %v252 = vpop.f32.mrb[0].mxu0
  %v253 = vadd.f32 %v165, %v252
  %v254 = vpop.f32.mrb[0].mxu0
  %v255 = vadd.f32 %v169, %v254
  %v256 = vpop.f32.mrb[0].mxu0
  %v257 = vadd.f32 %v165, %v256
  %v258 = vpop.f32.mrb[0].mxu0
  %v259 = vadd.f32 %v169, %v258
  %260 = vmatprep.mubr.bf16.mxu0 0
  %261 = vmatmul.mubr.bf16.gmra.mrb[0].mxu0 %v216
  %v262 = vpop.f32.mrb[0].mxu0
  %v263 = vadd.f32 %v165, %v262
  %v264 = vpop.f32.mrb[0].mxu0
  %v265 = vadd.f32 %v169, %v264
  %v266 = vpop.f32.mrb[0].mxu0
  %v267 = vadd.f32 %v165, %v266
  %v268 = vpop.f32.mrb[0].mxu0
  %v269 = vadd.f32 %v169, %v268
  %270 = vdwg.mxu0
  %v271 = vld [vmem:[%s6] sm:$0xf]
  %v272 = vld [vmem:[%s6 + $0x4] sm:$0xf]
  %v273 = vld [vmem:[%s6 + $0x8] sm:$0xf]
  %v274 = vld [vmem:[%s6 + $0xc] sm:$0xf]
  %v275 = vld [vmem:[%s6 + $0x10] sm:$0xf]
  %v276 = vld [vmem:[%s6 + $0x14] sm:$0xf]
  %v277 = vld [vmem:[%s6 + $0x18] sm:$0xf]
  %v278 = vld [vmem:[%s6 + $0x1c] sm:$0xf]
  %v279 = vpack.c.bf16 %v257, %v253
  %v280 = vpack.c.bf16 %v267, %v263
  %283 = vrot.lane.b32.xlu0 %v279, 64
  %v284 = vpop.permute.xlu0 %283
  %285 = vrot.lane.b32.xlu0 %v280, 64
  %v286 = vpop.permute.xlu0 %285
  %vm287 = vcmask 130048
  %v289 = vsel %vm287, %v279, 0
  %v292 = vsel %vm287, %v280, 0
  %v295 = vsel %vm287, %v284, 0
  %v298 = vsel %vm287, %v286, 0
  %300 = vmatprep.subr.bf16.mxu0 0
  %301 = vmatpush1.bf16.xpose.msra.mxu0 %v295
  %302 = vmatprep.subr.bf16.mxu0 0
  %303 = vmatpush1.bf16.xpose.msra.mxu0 %v298
  %304 = vmatprep.subr.bf16.mxu0 0
  %305 = vmatpush1.bf16.xpose.msra.mxu0 0
  %306 = vmatprep.subr.bf16.mxu0 0
  %307 = vmatpush1.bf16.xpose.msra.mxu0 0
  %308 = vmatprep.subr.bf16.mxu0 0
  %309 = vmatpush1.bf16.xpose.msra.mxu0 0
  %310 = vmatprep.subr.bf16.mxu0 0
  %311 = vmatpush1.bf16.xpose.msra.mxu0 0
  %312 = vmatprep.subr.bf16.mxu0 0
  %313 = vmatpush1.bf16.xpose.msra.mxu0 0
  %314 = vmatprep.subr.bf16.mxu0 0
  %315 = vmatpush1.bf16.xpose.msra.mxu0 0
  %316 = vmatprep.subr.bf16.mxu0 0
  %317 = vmatpush1.bf16.xpose.msra.mxu0 0
  %318 = vmatprep.subr.bf16.mxu0 0
  %319 = vmatpush1.bf16.xpose.msra.mxu0 0
  %320 = vmatprep.subr.bf16.mxu0 0
  %321 = vmatpush1.bf16.xpose.msra.mxu0 0
  %322 = vmatprep.subr.bf16.mxu0 0
  %323 = vmatpush1.bf16.xpose.msra.mxu0 0
  %324 = vmatprep.subr.bf16.mxu0 0
  %325 = vmatpush1.bf16.xpose.msra.mxu0 0
  %326 = vmatprep.subr.bf16.mxu0 0
  %327 = vmatpush1.bf16.xpose.msra.mxu0 0
  %328 = vmatprep.subr.bf16.mxu0 0
  %329 = vmatpush1.bf16.xpose.msra.mxu0 0
  %330 = vmatprep.subr.bf16.mxu0 0
  %331 = vmatpush1.bf16.xpose.msra.mxu0 0
  %332 = vmatprep.mubr.bf16.mxu0 0
  %333 = vmatmul.mubr.bf16.gmra.mrb[0].mxu0 %v289
  %v334 = vpop.f32.mrb[0].mxu0
  %v335 = vadd.f32 0.0, %v334
  %v336 = vpop.f32.mrb[0].mxu0
  %v337 = vpop.f32.mrb[0].mxu0
  %v338 = vadd.f32 0.0, %v337
  %v339 = vpop.f32.mrb[0].mxu0
  %340 = vmatprep.mubr.bf16.mxu0 0
  %341 = vmatmul.mubr.bf16.gmra.mrb[0].mxu0 %v292
  %v342 = vpop.f32.mrb[0].mxu0
  %v343 = vadd.f32 0.0, %v342
  %v344 = vpop.f32.mrb[0].mxu0
  %v345 = vpop.f32.mrb[0].mxu0
  %v346 = vadd.f32 0.0, %v345
  %v347 = vpop.f32.mrb[0].mxu0
  %348 = vdwg.mxu0
  %v349 = vmul.f32 %v335, 0.25
  %v350 = vmul.f32 %v338, 0.25
  %v351 = vmul.f32 %v343, 0.25
  %v352 = vmul.f32 %v346, 0.25
  %v353 = vadd.f32 %v349, %v66
  %v354 = vadd.f32 %v350, %v67
  %v355 = vadd.f32 %v351, %v68
  %v356 = vadd.f32 %v352, %v69
  %vm357 = vcmask 261120
  %v358 = vsel %vm357, %v353, -inf
  %359 = vmax.xlane.f32.xlu0 %v358
  %v360 = vpop.xlane.xlu0 %359
  %v361 = vsel %vm357, %v354, -inf
  %362 = vmax.xlane.f32.xlu0 %v361
  %v363 = vpop.xlane.xlu0 %362
  %v364 = vsel %vm357, %v355, -inf
  %365 = vmax.xlane.f32.xlu0 %v364
  %v366 = vpop.xlane.xlu0 %365
  %v367 = vsel %vm357, %v356, -inf
  %368 = vmax.xlane.f32.xlu0 %v367
  %v369 = vpop.xlane.xlu0 %368
  %v370 = vsub.f32 %v353, %v360
  %v371 = vsub.f32 %v354, %v363
  %v372 = vsub.f32 %v355, %v366
  %v373 = vsub.f32 %v356, %v369
  %v374 = vmul.f32 %v370, 1.442695
  %v375 = vpow.pop %v374
  %v376 = vmul.f32 %v371, 1.442695
  %v377 = vpow.pop %v376
  %v378 = vmul.f32 %v372, 1.442695
  %v379 = vpow.pop %v378
  %v380 = vmul.f32 %v373, 1.442695
  %v381 = vpow.pop %v380
  %v382 = vsel %vm357, %v375, 0.0
  %383 = vadd.xlane.f32.xlu0 %v382
  %v384 = vpop.xlane.xlu0 %383
  %v385 = vsel %vm357, %v377, 0.0
  %386 = vadd.xlane.f32.xlu0 %v385
  %v387 = vpop.xlane.xlu0 %386
  %v388 = vsel %vm357, %v379, 0.0
  %389 = vadd.xlane.f32.xlu0 %v388
  %v390 = vpop.xlane.xlu0 %389
  %v391 = vsel %vm357, %v381, 0.0
  %392 = vadd.xlane.f32.xlu0 %v391
  %v393 = vpop.xlane.xlu0 %392
  %v394 = vrcp.pop %v384
  %v395 = vrcp.pop %v387
  %v396 = vrcp.pop %v390
  %v397 = vrcp.pop %v393
  %v398 = vmul.f32 %v375, %v394
  %v399 = vmul.f32 %v377, %v395
  %v400 = vmul.f32 %v379, %v396
  %v401 = vmul.f32 %v381, %v397
  %v402 = vpack.c.bf16 %v399, %v398
  %v403 = vpack.c.bf16 %v401, %v400
  %v404 = vpack.c.bf16 %v259, %v255
  %v405 = vpack.c.bf16 %v269, %v265
  %v407 = vsel %vm357, %v402, 0
  %v410 = vsel %vm357, %v403, 0
  %412 = vmatprep.subr.bf16.mxu0 0
  %413 = vmatpush1.bf16.msra.mxu0 %v404
  %414 = vmatprep.subr.bf16.mxu0 0
  %415 = vmatpush1.bf16.msra.mxu0 %v405
  %416 = vmatprep.subr.bf16.mxu0 0
  %417 = vmatpush1.bf16.msra.mxu0 0
  %418 = vmatprep.subr.bf16.mxu0 0
  %419 = vmatpush1.bf16.msra.mxu0 0
  %420 = vmatprep.subr.bf16.mxu0 0
  %421 = vmatpush1.bf16.msra.mxu0 0
  %422 = vmatprep.subr.bf16.mxu0 0
  %423 = vmatpush1.bf16.msra.mxu0 0
  %424 = vmatprep.subr.bf16.mxu0 0
  %425 = vmatpush1.bf16.msra.mxu0 0
  %426 = vmatprep.subr.bf16.mxu0 0
  %427 = vmatpush1.bf16.msra.mxu0 0
  %428 = vmatprep.subr.bf16.mxu0 0
  %429 = vmatpush1.bf16.msra.mxu0 0
  %430 = vmatprep.subr.bf16.mxu0 0
  %431 = vmatpush1.bf16.msra.mxu0 0
  %432 = vmatprep.subr.bf16.mxu0 0
  %433 = vmatpush1.bf16.msra.mxu0 0
  %434 = vmatprep.subr.bf16.mxu0 0
  %435 = vmatpush1.bf16.msra.mxu0 0
  %436 = vmatprep.subr.bf16.mxu0 0
  %437 = vmatpush1.bf16.msra.mxu0 0
  %438 = vmatprep.subr.bf16.mxu0 0
  %439 = vmatpush1.bf16.msra.mxu0 0
  %440 = vmatprep.subr.bf16.mxu0 0
  %441 = vmatpush1.bf16.msra.mxu0 0
  %442 = vmatprep.subr.bf16.mxu0 0
  %443 = vmatpush1.bf16.msra.mxu0 0
  %444 = vmatprep.mubr.bf16.mxu0 0
  %445 = vmatmul.mubr.bf16.gmra.mrb[0].mxu0 %v407
  %v446 = vpop.f32.mrb[0].mxu0
  %v447 = vadd.f32 0.0, %v446
  %v448 = vpop.f32.mrb[0].mxu0
  %v449 = vpop.f32.mrb[0].mxu0
  %v450 = vadd.f32 0.0, %v449
  %v451 = vpop.f32.mrb[0].mxu0
  %452 = vmatprep.mubr.bf16.mxu0 0
  %453 = vmatmul.mubr.bf16.gmra.mrb[0].mxu0 %v410
  %v454 = vpop.f32.mrb[0].mxu0
  %v455 = vadd.f32 0.0, %v454
  %v456 = vpop.f32.mrb[0].mxu0
  %v457 = vpop.f32.mrb[0].mxu0
  %v458 = vadd.f32 0.0, %v457
  %v459 = vpop.f32.mrb[0].mxu0
  %460 = vdwg.mxu0
  %v461 = vpack.c.bf16 %v450, %v447
  %v462 = vpack.c.bf16 %v458, %v455
  %463 = vrot.lane.b32.xlu0 %v279, 112
  %v464 = vpop.permute.xlu0 %463
  %465 = vrot.lane.b32.xlu0 %v280, 112
  %v466 = vpop.permute.xlu0 %465
  %467 = vrot.lane.b32.xlu0 %v279, 48
  %v468 = vpop.permute.xlu0 %467
  %469 = vrot.lane.b32.xlu0 %v280, 48
  %v470 = vpop.permute.xlu0 %469
  %v472 = vsel %vm287, %v464, 0
  %v475 = vsel %vm287, %v466, 0
  %v478 = vsel %vm287, %v468, 0
  %v481 = vsel %vm287, %v470, 0
  %483 = vmatprep.subr.bf16.mxu0 0
  %484 = vmatpush1.bf16.xpose.msra.mxu0 %v478
  %485 = vmatprep.subr.bf16.mxu0 0
  %486 = vmatpush1.bf16.xpose.msra.mxu0 %v481
  %487 = vmatprep.subr.bf16.mxu0 0
  %488 = vmatpush1.bf16.xpose.msra.mxu0 0
  %489 = vmatprep.subr.bf16.mxu0 0
  %490 = vmatpush1.bf16.xpose.msra.mxu0 0
  %491 = vmatprep.subr.bf16.mxu0 0
  %492 = vmatpush1.bf16.xpose.msra.mxu0 0
  %493 = vmatprep.subr.bf16.mxu0 0
  %494 = vmatpush1.bf16.xpose.msra.mxu0 0
  %495 = vmatprep.subr.bf16.mxu0 0
  %496 = vmatpush1.bf16.xpose.msra.mxu0 0
  %497 = vmatprep.subr.bf16.mxu0 0
  %498 = vmatpush1.bf16.xpose.msra.mxu0 0
  %499 = vmatprep.subr.bf16.mxu0 0
  %500 = vmatpush1.bf16.xpose.msra.mxu0 0
  %501 = vmatprep.subr.bf16.mxu0 0
  %502 = vmatpush1.bf16.xpose.msra.mxu0 0
  %503 = vmatprep.subr.bf16.mxu0 0
  %504 = vmatpush1.bf16.xpose.msra.mxu0 0
  %505 = vmatprep.subr.bf16.mxu0 0
  %506 = vmatpush1.bf16.xpose.msra.mxu0 0
  %507 = vmatprep.subr.bf16.mxu0 0
  %508 = vmatpush1.bf16.xpose.msra.mxu0 0
  %509 = vmatprep.subr.bf16.mxu0 0
  %510 = vmatpush1.bf16.xpose.msra.mxu0 0
  %511 = vmatprep.subr.bf16.mxu0 0
  %512 = vmatpush1.bf16.xpose.msra.mxu0 0
  %513 = vmatprep.subr.bf16.mxu0 0
  %514 = vmatpush1.bf16.xpose.msra.mxu0 0
  %515 = vmatprep.mubr.bf16.mxu0 0
  %516 = vmatmul.mubr.bf16.gmra.mrb[0].mxu0 %v472
  %v517 = vpop.f32.mrb[0].mxu0
  %v518 = vadd.f32 0.0, %v517
  %v519 = vpop.f32.mrb[0].mxu0
  %v520 = vpop.f32.mrb[0].mxu0
  %v521 = vadd.f32 0.0, %v520
  %v522 = vpop.f32.mrb[0].mxu0
  %523 = vmatprep.mubr.bf16.mxu0 0
  %524 = vmatmul.mubr.bf16.gmra.mrb[0].mxu0 %v475
  %v525 = vpop.f32.mrb[0].mxu0
  %v526 = vadd.f32 0.0, %v525
  %v527 = vpop.f32.mrb[0].mxu0
  %v528 = vpop.f32.mrb[0].mxu0
  %v529 = vadd.f32 0.0, %v528
  %v530 = vpop.f32.mrb[0].mxu0
  %531 = vdwg.mxu0
  %v532 = vmul.f32 %v518, 0.25
  %v533 = vmul.f32 %v521, 0.25
  %v534 = vmul.f32 %v526, 0.25
  %v535 = vmul.f32 %v529, 0.25
  %v536 = vadd.f32 %v532, %v66
  %v537 = vadd.f32 %v533, %v67
  %v538 = vadd.f32 %v534, %v68
  %v539 = vadd.f32 %v535, %v69
  %v540 = vsel %vm357, %v536, -inf
  %541 = vmax.xlane.f32.xlu0 %v540
  %v542 = vpop.xlane.xlu0 %541
  %v543 = vsel %vm357, %v537, -inf
  %544 = vmax.xlane.f32.xlu0 %v543
  %v545 = vpop.xlane.xlu0 %544
  %v546 = vsel %vm357, %v538, -inf
  %547 = vmax.xlane.f32.xlu0 %v546
  %v548 = vpop.xlane.xlu0 %547
  %v549 = vsel %vm357, %v539, -inf
  %550 = vmax.xlane.f32.xlu0 %v549
  %v551 = vpop.xlane.xlu0 %550
  %v552 = vsub.f32 %v536, %v542
  %v553 = vsub.f32 %v537, %v545
  %v554 = vsub.f32 %v538, %v548
  %v555 = vsub.f32 %v539, %v551
  %v556 = vmul.f32 %v552, 1.442695
  %v557 = vpow.pop %v556
  %v558 = vmul.f32 %v553, 1.442695
  %v559 = vpow.pop %v558
  %v560 = vmul.f32 %v554, 1.442695
  %v561 = vpow.pop %v560
  %v562 = vmul.f32 %v555, 1.442695
  %v563 = vpow.pop %v562
  %v564 = vsel %vm357, %v557, 0.0
  %565 = vadd.xlane.f32.xlu0 %v564
  %v566 = vpop.xlane.xlu0 %565
  %v567 = vsel %vm357, %v559, 0.0
  %568 = vadd.xlane.f32.xlu0 %v567
  %v569 = vpop.xlane.xlu0 %568
  %v570 = vsel %vm357, %v561, 0.0
  %571 = vadd.xlane.f32.xlu0 %v570
  %v572 = vpop.xlane.xlu0 %571
  %v573 = vsel %vm357, %v563, 0.0
  %574 = vadd.xlane.f32.xlu0 %v573
  %v575 = vpop.xlane.xlu0 %574
  %v576 = vrcp.pop %v566
  %v577 = vrcp.pop %v569
  %v578 = vrcp.pop %v572
  %v579 = vrcp.pop %v575
  %v580 = vmul.f32 %v557, %v576
  %v581 = vmul.f32 %v559, %v577
  %v582 = vmul.f32 %v561, %v578
  %v583 = vmul.f32 %v563, %v579
  %v584 = vpack.c.bf16 %v581, %v580
  %v585 = vpack.c.bf16 %v583, %v582
  %588 = vrot.lane.b32.xlu0 %v404, 112
  %v589 = vpop.permute.xlu0 %588
  %590 = vrot.lane.b32.xlu0 %v405, 112
  %v591 = vpop.permute.xlu0 %590
  %v595 = vsel %vm357, %v584, 0
  %v598 = vsel %vm357, %v585, 0
  %600 = vmatprep.subr.bf16.mxu0 0
  %601 = vmatpush1.bf16.msra.mxu0 %v589
  %602 = vmatprep.subr.bf16.mxu0 0
  %603 = vmatpush1.bf16.msra.mxu0 %v591
  %604 = vmatprep.subr.bf16.mxu0 0
  %605 = vmatpush1.bf16.msra.mxu0 0
  %606 = vmatprep.subr.bf16.mxu0 0
  %607 = vmatpush1.bf16.msra.mxu0 0
  %608 = vmatprep.subr.bf16.mxu0 0
  %609 = vmatpush1.bf16.msra.mxu0 0
  %610 = vmatprep.subr.bf16.mxu0 0
  %611 = vmatpush1.bf16.msra.mxu0 0
  %612 = vmatprep.subr.bf16.mxu0 0
  %613 = vmatpush1.bf16.msra.mxu0 0
  %614 = vmatprep.subr.bf16.mxu0 0
  %615 = vmatpush1.bf16.msra.mxu0 0
  %616 = vmatprep.subr.bf16.mxu0 0
  %617 = vmatpush1.bf16.msra.mxu0 0
  %618 = vmatprep.subr.bf16.mxu0 0
  %619 = vmatpush1.bf16.msra.mxu0 0
  %620 = vmatprep.subr.bf16.mxu0 0
  %621 = vmatpush1.bf16.msra.mxu0 0
  %622 = vmatprep.subr.bf16.mxu0 0
  %623 = vmatpush1.bf16.msra.mxu0 0
  %624 = vmatprep.subr.bf16.mxu0 0
  %625 = vmatpush1.bf16.msra.mxu0 0
  %626 = vmatprep.subr.bf16.mxu0 0
  %627 = vmatpush1.bf16.msra.mxu0 0
  %628 = vmatprep.subr.bf16.mxu0 0
  %629 = vmatpush1.bf16.msra.mxu0 0
  %630 = vmatprep.subr.bf16.mxu0 0
  %631 = vmatpush1.bf16.msra.mxu0 0
  %632 = vmatprep.mubr.bf16.mxu0 0
  %633 = vmatmul.mubr.bf16.gmra.mrb[0].mxu0 %v595
  %v634 = vpop.f32.mrb[0].mxu0
  %v635 = vadd.f32 0.0, %v634
  %v636 = vpop.f32.mrb[0].mxu0
  %v637 = vpop.f32.mrb[0].mxu0
  %v638 = vadd.f32 0.0, %v637
  %v639 = vpop.f32.mrb[0].mxu0
  %640 = vmatprep.mubr.bf16.mxu0 0
  %641 = vmatmul.mubr.bf16.gmra.mrb[0].mxu0 %v598
  %v642 = vpop.f32.mrb[0].mxu0
  %v643 = vadd.f32 0.0, %v642
  %v644 = vpop.f32.mrb[0].mxu0
  %v645 = vpop.f32.mrb[0].mxu0
  %v646 = vadd.f32 0.0, %v645
  %v647 = vpop.f32.mrb[0].mxu0
  %648 = vdwg.mxu0
  %v649 = vpack.c.bf16 %v638, %v635
  %v650 = vpack.c.bf16 %v646, %v643
  %v653 = vunpack.c.l.b16 %v273
  %v654 = vunpack.c.l.b16 %v274
  %v655 = vpack.c.b16 %v654, %v653
  %v658 = vsel %vm287, %v649, 0
  %v661 = vsel %vm287, %v650, 0
  %663 = vmatprep.subr.bf16.mxu0 0
  %664 = vmatpush1.bf16.msra.mxu0 %v655
  %665 = vmatprep.subr.bf16.mxu0 0
  %666 = vmatpush1.bf16.msra.mxu0 0
  %667 = vmatprep.subr.bf16.mxu0 0
  %668 = vmatpush1.bf16.msra.mxu0 0
  %669 = vmatprep.subr.bf16.mxu0 0
  %670 = vmatpush1.bf16.msra.mxu0 0
  %671 = vmatprep.subr.bf16.mxu0 0
  %672 = vmatpush1.bf16.msra.mxu0 0
  %673 = vmatprep.subr.bf16.mxu0 0
  %674 = vmatpush1.bf16.msra.mxu0 0
  %675 = vmatprep.subr.bf16.mxu0 0
  %676 = vmatpush1.bf16.msra.mxu0 0
  %677 = vmatprep.subr.bf16.mxu0 0
  %678 = vmatpush1.bf16.msra.mxu0 0
  %679 = vmatprep.subr.bf16.mxu0 0
  %680 = vmatpush1.bf16.msra.mxu0 0
  %681 = vmatprep.subr.bf16.mxu0 0
  %682 = vmatpush1.bf16.msra.mxu0 0
  %683 = vmatprep.subr.bf16.mxu0 0
  %684 = vmatpush1.bf16.msra.mxu0 0
  %685 = vmatprep.subr.bf16.mxu0 0
  %686 = vmatpush1.bf16.msra.mxu0 0
  %687 = vmatprep.subr.bf16.mxu0 0
  %688 = vmatpush1.bf16.msra.mxu0 0
  %689 = vmatprep.subr.bf16.mxu0 0
  %690 = vmatpush1.bf16.msra.mxu0 0
  %691 = vmatprep.subr.bf16.mxu0 0
  %692 = vmatpush1.bf16.msra.mxu0 0
  %693 = vmatprep.subr.bf16.mxu0 0
  %694 = vmatpush1.bf16.msra.mxu0 0
  %695 = vmatprep.mubr.bf16.mxu0 0
  %696 = vmatmul.mubr.bf16.gmra.mrb[0].mxu0 %v658
  %v697 = vpop.f32.mrb[0].mxu0
  %v698 = vadd.f32 0.0, %v697
  %v699 = vpop.f32.mrb[0].mxu0
  %v700 = vpop.f32.mrb[0].mxu0
  %v701 = vadd.f32 0.0, %v700
  %v702 = vpop.f32.mrb[0].mxu0
  %703 = vmatprep.mubr.bf16.mxu0 0
  %704 = vmatmul.mubr.bf16.gmra.mrb[0].mxu0 %v661
  %v705 = vpop.f32.mrb[0].mxu0
  %v706 = vadd.f32 0.0, %v705
  %v707 = vpop.f32.mrb[0].mxu0
  %v708 = vpop.f32.mrb[0].mxu0
  %v709 = vadd.f32 0.0, %v708
  %v710 = vpop.f32.mrb[0].mxu0
  %711 = vdwg.mxu0
  %v714 = vunpack.c.l.b16 %v271
  %v715 = vunpack.c.l.b16 %v272
  %v716 = vpack.c.b16 %v715, %v714
  %v719 = vsel %vm287, %v461, 0
  %v722 = vsel %vm287, %v462, 0
  %724 = vmatprep.subr.bf16.mxu0 0
  %725 = vmatpush1.bf16.msra.mxu0 %v716
  %726 = vmatprep.subr.bf16.mxu0 0
  %727 = vmatpush1.bf16.msra.mxu0 0
  %728 = vmatprep.subr.bf16.mxu0 0
  %729 = vmatpush1.bf16.msra.mxu0 0
  %730 = vmatprep.subr.bf16.mxu0 0
  %731 = vmatpush1.bf16.msra.mxu0 0
  %732 = vmatprep.subr.bf16.mxu0 0
  %733 = vmatpush1.bf16.msra.mxu0 0
  %734 = vmatprep.subr.bf16.mxu0 0
  %735 = vmatpush1.bf16.msra.mxu0 0
  %736 = vmatprep.subr.bf16.mxu0 0
  %737 = vmatpush1.bf16.msra.mxu0 0
  %738 = vmatprep.subr.bf16.mxu0 0
  %739 = vmatpush1.bf16.msra.mxu0 0
  %740 = vmatprep.subr.bf16.mxu0 0
  %741 = vmatpush1.bf16.msra.mxu0 0
  %742 = vmatprep.subr.bf16.mxu0 0
  %743 = vmatpush1.bf16.msra.mxu0 0
  %744 = vmatprep.subr.bf16.mxu0 0
  %745 = vmatpush1.bf16.msra.mxu0 0
  %746 = vmatprep.subr.bf16.mxu0 0
  %747 = vmatpush1.bf16.msra.mxu0 0
  %748 = vmatprep.subr.bf16.mxu0 0
  %749 = vmatpush1.bf16.msra.mxu0 0
  %750 = vmatprep.subr.bf16.mxu0 0
  %751 = vmatpush1.bf16.msra.mxu0 0
  %752 = vmatprep.subr.bf16.mxu0 0
  %753 = vmatpush1.bf16.msra.mxu0 0
  %754 = vmatprep.subr.bf16.mxu0 0
  %755 = vmatpush1.bf16.msra.mxu0 0
  %756 = vmatprep.mubr.bf16.mxu0 0
  %757 = vmatmul.mubr.bf16.gmra.mrb[0].mxu0 %v719
  %v758 = vpop.f32.mrb[0].mxu0
  %v759 = vadd.f32 %v698, %v758
  %v760 = vpop.f32.mrb[0].mxu0
  %v761 = vpop.f32.mrb[0].mxu0
  %v762 = vadd.f32 %v701, %v761
  %v763 = vpop.f32.mrb[0].mxu0
  %764 = vmatprep.mubr.bf16.mxu0 0
  %765 = vmatmul.mubr.bf16.gmra.mrb[0].mxu0 %v722
  %v766 = vpop.f32.mrb[0].mxu0
  %v767 = vadd.f32 %v706, %v766
  %v768 = vpop.f32.mrb[0].mxu0
  %v769 = vpop.f32.mrb[0].mxu0
  %v770 = vadd.f32 %v709, %v769
  %v771 = vpop.f32.mrb[0].mxu0
  %772 = vdwg.mxu0
  %773 = vrot.lane.b32.xlu0 %v279, 96
  %v774 = vpop.permute.xlu0 %773
  %775 = vrot.lane.b32.xlu0 %v280, 96
  %v776 = vpop.permute.xlu0 %775
  %777 = vrot.lane.b32.xlu0 %v279, 32
  %v778 = vpop.permute.xlu0 %777
  %779 = vrot.lane.b32.xlu0 %v280, 32
  %v780 = vpop.permute.xlu0 %779
  %v782 = vsel %vm287, %v774, 0
  %v785 = vsel %vm287, %v776, 0
  %v788 = vsel %vm287, %v778, 0
  %v791 = vsel %vm287, %v780, 0
  %793 = vmatprep.subr.bf16.mxu0 0
  %794 = vmatpush1.bf16.xpose.msra.mxu0 %v788
  %795 = vmatprep.subr.bf16.mxu0 0
  %796 = vmatpush1.bf16.xpose.msra.mxu0 %v791
  %797 = vmatprep.subr.bf16.mxu0 0
  %798 = vmatpush1.bf16.xpose.msra.mxu0 0
  %799 = vmatprep.subr.bf16.mxu0 0
  %800 = vmatpush1.bf16.xpose.msra.mxu0 0
  %801 = vmatprep.subr.bf16.mxu0 0
  %802 = vmatpush1.bf16.xpose.msra.mxu0 0
  %803 = vmatprep.subr.bf16.mxu0 0
  %804 = vmatpush1.bf16.xpose.msra.mxu0 0
  %805 = vmatprep.subr.bf16.mxu0 0
  %806 = vmatpush1.bf16.xpose.msra.mxu0 0
  %807 = vmatprep.subr.bf16.mxu0 0
  %808 = vmatpush1.bf16.xpose.msra.mxu0 0
  %809 = vmatprep.subr.bf16.mxu0 0
  %810 = vmatpush1.bf16.xpose.msra.mxu0 0
  %811 = vmatprep.subr.bf16.mxu0 0
  %812 = vmatpush1.bf16.xpose.msra.mxu0 0
  %813 = vmatprep.subr.bf16.mxu0 0
  %814 = vmatpush1.bf16.xpose.msra.mxu0 0
  %815 = vmatprep.subr.bf16.mxu0 0
  %816 = vmatpush1.bf16.xpose.msra.mxu0 0
  %817 = vmatprep.subr.bf16.mxu0 0
  %818 = vmatpush1.bf16.xpose.msra.mxu0 0
  %819 = vmatprep.subr.bf16.mxu0 0
  %820 = vmatpush1.bf16.xpose.msra.mxu0 0
  %821 = vmatprep.subr.bf16.mxu0 0
  %822 = vmatpush1.bf16.xpose.msra.mxu0 0
  %823 = vmatprep.subr.bf16.mxu0 0
  %824 = vmatpush1.bf16.xpose.msra.mxu0 0
  %825 = vmatprep.mubr.bf16.mxu0 0
  %826 = vmatmul.mubr.bf16.gmra.mrb[0].mxu0 %v782
  %v827 = vpop.f32.mrb[0].mxu0
  %v828 = vadd.f32 0.0, %v827
  %v829 = vpop.f32.mrb[0].mxu0
  %v830 = vpop.f32.mrb[0].mxu0
  %v831 = vadd.f32 0.0, %v830
  %v832 = vpop.f32.mrb[0].mxu0
  %833 = vmatprep.mubr.bf16.mxu0 0
  %834 = vmatmul.mubr.bf16.gmra.mrb[0].mxu0 %v785
  %v835 = vpop.f32.mrb[0].mxu0
  %v836 = vadd.f32 0.0, %v835
  %v837 = vpop.f32.mrb[0].mxu0
  %v838 = vpop.f32.mrb[0].mxu0
  %v839 = vadd.f32 0.0, %v838
  %v840 = vpop.f32.mrb[0].mxu0
  %841 = vdwg.mxu0
  %v842 = vmul.f32 %v828, 0.25
  %v843 = vmul.f32 %v831, 0.25
  %v844 = vmul.f32 %v836, 0.25
  %v845 = vmul.f32 %v839, 0.25
  %v846 = vadd.f32 %v842, %v66
  %v847 = vadd.f32 %v843, %v67
  %v848 = vadd.f32 %v844, %v68
  %v849 = vadd.f32 %v845, %v69
  %v850 = vsel %vm357, %v846, -inf
  %851 = vmax.xlane.f32.xlu0 %v850
  %v852 = vpop.xlane.xlu0 %851
  %v853 = vsel %vm357, %v847, -inf
  %854 = vmax.xlane.f32.xlu0 %v853
  %v855 = vpop.xlane.xlu0 %854
  %v856 = vsel %vm357, %v848, -inf
  %857 = vmax.xlane.f32.xlu0 %v856
  %v858 = vpop.xlane.xlu0 %857
  %v859 = vsel %vm357, %v849, -inf
  %860 = vmax.xlane.f32.xlu0 %v859
  %v861 = vpop.xlane.xlu0 %860
  %v862 = vsub.f32 %v846, %v852
  %v863 = vsub.f32 %v847, %v855
  %v864 = vsub.f32 %v848, %v858
  %v865 = vsub.f32 %v849, %v861
  %v866 = vmul.f32 %v862, 1.442695
  %v867 = vpow.pop %v866
  %v868 = vmul.f32 %v863, 1.442695
  %v869 = vpow.pop %v868
  %v870 = vmul.f32 %v864, 1.442695
  %v871 = vpow.pop %v870
  %v872 = vmul.f32 %v865, 1.442695
  %v873 = vpow.pop %v872
  %v874 = vsel %vm357, %v867, 0.0
  %875 = vadd.xlane.f32.xlu0 %v874
  %v876 = vpop.xlane.xlu0 %875
  %v877 = vsel %vm357, %v869, 0.0
  %878 = vadd.xlane.f32.xlu0 %v877
  %v879 = vpop.xlane.xlu0 %878
  %v880 = vsel %vm357, %v871, 0.0
  %881 = vadd.xlane.f32.xlu0 %v880
  %v882 = vpop.xlane.xlu0 %881
  %v883 = vsel %vm357, %v873, 0.0
  %884 = vadd.xlane.f32.xlu0 %v883
  %v885 = vpop.xlane.xlu0 %884
  %v886 = vrcp.pop %v876
  %v887 = vrcp.pop %v879
  %v888 = vrcp.pop %v882
  %v889 = vrcp.pop %v885
  %v890 = vmul.f32 %v867, %v886
  %v891 = vmul.f32 %v869, %v887
  %v892 = vmul.f32 %v871, %v888
  %v893 = vmul.f32 %v873, %v889
  %v894 = vpack.c.bf16 %v891, %v890
  %v895 = vpack.c.bf16 %v893, %v892
  %896 = vrot.lane.b32.xlu0 %v404, 96
  %v897 = vpop.permute.xlu0 %896
  %898 = vrot.lane.b32.xlu0 %v405, 96
  %v899 = vpop.permute.xlu0 %898
  %v903 = vsel %vm357, %v894, 0
  %v906 = vsel %vm357, %v895, 0
  %908 = vmatprep.subr.bf16.mxu0 0
  %909 = vmatpush1.bf16.msra.mxu0 %v897
  %910 = vmatprep.subr.bf16.mxu0 0
  %911 = vmatpush1.bf16.msra.mxu0 %v899
  %912 = vmatprep.subr.bf16.mxu0 0
  %913 = vmatpush1.bf16.msra.mxu0 0
  %914 = vmatprep.subr.bf16.mxu0 0
  %915 = vmatpush1.bf16.msra.mxu0 0
  %916 = vmatprep.subr.bf16.mxu0 0
  %917 = vmatpush1.bf16.msra.mxu0 0
  %918 = vmatprep.subr.bf16.mxu0 0
  %919 = vmatpush1.bf16.msra.mxu0 0
  %920 = vmatprep.subr.bf16.mxu0 0
  %921 = vmatpush1.bf16.msra.mxu0 0
  %922 = vmatprep.subr.bf16.mxu0 0
  %923 = vmatpush1.bf16.msra.mxu0 0
  %924 = vmatprep.subr.bf16.mxu0 0
  %925 = vmatpush1.bf16.msra.mxu0 0
  %926 = vmatprep.subr.bf16.mxu0 0
  %927 = vmatpush1.bf16.msra.mxu0 0
  %928 = vmatprep.subr.bf16.mxu0 0
  %929 = vmatpush1.bf16.msra.mxu0 0
  %930 = vmatprep.subr.bf16.mxu0 0
  %931 = vmatpush1.bf16.msra.mxu0 0
  %932 = vmatprep.subr.bf16.mxu0 0
  %933 = vmatpush1.bf16.msra.mxu0 0
  %934 = vmatprep.subr.bf16.mxu0 0
  %935 = vmatpush1.bf16.msra.mxu0 0
  %936 = vmatprep.subr.bf16.mxu0 0
  %937 = vmatpush1.bf16.msra.mxu0 0
  %938 = vmatprep.subr.bf16.mxu0 0
  %939 = vmatpush1.bf16.msra.mxu0 0
  %940 = vmatprep.mubr.bf16.mxu0 0
  %941 = vmatmul.mubr.bf16.gmra.mrb[0].mxu0 %v903
  %v942 = vpop.f32.mrb[0].mxu0
  %v943 = vadd.f32 0.0, %v942
  %v944 = vpop.f32.mrb[0].mxu0
  %v945 = vpop.f32.mrb[0].mxu0
  %v946 = vadd.f32 0.0, %v945
  %v947 = vpop.f32.mrb[0].mxu0
  %948 = vmatprep.mubr.bf16.mxu0 0
  %949 = vmatmul.mubr.bf16.gmra.mrb[0].mxu0 %v906
  %v950 = vpop.f32.mrb[0].mxu0
  %v951 = vadd.f32 0.0, %v950
  %v952 = vpop.f32.mrb[0].mxu0
  %v953 = vpop.f32.mrb[0].mxu0
  %v954 = vadd.f32 0.0, %v953
  %v955 = vpop.f32.mrb[0].mxu0
  %956 = vdwg.mxu0
  %v957 = vpack.c.bf16 %v946, %v943
  %v958 = vpack.c.bf16 %v954, %v951
  %v961 = vunpack.c.l.b16 %v275
  %v962 = vunpack.c.l.b16 %v276
  %v963 = vpack.c.b16 %v962, %v961
  %v966 = vsel %vm287, %v957, 0
  %v969 = vsel %vm287, %v958, 0
  %971 = vmatprep.subr.bf16.mxu0 0
  %972 = vmatpush1.bf16.msra.mxu0 %v963
  %973 = vmatprep.subr.bf16.mxu0 0
  %974 = vmatpush1.bf16.msra.mxu0 0
  %975 = vmatprep.subr.bf16.mxu0 0
  %976 = vmatpush1.bf16.msra.mxu0 0
  %977 = vmatprep.subr.bf16.mxu0 0
  %978 = vmatpush1.bf16.msra.mxu0 0
  %979 = vmatprep.subr.bf16.mxu0 0
  %980 = vmatpush1.bf16.msra.mxu0 0
  %981 = vmatprep.subr.bf16.mxu0 0
  %982 = vmatpush1.bf16.msra.mxu0 0
  %983 = vmatprep.subr.bf16.mxu0 0
  %984 = vmatpush1.bf16.msra.mxu0 0
  %985 = vmatprep.subr.bf16.mxu0 0
  %986 = vmatpush1.bf16.msra.mxu0 0
  %987 = vmatprep.subr.bf16.mxu0 0
  %988 = vmatpush1.bf16.msra.mxu0 0
  %989 = vmatprep.subr.bf16.mxu0 0
  %990 = vmatpush1.bf16.msra.mxu0 0
  %991 = vmatprep.subr.bf16.mxu0 0
  %992 = vmatpush1.bf16.msra.mxu0 0
  %993 = vmatprep.subr.bf16.mxu0 0
  %994 = vmatpush1.bf16.msra.mxu0 0
  %995 = vmatprep.subr.bf16.mxu0 0
  %996 = vmatpush1.bf16.msra.mxu0 0
  %997 = vmatprep.subr.bf16.mxu0 0
  %998 = vmatpush1.bf16.msra.mxu0 0
  %999 = vmatprep.subr.bf16.mxu0 0
  %1000 = vmatpush1.bf16.msra.mxu0 0
  %1001 = vmatprep.subr.bf16.mxu0 0
  %1002 = vmatpush1.bf16.msra.mxu0 0
  %1003 = vmatprep.mubr.bf16.mxu0 0
  %1004 = vmatmul.mubr.bf16.gmra.mrb[0].mxu0 %v966
  %v1005 = vpop.f32.mrb[0].mxu0
  %v1006 = vadd.f32 0.0, %v1005
  %v1007 = vpop.f32.mrb[0].mxu0
  %v1008 = vpop.f32.mrb[0].mxu0
  %v1009 = vadd.f32 0.0, %v1008
  %v1010 = vpop.f32.mrb[0].mxu0
  %1011 = vmatprep.mubr.bf16.mxu0 0
  %1012 = vmatmul.mubr.bf16.gmra.mrb[0].mxu0 %v969
  %v1013 = vpop.f32.mrb[0].mxu0
  %v1014 = vadd.f32 0.0, %v1013
  %v1015 = vpop.f32.mrb[0].mxu0
  %v1016 = vpop.f32.mrb[0].mxu0
  %v1017 = vadd.f32 0.0, %v1016
  %v1018 = vpop.f32.mrb[0].mxu0
  %1019 = vdwg.mxu0
  %v1020 = vadd.f32 %v759, %v1006
  %v1021 = vadd.f32 %v762, %v1009
  %v1022 = vadd.f32 %v767, %v1014
  %v1023 = vadd.f32 %v770, %v1017
  %1024 = vrot.lane.b32.xlu0 %v279, 80
  %v1025 = vpop.permute.xlu0 %1024
  %1026 = vrot.lane.b32.xlu0 %v280, 80
  %v1027 = vpop.permute.xlu0 %1026
  %1028 = vrot.lane.b32.xlu0 %v279, 16
  %v1029 = vpop.permute.xlu0 %1028
  %1030 = vrot.lane.b32.xlu0 %v280, 16
  %v1031 = vpop.permute.xlu0 %1030
  %v1033 = vsel %vm287, %v1025, 0
  %v1036 = vsel %vm287, %v1027, 0
  %v1039 = vsel %vm287, %v1029, 0
  %v1042 = vsel %vm287, %v1031, 0
  %1044 = vmatprep.subr.bf16.mxu0 0
  %1045 = vmatpush1.bf16.xpose.msra.mxu0 %v1039
  %1046 = vmatprep.subr.bf16.mxu0 0
  %1047 = vmatpush1.bf16.xpose.msra.mxu0 %v1042
  %1048 = vmatprep.subr.bf16.mxu0 0
  %1049 = vmatpush1.bf16.xpose.msra.mxu0 0
  %1050 = vmatprep.subr.bf16.mxu0 0
  %1051 = vmatpush1.bf16.xpose.msra.mxu0 0
  %1052 = vmatprep.subr.bf16.mxu0 0
  %1053 = vmatpush1.bf16.xpose.msra.mxu0 0
  %1054 = vmatprep.subr.bf16.mxu0 0
  %1055 = vmatpush1.bf16.xpose.msra.mxu0 0
  %1056 = vmatprep.subr.bf16.mxu0 0
  %1057 = vmatpush1.bf16.xpose.msra.mxu0 0
  %1058 = vmatprep.subr.bf16.mxu0 0
  %1059 = vmatpush1.bf16.xpose.msra.mxu0 0
  %1060 = vmatprep.subr.bf16.mxu0 0
  %1061 = vmatpush1.bf16.xpose.msra.mxu0 0
  %1062 = vmatprep.subr.bf16.mxu0 0
  %1063 = vmatpush1.bf16.xpose.msra.mxu0 0
  %1064 = vmatprep.subr.bf16.mxu0 0
  %1065 = vmatpush1.bf16.xpose.msra.mxu0 0
  %1066 = vmatprep.subr.bf16.mxu0 0
  %1067 = vmatpush1.bf16.xpose.msra.mxu0 0
  %1068 = vmatprep.subr.bf16.mxu0 0
  %1069 = vmatpush1.bf16.xpose.msra.mxu0 0
  %1070 = vmatprep.subr.bf16.mxu0 0
  %1071 = vmatpush1.bf16.xpose.msra.mxu0 0
  %1072 = vmatprep.subr.bf16.mxu0 0
  %1073 = vmatpush1.bf16.xpose.msra.mxu0 0
  %1074 = vmatprep.subr.bf16.mxu0 0
  %1075 = vmatpush1.bf16.xpose.msra.mxu0 0
  %1076 = vmatprep.mubr.bf16.mxu0 0
  %1077 = vmatmul.mubr.bf16.gmra.mrb[0].mxu0 %v1033
  %v1078 = vpop.f32.mrb[0].mxu0
  %v1079 = vadd.f32 0.0, %v1078
  %v1080 = vpop.f32.mrb[0].mxu0
  %v1081 = vpop.f32.mrb[0].mxu0
  %v1082 = vadd.f32 0.0, %v1081
  %v1083 = vpop.f32.mrb[0].mxu0
  %1084 = vmatprep.mubr.bf16.mxu0 0
  %1085 = vmatmul.mubr.bf16.gmra.mrb[0].mxu0 %v1036
  %v1086 = vpop.f32.mrb[0].mxu0
  %v1087 = vadd.f32 0.0, %v1086
  %v1088 = vpop.f32.mrb[0].mxu0
  %v1089 = vpop.f32.mrb[0].mxu0
  %v1090 = vadd.f32 0.0, %v1089
  %v1091 = vpop.f32.mrb[0].mxu0
  %1092 = vdwg.mxu0
  %v1093 = vmul.f32 %v1079, 0.25
  %v1094 = vmul.f32 %v1082, 0.25
  %v1095 = vmul.f32 %v1087, 0.25
  %v1096 = vmul.f32 %v1090, 0.25
  %v1097 = vadd.f32 %v1093, %v66
  %v1098 = vadd.f32 %v1094, %v67
  %v1099 = vadd.f32 %v1095, %v68
  %v1100 = vadd.f32 %v1096, %v69
  %v1101 = vsel %vm357, %v1097, -inf
  %1102 = vmax.xlane.f32.xlu0 %v1101
  %v1103 = vpop.xlane.xlu0 %1102
  %v1104 = vsel %vm357, %v1098, -inf
  %1105 = vmax.xlane.f32.xlu0 %v1104
  %v1106 = vpop.xlane.xlu0 %1105
  %v1107 = vsel %vm357, %v1099, -inf
  %1108 = vmax.xlane.f32.xlu0 %v1107
  %v1109 = vpop.xlane.xlu0 %1108
  %v1110 = vsel %vm357, %v1100, -inf
  %1111 = vmax.xlane.f32.xlu0 %v1110
  %v1112 = vpop.xlane.xlu0 %1111
  %v1113 = vsub.f32 %v1097, %v1103
  %v1114 = vsub.f32 %v1098, %v1106
  %v1115 = vsub.f32 %v1099, %v1109
  %v1116 = vsub.f32 %v1100, %v1112
  %v1117 = vmul.f32 %v1113, 1.442695
  %v1118 = vpow.pop %v1117
  %v1119 = vmul.f32 %v1114, 1.442695
  %v1120 = vpow.pop %v1119
  %v1121 = vmul.f32 %v1115, 1.442695
  %v1122 = vpow.pop %v1121
  %v1123 = vmul.f32 %v1116, 1.442695
  %v1124 = vpow.pop %v1123
  %v1125 = vsel %vm357, %v1118, 0.0
  %1126 = vadd.xlane.f32.xlu0 %v1125
  %v1127 = vpop.xlane.xlu0 %1126
  %v1128 = vsel %vm357, %v1120, 0.0
  %1129 = vadd.xlane.f32.xlu0 %v1128
  %v1130 = vpop.xlane.xlu0 %1129
  %v1131 = vsel %vm357, %v1122, 0.0
  %1132 = vadd.xlane.f32.xlu0 %v1131
  %v1133 = vpop.xlane.xlu0 %1132
  %v1134 = vsel %vm357, %v1124, 0.0
  %1135 = vadd.xlane.f32.xlu0 %v1134
  %v1136 = vpop.xlane.xlu0 %1135
  %v1137 = vrcp.pop %v1127
  %v1138 = vrcp.pop %v1130
  %v1139 = vrcp.pop %v1133
  %v1140 = vrcp.pop %v1136
  %v1141 = vmul.f32 %v1118, %v1137
  %v1142 = vmul.f32 %v1120, %v1138
  %v1143 = vmul.f32 %v1122, %v1139
  %v1144 = vmul.f32 %v1124, %v1140
  %v1145 = vpack.c.bf16 %v1142, %v1141
  %v1146 = vpack.c.bf16 %v1144, %v1143
  %1147 = vrot.lane.b32.xlu0 %v404, 80
  %v1148 = vpop.permute.xlu0 %1147
  %1149 = vrot.lane.b32.xlu0 %v405, 80
  %v1150 = vpop.permute.xlu0 %1149
  %v1154 = vsel %vm357, %v1145, 0
  %v1157 = vsel %vm357, %v1146, 0
  %1159 = vmatprep.subr.bf16.mxu0 0
  %1160 = vmatpush1.bf16.msra.mxu0 %v1148
  %1161 = vmatprep.subr.bf16.mxu0 0
  %1162 = vmatpush1.bf16.msra.mxu0 %v1150
  %1163 = vmatprep.subr.bf16.mxu0 0
  %1164 = vmatpush1.bf16.msra.mxu0 0
  %1165 = vmatprep.subr.bf16.mxu0 0
  %1166 = vmatpush1.bf16.msra.mxu0 0
  %1167 = vmatprep.subr.bf16.mxu0 0
  %1168 = vmatpush1.bf16.msra.mxu0 0
  %1169 = vmatprep.subr.bf16.mxu0 0
  %1170 = vmatpush1.bf16.msra.mxu0 0
  %1171 = vmatprep.subr.bf16.mxu0 0
  %1172 = vmatpush1.bf16.msra.mxu0 0
  %1173 = vmatprep.subr.bf16.mxu0 0
  %1174 = vmatpush1.bf16.msra.mxu0 0
  %1175 = vmatprep.subr.bf16.mxu0 0
  %1176 = vmatpush1.bf16.msra.mxu0 0
  %1177 = vmatprep.subr.bf16.mxu0 0
  %1178 = vmatpush1.bf16.msra.mxu0 0
  %1179 = vmatprep.subr.bf16.mxu0 0
  %1180 = vmatpush1.bf16.msra.mxu0 0
  %1181 = vmatprep.subr.bf16.mxu0 0
  %1182 = vmatpush1.bf16.msra.mxu0 0
  %1183 = vmatprep.subr.bf16.mxu0 0
  %1184 = vmatpush1.bf16.msra.mxu0 0
  %1185 = vmatprep.subr.bf16.mxu0 0
  %1186 = vmatpush1.bf16.msra.mxu0 0
  %1187 = vmatprep.subr.bf16.mxu0 0
  %1188 = vmatpush1.bf16.msra.mxu0 0
  %1189 = vmatprep.subr.bf16.mxu0 0
  %1190 = vmatpush1.bf16.msra.mxu0 0
  %1191 = vmatprep.mubr.bf16.mxu0 0
  %1192 = vmatmul.mubr.bf16.gmra.mrb[0].mxu0 %v1154
  %v1193 = vpop.f32.mrb[0].mxu0
  %v1194 = vadd.f32 0.0, %v1193
  %v1195 = vpop.f32.mrb[0].mxu0
  %v1196 = vpop.f32.mrb[0].mxu0
  %v1197 = vadd.f32 0.0, %v1196
  %v1198 = vpop.f32.mrb[0].mxu0
  %1199 = vmatprep.mubr.bf16.mxu0 0
  %1200 = vmatmul.mubr.bf16.gmra.mrb[0].mxu0 %v1157
  %v1201 = vpop.f32.mrb[0].mxu0
  %v1202 = vadd.f32 0.0, %v1201
  %v1203 = vpop.f32.mrb[0].mxu0
  %v1204 = vpop.f32.mrb[0].mxu0
  %v1205 = vadd.f32 0.0, %v1204
  %v1206 = vpop.f32.mrb[0].mxu0
  %1207 = vdwg.mxu0
  %v1208 = vpack.c.bf16 %v1197, %v1194
  %v1209 = vpack.c.bf16 %v1205, %v1202
  %v1212 = vunpack.c.l.b16 %v277
  %v1213 = vunpack.c.l.b16 %v278
  %v1214 = vpack.c.b16 %v1213, %v1212
  %v1217 = vsel %vm287, %v1208, 0
  %v1220 = vsel %vm287, %v1209, 0
  %1222 = vmatprep.subr.bf16.mxu0 0
  %1223 = vmatpush1.bf16.msra.mxu0 %v1214
  %1224 = vmatprep.subr.bf16.mxu0 0
  %1225 = vmatpush1.bf16.msra.mxu0 0
  %1226 = vmatprep.subr.bf16.mxu0 0
  %1227 = vmatpush1.bf16.msra.mxu0 0
  %1228 = vmatprep.subr.bf16.mxu0 0
  %1229 = vmatpush1.bf16.msra.mxu0 0
  %1230 = vmatprep.subr.bf16.mxu0 0
  %1231 = vmatpush1.bf16.msra.mxu0 0
  %1232 = vmatprep.subr.bf16.mxu0 0
  %1233 = vmatpush1.bf16.msra.mxu0 0
  %1234 = vmatprep.subr.bf16.mxu0 0
  %1235 = vmatpush1.bf16.msra.mxu0 0
  %1236 = vmatprep.subr.bf16.mxu0 0
  %1237 = vmatpush1.bf16.msra.mxu0 0
  %1238 = vmatprep.subr.bf16.mxu0 0
  %1239 = vmatpush1.bf16.msra.mxu0 0
  %1240 = vmatprep.subr.bf16.mxu0 0
  %1241 = vmatpush1.bf16.msra.mxu0 0
  %1242 = vmatprep.subr.bf16.mxu0 0
  %1243 = vmatpush1.bf16.msra.mxu0 0
  %1244 = vmatprep.subr.bf16.mxu0 0
  %1245 = vmatpush1.bf16.msra.mxu0 0
  %1246 = vmatprep.subr.bf16.mxu0 0
  %1247 = vmatpush1.bf16.msra.mxu0 0
  %1248 = vmatprep.subr.bf16.mxu0 0
  %1249 = vmatpush1.bf16.msra.mxu0 0
  %1250 = vmatprep.subr.bf16.mxu0 0
  %1251 = vmatpush1.bf16.msra.mxu0 0
  %1252 = vmatprep.subr.bf16.mxu0 0
  %1253 = vmatpush1.bf16.msra.mxu0 0
  %1254 = vmatprep.mubr.bf16.mxu0 0
  %1255 = vmatmul.mubr.bf16.gmra.mrb[0].mxu0 %v1217
  %v1256 = vpop.f32.mrb[0].mxu0
  %v1257 = vadd.f32 0.0, %v1256
  %v1258 = vpop.f32.mrb[0].mxu0
  %v1259 = vpop.f32.mrb[0].mxu0
  %v1260 = vadd.f32 0.0, %v1259
  %v1261 = vpop.f32.mrb[0].mxu0
  %1262 = vmatprep.mubr.bf16.mxu0 0
  %1263 = vmatmul.mubr.bf16.gmra.mrb[0].mxu0 %v1220
  %v1264 = vpop.f32.mrb[0].mxu0
  %v1265 = vadd.f32 0.0, %v1264
  %v1266 = vpop.f32.mrb[0].mxu0
  %v1267 = vpop.f32.mrb[0].mxu0
  %v1268 = vadd.f32 0.0, %v1267
  %v1269 = vpop.f32.mrb[0].mxu0
  %1270 = vdwg.mxu0
  %v1271 = vadd.f32 %v1020, %v1257
  %v1272 = vadd.f32 %v1021, %v1260
  %v1273 = vadd.f32 %v1022, %v1265
  %v1274 = vadd.f32 %v1023, %v1268
  %v1275 = vld [vmem:[%s7] sm:$0x1]
  %v1277 = vlaneseq
  %v1278 = vshrl.u32 %v1277, 7
  %v1279 = vsub.s32 0, %v1278
  %v1280 = vrot.slane %v1275, %v1279
  %v1282 = vadd.f32 %v1271, %v1280
  %v1283 = vadd.f32 %v1272, %v1280
  %v1284 = vadd.f32 %v1273, %v1280
  %v1285 = vadd.f32 %v1274, %v1280
  %v1286 = vadd.f32 %v1282, %v146
  %v1287 = vadd.f32 %v1283, %v147
  %v1288 = vadd.f32 %v1284, %v148
  %v1289 = vadd.f32 %v1285, %v149
  %v1290 = vld [vmem:[%s8] sm:$0x1]
  %v1291 = vld [vmem:[%s9] sm:$0x1]
  %v1292 = vsel %vm76, %v1286, 0.0
  %1293 = vadd.xlane.f32.xlu0 %v1292
  %v1294 = vpop.xlane.xlu0 %1293
  %v1295 = vsel %vm76, %v1287, 0.0
  %1296 = vadd.xlane.f32.xlu0 %v1295
  %v1297 = vpop.xlane.xlu0 %1296
  %v1298 = vsel %vm76, %v1288, 0.0
  %1299 = vadd.xlane.f32.xlu0 %v1298
  %v1300 = vpop.xlane.xlu0 %1299
  %v1301 = vsel %vm76, %v1289, 0.0
  %1302 = vadd.xlane.f32.xlu0 %v1301
  %v1303 = vpop.xlane.xlu0 %1302
  %v1304 = vmul.f32 %v1294, %v89
  %v1305 = vmul.f32 %v1297, %v89
  %v1306 = vmul.f32 %v1300, %v89
  %v1307 = vmul.f32 %v1303, %v89
  %v1308 = vsub.f32 %v1286, %v1304
  %v1309 = vsub.f32 %v1287, %v1305
  %v1310 = vsub.f32 %v1288, %v1306
  %v1311 = vsub.f32 %v1289, %v1307
  %v1312 = vmul.f32 %v1308, %v1308
  %v1313 = vmul.f32 %v1309, %v1309
  %v1314 = vmul.f32 %v1310, %v1310
  %v1315 = vmul.f32 %v1311, %v1311
  %v1316 = vsel %vm76, %v1312, 0.0
  %1317 = vadd.xlane.f32.xlu0 %v1316
  %v1318 = vpop.xlane.xlu0 %1317
  %v1319 = vsel %vm76, %v1313, 0.0
  %1320 = vadd.xlane.f32.xlu0 %v1319
  %v1321 = vpop.xlane.xlu0 %1320
  %v1322 = vsel %vm76, %v1314, 0.0
  %1323 = vadd.xlane.f32.xlu0 %v1322
  %v1324 = vpop.xlane.xlu0 %1323
  %v1325 = vsel %vm76, %v1315, 0.0
  %1326 = vadd.xlane.f32.xlu0 %v1325
  %v1327 = vpop.xlane.xlu0 %1326
  %v1328 = vmul.f32 %v1318, %v89
  %v1329 = vmul.f32 %v1321, %v89
  %v1330 = vmul.f32 %v1324, %v89
  %v1331 = vmul.f32 %v1327, %v89
  %v1332 = vadd.f32 %v1328, 1e-07
  %v1333 = vadd.f32 %v1329, 1e-07
  %v1334 = vadd.f32 %v1330, 1e-07
  %v1335 = vadd.f32 %v1331, 1e-07
  %v1336 = vrsqrt.pop %v1332
  %v1337 = vrsqrt.pop %v1333
  %v1338 = vrsqrt.pop %v1334
  %v1339 = vrsqrt.pop %v1335
  %v1340 = vmul.f32 %v1308, %v1336
  %v1341 = vmul.f32 %v1309, %v1337
  %v1342 = vmul.f32 %v1310, %v1338
  %v1343 = vmul.f32 %v1311, %v1339
  %v1345 = vlaneseq
  %v1346 = vshrl.u32 %v1345, 7
  %v1347 = vsub.s32 0, %v1346
  %v1348 = vrot.slane %v1290, %v1347
  %v1350 = vmul.f32 %v1340, %v1348
  %v1351 = vmul.f32 %v1341, %v1348
  %v1352 = vmul.f32 %v1342, %v1348
  %v1353 = vmul.f32 %v1343, %v1348
  %v1355 = vlaneseq
  %v1356 = vshrl.u32 %v1355, 7
  %v1357 = vsub.s32 0, %v1356
  %v1358 = vrot.slane %v1291, %v1357
  %v1360 = vadd.f32 %v1350, %v1358
  %v1361 = vadd.f32 %v1351, %v1358
  %v1362 = vadd.f32 %v1352, %v1358
  %v1363 = vadd.f32 %v1353, %v1358
  %v1364 = vld [vmem:[%s10] sm:$0xf]
  %v1365 = vld [vmem:[%s10 + $0x4] sm:$0xf]
  %v1366 = vld [vmem:[%s10 + $0x8] sm:$0xf]
  %v1367 = vld [vmem:[%s10 + $0xc] sm:$0xf]
  %v1368 = vld [vmem:[%s10 + $0x10] sm:$0xf]
  %v1369 = vld [vmem:[%s10 + $0x14] sm:$0xf]
  %v1370 = vld [vmem:[%s10 + $0x18] sm:$0xf]
  %v1371 = vld [vmem:[%s10 + $0x1c] sm:$0xf]
  %v1372 = vpack.c.bf16 %v1361, %v1360
  %v1373 = vpack.c.bf16 %v1363, %v1362
  %v1374 = vld [vmem:[%s11] sm:$0x1]
  %v1376 = vlaneseq
  %v1377 = vshrl.u32 %v1376, 7
  %v1378 = vsub.s32 0, %v1377
  %v1379 = vrot.slane %v1374, %v1378
  %v1389 = vunpack.c.l.b16 %v1364
  %v1390 = vunpack.c.l.b16 %v1365
  %v1391 = vunpack.c.l.b16 %v1366
  %v1392 = vunpack.c.l.b16 %v1367
  %v1393 = vunpack.c.l.b16 %v1368
  %v1394 = vunpack.c.l.b16 %v1369
  %v1395 = vunpack.c.l.b16 %v1370
  %v1396 = vunpack.c.l.b16 %v1371
  %v1397 = vpack.c.b16 %v1390, %v1389
  %v1398 = vpack.c.b16 %v1392, %v1391
  %v1399 = vpack.c.b16 %v1394, %v1393
  %v1400 = vpack.c.b16 %v1396, %v1395
  %v1406 = vsel %vm76, %v1372, 0
  %v1409 = vsel %vm76, %v1373, 0
  %1411 = vmatprep.subr.bf16.mxu0 0
  %1412 = vmatpush1.bf16.msra.mxu0 %v1397
  %1413 = vmatprep.subr.bf16.mxu0 0
  %1414 = vmatpush1.bf16.msra.mxu0 %v1398
  %1415 = vmatprep.subr.bf16.mxu0 0
  %1416 = vmatpush1.bf16.msra.mxu0 %v1399
  %1417 = vmatprep.subr.bf16.mxu0 0
  %1418 = vmatpush1.bf16.msra.mxu0 %v1400
  %1419 = vmatprep.subr.bf16.mxu0 0
  %1420 = vmatpush1.bf16.msra.mxu0 0
  %1421 = vmatprep.subr.bf16.mxu0 0
  %1422 = vmatpush1.bf16.msra.mxu0 0
  %1423 = vmatprep.subr.bf16.mxu0 0
  %1424 = vmatpush1.bf16.msra.mxu0 0
  %1425 = vmatprep.subr.bf16.mxu0 0
  %1426 = vmatpush1.bf16.msra.mxu0 0
  %1427 = vmatprep.subr.bf16.mxu0 0
  %1428 = vmatpush1.bf16.msra.mxu0 0
  %1429 = vmatprep.subr.bf16.mxu0 0
  %1430 = vmatpush1.bf16.msra.mxu0 0
  %1431 = vmatprep.subr.bf16.mxu0 0
  %1432 = vmatpush1.bf16.msra.mxu0 0
  %1433 = vmatprep.subr.bf16.mxu0 0
  %1434 = vmatpush1.bf16.msra.mxu0 0
  %1435 = vmatprep.subr.bf16.mxu0 0
  %1436 = vmatpush1.bf16.msra.mxu0 0
  %1437 = vmatprep.subr.bf16.mxu0 0
  %1438 = vmatpush1.bf16.msra.mxu0 0
  %1439 = vmatprep.subr.bf16.mxu0 0
  %1440 = vmatpush1.bf16.msra.mxu0 0
  %1441 = vmatprep.subr.bf16.mxu0 0
  %1442 = vmatpush1.bf16.msra.mxu0 0
  %1443 = vmatprep.mubr.bf16.mxu0 0
  %1444 = vmatmul.mubr.bf16.gmra.mrb[0].mxu0 %v1406
  %v1445 = vpop.f32.mrb[0].mxu0
  %v1446 = vadd.f32 %v1379, %v1445
  %v1447 = vpop.f32.mrb[0].mxu0
  %v1448 = vpop.f32.mrb[0].mxu0
  %v1449 = vadd.f32 %v1379, %v1448
  %v1450 = vpop.f32.mrb[0].mxu0
  %1451 = vmatprep.mubr.bf16.mxu0 0
  %1452 = vmatmul.mubr.bf16.gmra.mrb[0].mxu0 %v1409
  %v1453 = vpop.f32.mrb[0].mxu0
  %v1454 = vadd.f32 %v1379, %v1453
  %v1455 = vpop.f32.mrb[0].mxu0
  %v1456 = vpop.f32.mrb[0].mxu0
  %v1457 = vadd.f32 %v1379, %v1456
  %v1458 = vpop.f32.mrb[0].mxu0
  %1459 = vdwg.mxu0
  %v1460 = vmul.f32 %v1446, %v1446
  %v1461 = vmul.f32 %v1449, %v1449
  %v1462 = vmul.f32 %v1454, %v1454
  %v1463 = vmul.f32 %v1457, %v1457
  %v1464 = vmul.f32 %v1446, %v1460
  %v1465 = vmul.f32 %v1449, %v1461
  %v1466 = vmul.f32 %v1454, %v1462
  %v1467 = vmul.f32 %v1457, %v1463
  %v1468 = vmul.f32 %v1464, 0.044715
  %v1469 = vmul.f32 %v1465, 0.044715
  %v1470 = vmul.f32 %v1466, 0.044715
  %v1471 = vmul.f32 %v1467, 0.044715
  %v1472 = vadd.f32 %v1446, %v1468
  %v1473 = vadd.f32 %v1449, %v1469
  %v1474 = vadd.f32 %v1454, %v1470
  %v1475 = vadd.f32 %v1457, %v1471
  %v1476 = vmul.f32 %v1472, 0.7978846
  %v1477 = vmul.f32 %v1473, 0.7978846
  %v1478 = vmul.f32 %v1474, 0.7978846
  %v1479 = vmul.f32 %v1475, 0.7978846
  %v1480 = vtanh.pop %v1476
  %v1481 = vtanh.pop %v1477
  %v1482 = vtanh.pop %v1478
  %v1483 = vtanh.pop %v1479
  %v1484 = vadd.f32 %v1480, 1.0
  %v1485 = vadd.f32 %v1481, 1.0
  %v1486 = vadd.f32 %v1482, 1.0
  %v1487 = vadd.f32 %v1483, 1.0
  %v1488 = vmul.f32 %v1484, 0.5
  %v1489 = vmul.f32 %v1485, 0.5
  %v1490 = vmul.f32 %v1486, 0.5
  %v1491 = vmul.f32 %v1487, 0.5
  %v1492 = vmul.f32 %v1446, %v1488
  %v1493 = vmul.f32 %v1449, %v1489
  %v1494 = vmul.f32 %v1454, %v1490
  %v1495 = vmul.f32 %v1457, %v1491
  %v1496 = vld [vmem:[%s12] sm:$0xf]
  %v1497 = vld [vmem:[%s12 + $0x4] sm:$0xf]
  %v1498 = vld [vmem:[%s12 + $0x8] sm:$0xf]
  %v1499 = vld [vmem:[%s12 + $0xc] sm:$0xf]
  %v1500 = vld [vmem:[%s12 + $0x10] sm:$0xf]
  %v1501 = vld [vmem:[%s12 + $0x14] sm:$0xf]
  %v1502 = vld [vmem:[%s12 + $0x18] sm:$0xf]
  %v1503 = vld [vmem:[%s12 + $0x1c] sm:$0xf]
  %v1504 = vld [vmem:[%s12 + $0x20] sm:$0xf]
  %v1505 = vld [vmem:[%s12 + $0x24] sm:$0xf]
  %v1506 = vld [vmem:[%s12 + $0x28] sm:$0xf]
  %v1507 = vld [vmem:[%s12 + $0x2c] sm:$0xf]
  %v1508 = vld [vmem:[%s12 + $0x30] sm:$0xf]
  %v1509 = vld [vmem:[%s12 + $0x34] sm:$0xf]
  %v1510 = vld [vmem:[%s12 + $0x38] sm:$0xf]
  %v1511 = vld [vmem:[%s12 + $0x3c] sm:$0xf]
  %v1512 = vpack.c.bf16 %v1493, %v1492
  %v1513 = vpack.c.bf16 %v1495, %v1494
  %v1514 = vld [vmem:[%s13] sm:$0x1]
  %v1516 = vlaneseq
  %v1517 = vshrl.u32 %v1516, 7
  %v1518 = vsub.s32 0, %v1517
  %v1519 = vrot.slane %v1514, %v1518
  %v1537 = vunpack.c.l.b16 %v1496
  %v1538 = vunpack.c.l.b16 %v1497
  %v1539 = vunpack.c.l.b16 %v1498
  %v1540 = vunpack.c.l.b16 %v1499
  %v1541 = vunpack.c.l.b16 %v1500
  %v1542 = vunpack.c.l.b16 %v1501
  %v1543 = vunpack.c.l.b16 %v1502
  %v1544 = vunpack.c.l.b16 %v1503
  %v1545 = vunpack.c.l.b16 %v1504
  %v1546 = vunpack.c.l.b16 %v1505
  %v1547 = vunpack.c.l.b16 %v1506
  %v1548 = vunpack.c.l.b16 %v1507
  %v1549 = vunpack.c.l.b16 %v1508
  %v1550 = vunpack.c.l.b16 %v1509
  %v1551 = vunpack.c.l.b16 %v1510
  %v1552 = vunpack.c.l.b16 %v1511
  %v1553 = vpack.c.b16 %v1538, %v1537
  %v1554 = vpack.c.b16 %v1540, %v1539
  %v1555 = vpack.c.b16 %v1542, %v1541
  %v1556 = vpack.c.b16 %v1544, %v1543
  %v1557 = vpack.c.b16 %v1546, %v1545
  %v1558 = vpack.c.b16 %v1548, %v1547
  %v1559 = vpack.c.b16 %v1550, %v1549
  %v1560 = vpack.c.b16 %v1552, %v1551
  %1569 = vmatprep.subr.bf16.mxu0 0
  %1570 = vmatpush1.bf16.msra.mxu0 %v1553
  %1571 = vmatprep.subr.bf16.mxu0 0
  %1572 = vmatpush1.bf16.msra.mxu0 %v1554
  %1573 = vmatprep.subr.bf16.mxu0 0
  %1574 = vmatpush1.bf16.msra.mxu0 %v1555
  %1575 = vmatprep.subr.bf16.mxu0 0
  %1576 = vmatpush1.bf16.msra.mxu0 %v1556
  %1577 = vmatprep.subr.bf16.mxu0 0
  %1578 = vmatpush1.bf16.msra.mxu0 %v1557
  %1579 = vmatprep.subr.bf16.mxu0 0
  %1580 = vmatpush1.bf16.msra.mxu0 %v1558
  %1581 = vmatprep.subr.bf16.mxu0 0
  %1582 = vmatpush1.bf16.msra.mxu0 %v1559
  %1583 = vmatprep.subr.bf16.mxu0 0
  %1584 = vmatpush1.bf16.msra.mxu0 %v1560
  %1585 = vmatprep.subr.bf16.mxu0 0
  %1586 = vmatpush1.bf16.msra.mxu0 0
  %1587 = vmatprep.subr.bf16.mxu0 0
  %1588 = vmatpush1.bf16.msra.mxu0 0
  %1589 = vmatprep.subr.bf16.mxu0 0
  %1590 = vmatpush1.bf16.msra.mxu0 0
  %1591 = vmatprep.subr.bf16.mxu0 0
  %1592 = vmatpush1.bf16.msra.mxu0 0
  %1593 = vmatprep.subr.bf16.mxu0 0
  %1594 = vmatpush1.bf16.msra.mxu0 0
  %1595 = vmatprep.subr.bf16.mxu0 0
  %1596 = vmatpush1.bf16.msra.mxu0 0
  %1597 = vmatprep.subr.bf16.mxu0 0
  %1598 = vmatpush1.bf16.msra.mxu0 0
  %1599 = vmatprep.subr.bf16.mxu0 0
  %1600 = vmatpush1.bf16.msra.mxu0 0
  %1601 = vmatprep.mubr.bf16.mxu0 0
  %1602 = vmatmul.mubr.bf16.gmra.mrb[0].mxu0 %v1512
  %v1603 = vpop.f32.mrb[0].mxu0
  %v1604 = vadd.f32 %v1519, %v1603
  %v1605 = vpop.f32.mrb[0].mxu0
  %v1606 = vpop.f32.mrb[0].mxu0
  %v1607 = vadd.f32 %v1519, %v1606
  %v1608 = vpop.f32.mrb[0].mxu0
  %1609 = vmatprep.mubr.bf16.mxu0 0
  %1610 = vmatmul.mubr.bf16.gmra.mrb[0].mxu0 %v1513
  %v1611 = vpop.f32.mrb[0].mxu0
  %v1612 = vadd.f32 %v1519, %v1611
  %v1613 = vpop.f32.mrb[0].mxu0
  %v1614 = vpop.f32.mrb[0].mxu0
  %v1615 = vadd.f32 %v1519, %v1614
  %v1616 = vpop.f32.mrb[0].mxu0
  %1617 = vdwg.mxu0
  %v1618 = vadd.f32 %v1604, %v1360
  %v1619 = vadd.f32 %v1607, %v1361
  %v1620 = vadd.f32 %v1612, %v1362
  %v1621 = vadd.f32 %v1615, %v1363
  %v1622 = vld [vmem:[%s14] sm:$0x1]
  %v1623 = vld [vmem:[%s15] sm:$0x1]
  %v1624 = vsel %vm76, %v1618, 0.0
  %1625 = vadd.xlane.f32.xlu0 %v1624
  %v1626 = vpop.xlane.xlu0 %1625
  %v1627 = vsel %vm76, %v1619, 0.0
  %1628 = vadd.xlane.f32.xlu0 %v1627
  %v1629 = vpop.xlane.xlu0 %1628
  %v1630 = vsel %vm76, %v1620, 0.0
  %1631 = vadd.xlane.f32.xlu0 %v1630
  %v1632 = vpop.xlane.xlu0 %1631
  %v1633 = vsel %vm76, %v1621, 0.0
  %1634 = vadd.xlane.f32.xlu0 %v1633
  %v1635 = vpop.xlane.xlu0 %1634
  %v1636 = vmul.f32 %v1626, %v89
  %v1637 = vmul.f32 %v1629, %v89
  %v1638 = vmul.f32 %v1632, %v89
  %v1639 = vmul.f32 %v1635, %v89
  %v1640 = vsub.f32 %v1618, %v1636
  %v1641 = vsub.f32 %v1619, %v1637
  %v1642 = vsub.f32 %v1620, %v1638
  %v1643 = vsub.f32 %v1621, %v1639
  %v1644 = vmul.f32 %v1640, %v1640
  %v1645 = vmul.f32 %v1641, %v1641
  %v1646 = vmul.f32 %v1642, %v1642
  %v1647 = vmul.f32 %v1643, %v1643
  %v1648 = vsel %vm76, %v1644, 0.0
  %1649 = vadd.xlane.f32.xlu0 %v1648
  %v1650 = vpop.xlane.xlu0 %1649
  %v1651 = vsel %vm76, %v1645, 0.0
  %1652 = vadd.xlane.f32.xlu0 %v1651
  %v1653 = vpop.xlane.xlu0 %1652
  %v1654 = vsel %vm76, %v1646, 0.0
  %1655 = vadd.xlane.f32.xlu0 %v1654
  %v1656 = vpop.xlane.xlu0 %1655
  %v1657 = vsel %vm76, %v1647, 0.0
  %1658 = vadd.xlane.f32.xlu0 %v1657
  %v1659 = vpop.xlane.xlu0 %1658
  %v1660 = vmul.f32 %v1650, %v89
  %v1661 = vmul.f32 %v1653, %v89
  %v1662 = vmul.f32 %v1656, %v89
  %v1663 = vmul.f32 %v1659, %v89
  %v1664 = vadd.f32 %v1660, 1e-07
  %v1665 = vadd.f32 %v1661, 1e-07
  %v1666 = vadd.f32 %v1662, 1e-07
  %v1667 = vadd.f32 %v1663, 1e-07
  %v1668 = vrsqrt.pop %v1664
  %v1669 = vrsqrt.pop %v1665
  %v1670 = vrsqrt.pop %v1666
  %v1671 = vrsqrt.pop %v1667
  %v1672 = vmul.f32 %v1640, %v1668
  %v1673 = vmul.f32 %v1641, %v1669
  %v1674 = vmul.f32 %v1642, %v1670
  %v1675 = vmul.f32 %v1643, %v1671
  %v1677 = vlaneseq
  %v1678 = vshrl.u32 %v1677, 7
  %v1679 = vsub.s32 0, %v1678
  %v1680 = vrot.slane %v1622, %v1679
  %v1682 = vmul.f32 %v1672, %v1680
  %v1683 = vmul.f32 %v1673, %v1680
  %v1684 = vmul.f32 %v1674, %v1680
  %v1685 = vmul.f32 %v1675, %v1680
  %v1687 = vlaneseq
  %v1688 = vshrl.u32 %v1687, 7
  %v1689 = vsub.s32 0, %v1688
  %v1690 = vrot.slane %v1623, %v1689
  %v1692 = vadd.f32 %v1682, %v1690
  %v1693 = vadd.f32 %v1683, %v1690
  %v1694 = vadd.f32 %v1684, %v1690
  %v1695 = vadd.f32 %v1685, %v1690
  %s1696 = scalar_lea.vmem %s4, 64
  %v1697 = vld [vmem:[%s1696] sm:$0xff]
  %v1698 = vld [vmem:[%s1696 + $0x8] sm:$0xff]
  %v1699 = vld [vmem:[%s1696 + $0x10] sm:$0xff]
  %v1700 = vld [vmem:[%s1696 + $0x18] sm:$0xff]
  %v1701 = vld [vmem:[%s1696 + $0x20] sm:$0xff]
  %v1702 = vld [vmem:[%s1696 + $0x28] sm:$0xff]
  %v1703 = vld [vmem:[%s1696 + $0x30] sm:$0xff]
  %v1704 = vld [vmem:[%s1696 + $0x38] sm:$0xff]
  %v1705 = vpack.c.bf16 %v1693, %v1692
  %v1706 = vpack.c.bf16 %v1695, %v1694
  %s1707 = scalar_lea.vmem %s5, 2
  %v1708 = vld [vmem:[%s1707] sm:$0x3]
  %v1710 = vlaneseq
  %v1711 = vshrl.u32 %v1710, 7
  %v1712 = vsub.s32 0, %v1711
  %v1713 = vrot.slane %v1708, %v1712
  %v1714 = vlaneseq
  %v1715 = vshrl.u32 %v1714, 7
  %v1716 = vsub.s32 1, %v1715
  %v1717 = vrot.slane %v1708, %v1716
  %v1728 = vunpack.c.l.b16 %v1697
  %v1729 = vunpack.c.h.b16 %v1697
  %v1730 = vunpack.c.l.b16 %v1698
  %v1731 = vunpack.c.h.b16 %v1698
  %v1732 = vunpack.c.l.b16 %v1699
  %v1733 = vunpack.c.h.b16 %v1699
  %v1734 = vunpack.c.l.b16 %v1700
  %v1735 = vunpack.c.h.b16 %v1700
  %v1736 = vunpack.c.l.b16 %v1701
  %v1737 = vunpack.c.h.b16 %v1701
  %v1738 = vunpack.c.l.b16 %v1702
  %v1739 = vunpack.c.h.b16 %v1702
  %v1740 = vunpack.c.l.b16 %v1703
  %v1741 = vunpack.c.h.b16 %v1703
  %v1742 = vunpack.c.l.b16 %v1704
  %v1743 = vunpack.c.h.b16 %v1704
  %v1744 = vpack.c.b16 %v1730, %v1728
  %v1745 = vpack.c.b16 %v1731, %v1729
  %v1746 = vpack.c.b16 %v1734, %v1732
  %v1747 = vpack.c.b16 %v1735, %v1733
  %v1748 = vpack.c.b16 %v1738, %v1736
  %v1749 = vpack.c.b16 %v1739, %v1737
  %v1750 = vpack.c.b16 %v1742, %v1740
  %v1751 = vpack.c.b16 %v1743, %v1741
  %v1761 = vsel %vm76, %v1705, 0
  %v1764 = vsel %vm76, %v1706, 0
  %1766 = vmatprep.subr.bf16.mxu0 %v1745
  %1767 = vmatpush1.bf16.msra.mxu0 %v1744
  %1768 = vmatprep.subr.bf16.mxu0 %v1747
  %1769 = vmatpush1.bf16.msra.mxu0 %v1746
  %1770 = vmatprep.subr.bf16.mxu0 %v1749
  %1771 = vmatpush1.bf16.msra.mxu0 %v1748
  %1772 = vmatprep.subr.bf16.mxu0 %v1751
  %1773 = vmatpush1.bf16.msra.mxu0 %v1750
  %1774 = vmatprep.subr.bf16.mxu0 0
  %1775 = vmatpush1.bf16.msra.mxu0 0
  %1776 = vmatprep.subr.bf16.mxu0 0
  %1777 = vmatpush1.bf16.msra.mxu0 0
  %1778 = vmatprep.subr.bf16.mxu0 0
  %1779 = vmatpush1.bf16.msra.mxu0 0
  %1780 = vmatprep.subr.bf16.mxu0 0
  %1781 = vmatpush1.bf16.msra.mxu0 0
  %1782 = vmatprep.subr.bf16.mxu0 0
  %1783 = vmatpush1.bf16.msra.mxu0 0
  %1784 = vmatprep.subr.bf16.mxu0 0
  %1785 = vmatpush1.bf16.msra.mxu0 0
  %1786 = vmatprep.subr.bf16.mxu0 0
  %1787 = vmatpush1.bf16.msra.mxu0 0
  %1788 = vmatprep.subr.bf16.mxu0 0
  %1789 = vmatpush1.bf16.msra.mxu0 0
  %1790 = vmatprep.subr.bf16.mxu0 0
  %1791 = vmatpush1.bf16.msra.mxu0 0
  %1792 = vmatprep.subr.bf16.mxu0 0
  %1793 = vmatpush1.bf16.msra.mxu0 0
  %1794 = vmatprep.subr.bf16.mxu0 0
  %1795 = vmatpush1.bf16.msra.mxu0 0
  %1796 = vmatprep.subr.bf16.mxu0 0
  %1797 = vmatpush1.bf16.msra.mxu0 0
  %1798 = vmatprep.mubr.bf16.mxu0 0
  %1799 = vmatmul.mubr.bf16.gmra.mrb[0].mxu0 %v1761
  %v1800 = vpop.f32.mrb[0].mxu0
  %v1801 = vadd.f32 %v1713, %v1800
  %v1802 = vpop.f32.mrb[0].mxu0
  %v1803 = vadd.f32 %v1717, %v1802
  %v1804 = vpop.f32.mrb[0].mxu0
  %v1805 = vadd.f32 %v1713, %v1804
  %v1806 = vpop.f32.mrb[0].mxu0
  %v1807 = vadd.f32 %v1717, %v1806
  %1808 = vmatprep.mubr.bf16.mxu0 0
  %1809 = vmatmul.mubr.bf16.gmra.mrb[0].mxu0 %v1764
  %v1810 = vpop.f32.mrb[0].mxu0
  %v1811 = vadd.f32 %v1713, %v1810
  %v1812 = vpop.f32.mrb[0].mxu0
  %v1813 = vadd.f32 %v1717, %v1812
  %v1814 = vpop.f32.mrb[0].mxu0
  %v1815 = vadd.f32 %v1713, %v1814
  %v1816 = vpop.f32.mrb[0].mxu0
  %v1817 = vadd.f32 %v1717, %v1816
  %1818 = vdwg.mxu0
  %s1819 = scalar_lea.vmem %s6, 32
  %v1820 = vld [vmem:[%s1819] sm:$0xf]
  %v1821 = vld [vmem:[%s1819 + $0x4] sm:$0xf]
  %v1822 = vld [vmem:[%s1819 + $0x8] sm:$0xf]
  %v1823 = vld [vmem:[%s1819 + $0xc] sm:$0xf]
  %v1824 = vld [vmem:[%s1819 + $0x10] sm:$0xf]
  %v1825 = vld [vmem:[%s1819 + $0x14] sm:$0xf]
  %v1826 = vld [vmem:[%s1819 + $0x18] sm:$0xf]
  %v1827 = vld [vmem:[%s1819 + $0x1c] sm:$0xf]
  %v1828 = vpack.c.bf16 %v1805, %v1801
  %v1829 = vpack.c.bf16 %v1815, %v1811
  %1832 = vrot.lane.b32.xlu0 %v1828, 64
  %v1833 = vpop.permute.xlu0 %1832
  %1834 = vrot.lane.b32.xlu0 %v1829, 64
  %v1835 = vpop.permute.xlu0 %1834
  %v1837 = vsel %vm287, %v1828, 0
  %v1840 = vsel %vm287, %v1829, 0
  %v1843 = vsel %vm287, %v1833, 0
  %v1846 = vsel %vm287, %v1835, 0
  %1848 = vmatprep.subr.bf16.mxu0 0
  %1849 = vmatpush1.bf16.xpose.msra.mxu0 %v1843
  %1850 = vmatprep.subr.bf16.mxu0 0
  %1851 = vmatpush1.bf16.xpose.msra.mxu0 %v1846
  %1852 = vmatprep.subr.bf16.mxu0 0
  %1853 = vmatpush1.bf16.xpose.msra.mxu0 0
  %1854 = vmatprep.subr.bf16.mxu0 0
  %1855 = vmatpush1.bf16.xpose.msra.mxu0 0
  %1856 = vmatprep.subr.bf16.mxu0 0
  %1857 = vmatpush1.bf16.xpose.msra.mxu0 0
  %1858 = vmatprep.subr.bf16.mxu0 0
  %1859 = vmatpush1.bf16.xpose.msra.mxu0 0
  %1860 = vmatprep.subr.bf16.mxu0 0
  %1861 = vmatpush1.bf16.xpose.msra.mxu0 0
  %1862 = vmatprep.subr.bf16.mxu0 0
  %1863 = vmatpush1.bf16.xpose.msra.mxu0 0
  %1864 = vmatprep.subr.bf16.mxu0 0
  %1865 = vmatpush1.bf16.xpose.msra.mxu0 0
  %1866 = vmatprep.subr.bf16.mxu0 0
  %1867 = vmatpush1.bf16.xpose.msra.mxu0 0
  %1868 = vmatprep.subr.bf16.mxu0 0
  %1869 = vmatpush1.bf16.xpose.msra.mxu0 0
  %1870 = vmatprep.subr.bf16.mxu0 0
  %1871 = vmatpush1.bf16.xpose.msra.mxu0 0
  %1872 = vmatprep.subr.bf16.mxu0 0
  %1873 = vmatpush1.bf16.xpose.msra.mxu0 0
  %1874 = vmatprep.subr.bf16.mxu0 0
  %1875 = vmatpush1.bf16.xpose.msra.mxu0 0
  %1876 = vmatprep.subr.bf16.mxu0 0
  %1877 = vmatpush1.bf16.xpose.msra.mxu0 0
  %1878 = vmatprep.subr.bf16.mxu0 0
  %1879 = vmatpush1.bf16.xpose.msra.mxu0 0
  %1880 = vmatprep.mubr.bf16.mxu0 0
  %1881 = vmatmul.mubr.bf16.gmra.mrb[0].mxu0 %v1837
  %v1882 = vpop.f32.mrb[0].mxu0
  %v1883 = vadd.f32 0.0, %v1882
  %v1884 = vpop.f32.mrb[0].mxu0
  %v1885 = vpop.f32.mrb[0].mxu0
  %v1886 = vadd.f32 0.0, %v1885
  %v1887 = vpop.f32.mrb[0].mxu0
  %1888 = vmatprep.mubr.bf16.mxu0 0
  %1889 = vmatmul.mubr.bf16.gmra.mrb[0].mxu0 %v1840
  %v1890 = vpop.f32.mrb[0].mxu0
  %v1891 = vadd.f32 0.0, %v1890
  %v1892 = vpop.f32.mrb[0].mxu0
  %v1893 = vpop.f32.mrb[0].mxu0
  %v1894 = vadd.f32 0.0, %v1893
  %v1895 = vpop.f32.mrb[0].mxu0
  %1896 = vdwg.mxu0
  %v1897 = vmul.f32 %v1883, 0.25
  %v1898 = vmul.f32 %v1886, 0.25
  %v1899 = vmul.f32 %v1891, 0.25
  %v1900 = vmul.f32 %v1894, 0.25
  %v1901 = vadd.f32 %v1897, %v66
  %v1902 = vadd.f32 %v1898, %v67
  %v1903 = vadd.f32 %v1899, %v68
  %v1904 = vadd.f32 %v1900, %v69
  %v1905 = vsel %vm357, %v1901, -inf
  %1906 = vmax.xlane.f32.xlu0 %v1905
  %v1907 = vpop.xlane.xlu0 %1906
  %v1908 = vsel %vm357, %v1902, -inf
  %1909 = vmax.xlane.f32.xlu0 %v1908
  %v1910 = vpop.xlane.xlu0 %1909
  %v1911 = vsel %vm357, %v1903, -inf
  %1912 = vmax.xlane.f32.xlu0 %v1911
  %v1913 = vpop.xlane.xlu0 %1912
  %v1914 = vsel %vm357, %v1904, -inf
  %1915 = vmax.xlane.f32.xlu0 %v1914
  %v1916 = vpop.xlane.xlu0 %1915
  %v1917 = vsub.f32 %v1901, %v1907
  %v1918 = vsub.f32 %v1902, %v1910
  %v1919 = vsub.f32 %v1903, %v1913
  %v1920 = vsub.f32 %v1904, %v1916
  %v1921 = vmul.f32 %v1917, 1.442695
  %v1922 = vpow.pop %v1921
  %v1923 = vmul.f32 %v1918, 1.442695
  %v1924 = vpow.pop %v1923
  %v1925 = vmul.f32 %v1919, 1.442695
  %v1926 = vpow.pop %v1925
  %v1927 = vmul.f32 %v1920, 1.442695
  %v1928 = vpow.pop %v1927
  %v1929 = vsel %vm357, %v1922, 0.0
  %1930 = vadd.xlane.f32.xlu0 %v1929
  %v1931 = vpop.xlane.xlu0 %1930
  %v1932 = vsel %vm357, %v1924, 0.0
  %1933 = vadd.xlane.f32.xlu0 %v1932
  %v1934 = vpop.xlane.xlu0 %1933
  %v1935 = vsel %vm357, %v1926, 0.0
  %1936 = vadd.xlane.f32.xlu0 %v1935
  %v1937 = vpop.xlane.xlu0 %1936
  %v1938 = vsel %vm357, %v1928, 0.0
  %1939 = vadd.xlane.f32.xlu0 %v1938
  %v1940 = vpop.xlane.xlu0 %1939
  %v1941 = vrcp.pop %v1931
  %v1942 = vrcp.pop %v1934
  %v1943 = vrcp.pop %v1937
  %v1944 = vrcp.pop %v1940
  %v1945 = vmul.f32 %v1922, %v1941
  %v1946 = vmul.f32 %v1924, %v1942
  %v1947 = vmul.f32 %v1926, %v1943
  %v1948 = vmul.f32 %v1928, %v1944
  %v1949 = vpack.c.bf16 %v1946, %v1945
  %v1950 = vpack.c.bf16 %v1948, %v1947
  %v1951 = vpack.c.bf16 %v1807, %v1803
  %v1952 = vpack.c.bf16 %v1817, %v1813
  %v1954 = vsel %vm357, %v1949, 0
  %v1957 = vsel %vm357, %v1950, 0
  %1959 = vmatprep.subr.bf16.mxu0 0
  %1960 = vmatpush1.bf16.msra.mxu0 %v1951
  %1961 = vmatprep.subr.bf16.mxu0 0
  %1962 = vmatpush1.bf16.msra.mxu0 %v1952
  %1963 = vmatprep.subr.bf16.mxu0 0
  %1964 = vmatpush1.bf16.msra.mxu0 0
  %1965 = vmatprep.subr.bf16.mxu0 0
  %1966 = vmatpush1.bf16.msra.mxu0 0
  %1967 = vmatprep.subr.bf16.mxu0 0
  %1968 = vmatpush1.bf16.msra.mxu0 0
  %1969 = vmatprep.subr.bf16.mxu0 0
  %1970 = vmatpush1.bf16.msra.mxu0 0
  %1971 = vmatprep.subr.bf16.mxu0 0
  %1972 = vmatpush1.bf16.msra.mxu0 0
  %1973 = vmatprep.subr.bf16.mxu0 0
  %1974 = vmatpush1.bf16.msra.mxu0 0
  %1975 = vmatprep.subr.bf16.mxu0 0
  %1976 = vmatpush1.bf16.msra.mxu0 0
  %1977 = vmatprep.subr.bf16.mxu0 0
  %1978 = vmatpush1.bf16.msra.mxu0 0
  %1979 = vmatprep.subr.bf16.mxu0 0
  %1980 = vmatpush1.bf16.msra.mxu0 0
  %1981 = vmatprep.subr.bf16.mxu0 0
  %1982 = vmatpush1.bf16.msra.mxu0 0
  %1983 = vmatprep.subr.bf16.mxu0 0
  %1984 = vmatpush1.bf16.msra.mxu0 0
  %1985 = vmatprep.subr.bf16.mxu0 0
  %1986 = vmatpush1.bf16.msra.mxu0 0
  %1987 = vmatprep.subr.bf16.mxu0 0
  %1988 = vmatpush1.bf16.msra.mxu0 0
  %1989 = vmatprep.subr.bf16.mxu0 0
  %1990 = vmatpush1.bf16.msra.mxu0 0
  %1991 = vmatprep.mubr.bf16.mxu0 0
  %1992 = vmatmul.mubr.bf16.gmra.mrb[0].mxu0 %v1954
  %v1993 = vpop.f32.mrb[0].mxu0
  %v1994 = vadd.f32 0.0, %v1993
  %v1995 = vpop.f32.mrb[0].mxu0
  %v1996 = vpop.f32.mrb[0].mxu0
  %v1997 = vadd.f32 0.0, %v1996
  %v1998 = vpop.f32.mrb[0].mxu0
  %1999 = vmatprep.mubr.bf16.mxu0 0
  %2000 = vmatmul.mubr.bf16.gmra.mrb[0].mxu0 %v1957
  %v2001 = vpop.f32.mrb[0].mxu0
  %v2002 = vadd.f32 0.0, %v2001
  %v2003 = vpop.f32.mrb[0].mxu0
  %v2004 = vpop.f32.mrb[0].mxu0
  %v2005 = vadd.f32 0.0, %v2004
  %v2006 = vpop.f32.mrb[0].mxu0
  %2007 = vdwg.mxu0
  %v2008 = vpack.c.bf16 %v1997, %v1994
  %v2009 = vpack.c.bf16 %v2005, %v2002
  %2010 = vrot.lane.b32.xlu0 %v1828, 112
  %v2011 = vpop.permute.xlu0 %2010
  %2012 = vrot.lane.b32.xlu0 %v1829, 112
  %v2013 = vpop.permute.xlu0 %2012
  %2014 = vrot.lane.b32.xlu0 %v1828, 48
  %v2015 = vpop.permute.xlu0 %2014
  %2016 = vrot.lane.b32.xlu0 %v1829, 48
  %v2017 = vpop.permute.xlu0 %2016
  %v2019 = vsel %vm287, %v2011, 0
  %v2022 = vsel %vm287, %v2013, 0
  %v2025 = vsel %vm287, %v2015, 0
  %v2028 = vsel %vm287, %v2017, 0
  %2030 = vmatprep.subr.bf16.mxu0 0
  %2031 = vmatpush1.bf16.xpose.msra.mxu0 %v2025
  %2032 = vmatprep.subr.bf16.mxu0 0
  %2033 = vmatpush1.bf16.xpose.msra.mxu0 %v2028
  %2034 = vmatprep.subr.bf16.mxu0 0
  %2035 = vmatpush1.bf16.xpose.msra.mxu0 0
  %2036 = vmatprep.subr.bf16.mxu0 0
  %2037 = vmatpush1.bf16.xpose.msra.mxu0 0
  %2038 = vmatprep.subr.bf16.mxu0 0
  %2039 = vmatpush1.bf16.xpose.msra.mxu0 0
  %2040 = vmatprep.subr.bf16.mxu0 0
  %2041 = vmatpush1.bf16.xpose.msra.mxu0 0
  %2042 = vmatprep.subr.bf16.mxu0 0
  %2043 = vmatpush1.bf16.xpose.msra.mxu0 0
  %2044 = vmatprep.subr.bf16.mxu0 0
  %2045 = vmatpush1.bf16.xpose.msra.mxu0 0
  %2046 = vmatprep.subr.bf16.mxu0 0
  %2047 = vmatpush1.bf16.xpose.msra.mxu0 0
  %2048 = vmatprep.subr.bf16.mxu0 0
  %2049 = vmatpush1.bf16.xpose.msra.mxu0 0
  %2050 = vmatprep.subr.bf16.mxu0 0
  %2051 = vmatpush1.bf16.xpose.msra.mxu0 0
  %2052 = vmatprep.subr.bf16.mxu0 0
  %2053 = vmatpush1.bf16.xpose.msra.mxu0 0
  %2054 = vmatprep.subr.bf16.mxu0 0
  %2055 = vmatpush1.bf16.xpose.msra.mxu0 0
  %2056 = vmatprep.subr.bf16.mxu0 0
  %2057 = vmatpush1.bf16.xpose.msra.mxu0 0
  %2058 = vmatprep.subr.bf16.mxu0 0
  %2059 = vmatpush1.bf16.xpose.msra.mxu0 0
  %2060 = vmatprep.subr.bf16.mxu0 0
  %2061 = vmatpush1.bf16.xpose.msra.mxu0 0
  %2062 = vmatprep.mubr.bf16.mxu0 0
  %2063 = vmatmul.mubr.bf16.gmra.mrb[0].mxu0 %v2019
  %v2064 = vpop.f32.mrb[0].mxu0
  %v2065 = vadd.f32 0.0, %v2064
  %v2066 = vpop.f32.mrb[0].mxu0
  %v2067 = vpop.f32.mrb[0].mxu0
  %v2068 = vadd.f32 0.0, %v2067
  %v2069 = vpop.f32.mrb[0].mxu0
  %2070 = vmatprep.mubr.bf16.mxu0 0
  %2071 = vmatmul.mubr.bf16.gmra.mrb[0].mxu0 %v2022
  %v2072 = vpop.f32.mrb[0].mxu0
  %v2073 = vadd.f32 0.0, %v2072
  %v2074 = vpop.f32.mrb[0].mxu0
  %v2075 = vpop.f32.mrb[0].mxu0
  %v2076 = vadd.f32 0.0, %v2075
  %v2077 = vpop.f32.mrb[0].mxu0
  %2078 = vdwg.mxu0
  %v2079 = vmul.f32 %v2065, 0.25
  %v2080 = vmul.f32 %v2068, 0.25
  %v2081 = vmul.f32 %v2073, 0.25
  %v2082 = vmul.f32 %v2076, 0.25
  %v2083 = vadd.f32 %v2079, %v66
  %v2084 = vadd.f32 %v2080, %v67
  %v2085 = vadd.f32 %v2081, %v68
  %v2086 = vadd.f32 %v2082, %v69
  %v2087 = vsel %vm357, %v2083, -inf
  %2088 = vmax.xlane.f32.xlu0 %v2087
  %v2089 = vpop.xlane.xlu0 %2088
  %v2090 = vsel %vm357, %v2084, -inf
  %2091 = vmax.xlane.f32.xlu0 %v2090
  %v2092 = vpop.xlane.xlu0 %2091
  %v2093 = vsel %vm357, %v2085, -inf
  %2094 = vmax.xlane.f32.xlu0 %v2093
  %v2095 = vpop.xlane.xlu0 %2094
  %v2096 = vsel %vm357, %v2086, -inf
  %2097 = vmax.xlane.f32.xlu0 %v2096
  %v2098 = vpop.xlane.xlu0 %2097
  %v2099 = vsub.f32 %v2083, %v2089
  %v2100 = vsub.f32 %v2084, %v2092
  %v2101 = vsub.f32 %v2085, %v2095
  %v2102 = vsub.f32 %v2086, %v2098
  %v2103 = vmul.f32 %v2099, 1.442695
  %v2104 = vpow.pop %v2103
  %v2105 = vmul.f32 %v2100, 1.442695
  %v2106 = vpow.pop %v2105
  %v2107 = vmul.f32 %v2101, 1.442695
  %v2108 = vpow.pop %v2107
  %v2109 = vmul.f32 %v2102, 1.442695
  %v2110 = vpow.pop %v2109
  %v2111 = vsel %vm357, %v2104, 0.0
  %2112 = vadd.xlane.f32.xlu0 %v2111
  %v2113 = vpop.xlane.xlu0 %2112
  %v2114 = vsel %vm357, %v2106, 0.0
  %2115 = vadd.xlane.f32.xlu0 %v2114
  %v2116 = vpop.xlane.xlu0 %2115
  %v2117 = vsel %vm357, %v2108, 0.0
  %2118 = vadd.xlane.f32.xlu0 %v2117
  %v2119 = vpop.xlane.xlu0 %2118
  %v2120 = vsel %vm357, %v2110, 0.0
  %2121 = vadd.xlane.f32.xlu0 %v2120
  %v2122 = vpop.xlane.xlu0 %2121
  %v2123 = vrcp.pop %v2113
  %v2124 = vrcp.pop %v2116
  %v2125 = vrcp.pop %v2119
  %v2126 = vrcp.pop %v2122
  %v2127 = vmul.f32 %v2104, %v2123
  %v2128 = vmul.f32 %v2106, %v2124
  %v2129 = vmul.f32 %v2108, %v2125
  %v2130 = vmul.f32 %v2110, %v2126
  %v2131 = vpack.c.bf16 %v2128, %v2127
  %v2132 = vpack.c.bf16 %v2130, %v2129
  %2135 = vrot.lane.b32.xlu0 %v1951, 112
  %v2136 = vpop.permute.xlu0 %2135
  %2137 = vrot.lane.b32.xlu0 %v1952, 112
  %v2138 = vpop.permute.xlu0 %2137
  %v2142 = vsel %vm357, %v2131, 0
  %v2145 = vsel %vm357, %v2132, 0
  %2147 = vmatprep.subr.bf16.mxu0 0
  %2148 = vmatpush1.bf16.msra.mxu0 %v2136
  %2149 = vmatprep.subr.bf16.mxu0 0
  %2150 = vmatpush1.bf16.msra.mxu0 %v2138
  %2151 = vmatprep.subr.bf16.mxu0 0
  %2152 = vmatpush1.bf16.msra.mxu0 0
  %2153 = vmatprep.subr.bf16.mxu0 0
  %2154 = vmatpush1.bf16.msra.mxu0 0
  %2155 = vmatprep.subr.bf16.mxu0 0
  %2156 = vmatpush1.bf16.msra.mxu0 0
  %2157 = vmatprep.subr.bf16.mxu0 0
  %2158 = vmatpush1.bf16.msra.mxu0 0
  %2159 = vmatprep.subr.bf16.mxu0 0
  %2160 = vmatpush1.bf16.msra.mxu0 0
  %2161 = vmatprep.subr.bf16.mxu0 0
  %2162 = vmatpush1.bf16.msra.mxu0 0
  %2163 = vmatprep.subr.bf16.mxu0 0
  %2164 = vmatpush1.bf16.msra.mxu0 0
  %2165 = vmatprep.subr.bf16.mxu0 0
  %2166 = vmatpush1.bf16.msra.mxu0 0
  %2167 = vmatprep.subr.bf16.mxu0 0
  %2168 = vmatpush1.bf16.msra.mxu0 0
  %2169 = vmatprep.subr.bf16.mxu0 0
  %2170 = vmatpush1.bf16.msra.mxu0 0
  %2171 = vmatprep.subr.bf16.mxu0 0
  %2172 = vmatpush1.bf16.msra.mxu0 0
  %2173 = vmatprep.subr.bf16.mxu0 0
  %2174 = vmatpush1.bf16.msra.mxu0 0
  %2175 = vmatprep.subr.bf16.mxu0 0
  %2176 = vmatpush1.bf16.msra.mxu0 0
  %2177 = vmatprep.subr.bf16.mxu0 0
  %2178 = vmatpush1.bf16.msra.mxu0 0
  %2179 = vmatprep.mubr.bf16.mxu0 0
  %2180 = vmatmul.mubr.bf16.gmra.mrb[0].mxu0 %v2142
  %v2181 = vpop.f32.mrb[0].mxu0
  %v2182 = vadd.f32 0.0, %v2181
  %v2183 = vpop.f32.mrb[0].mxu0
  %v2184 = vpop.f32.mrb[0].mxu0
  %v2185 = vadd.f32 0.0, %v2184
  %v2186 = vpop.f32.mrb[0].mxu0
  %2187 = vmatprep.mubr.bf16.mxu0 0
  %2188 = vmatmul.mubr.bf16.gmra.mrb[0].mxu0 %v2145
  %v2189 = vpop.f32.mrb[0].mxu0
  %v2190 = vadd.f32 0.0, %v2189
  %v2191 = vpop.f32.mrb[0].mxu0
  %v2192 = vpop.f32.mrb[0].mxu0
  %v2193 = vadd.f32 0.0, %v2192
  %v2194 = vpop.f32.mrb[0].mxu0
  %2195 = vdwg.mxu0
  %v2196 = vpack.c.bf16 %v2185, %v2182
  %v2197 = vpack.c.bf16 %v2193, %v2190
  %v2200 = vunpack.c.l.b16 %v1822
  %v2201 = vunpack.c.l.b16 %v1823
  %v2202 = vpack.c.b16 %v2201, %v2200
  %v2205 = vsel %vm287, %v2196, 0
  %v2208 = vsel %vm287, %v2197, 0
  %2210 = vmatprep.subr.bf16.mxu0 0
  %2211 = vmatpush1.bf16.msra.mxu0 %v2202
  %2212 = vmatprep.subr.bf16.mxu0 0
  %2213 = vmatpush1.bf16.msra.mxu0 0
  %2214 = vmatprep.subr.bf16.mxu0 0
  %2215 = vmatpush1.bf16.msra.mxu0 0
  %2216 = vmatprep.subr.bf16.mxu0 0
  %2217 = vmatpush1.bf16.msra.mxu0 0
  %2218 = vmatprep.subr.bf16.mxu0 0
  %2219 = vmatpush1.bf16.msra.mxu0 0
  %2220 = vmatprep.subr.bf16.mxu0 0
  %2221 = vmatpush1.bf16.msra.mxu0 0
  %2222 = vmatprep.subr.bf16.mxu0 0
  %2223 = vmatpush1.bf16.msra.mxu0 0
  %2224 = vmatprep.subr.bf16.mxu0 0
  %2225 = vmatpush1.bf16.msra.mxu0 0
  %2226 = vmatprep.subr.bf16.mxu0 0
  %2227 = vmatpush1.bf16.msra.mxu0 0
  %2228 = vmatprep.subr.bf16.mxu0 0
  %2229 = vmatpush1.bf16.msra.mxu0 0
  %2230 = vmatprep.subr.bf16.mxu0 0
  %2231 = vmatpush1.bf16.msra.mxu0 0
  %2232 = vmatprep.subr.bf16.mxu0 0
  %2233 = vmatpush1.bf16.msra.mxu0 0
  %2234 = vmatprep.subr.bf16.mxu0 0
  %2235 = vmatpush1.bf16.msra.mxu0 0
  %2236 = vmatprep.subr.bf16.mxu0 0
  %2237 = vmatpush1.bf16.msra.mxu0 0
  %2238 = vmatprep.subr.bf16.mxu0 0
  %2239 = vmatpush1.bf16.msra.mxu0 0
  %2240 = vmatprep.subr.bf16.mxu0 0
  %2241 = vmatpush1.bf16.msra.mxu0 0
  %2242 = vmatprep.mubr.bf16.mxu0 0
  %2243 = vmatmul.mubr.bf16.gmra.mrb[0].mxu0 %v2205
  %v2244 = vpop.f32.mrb[0].mxu0
  %v2245 = vadd.f32 0.0, %v2244
  %v2246 = vpop.f32.mrb[0].mxu0
  %v2247 = vpop.f32.mrb[0].mxu0
  %v2248 = vadd.f32 0.0, %v2247
  %v2249 = vpop.f32.mrb[0].mxu0
  %2250 = vmatprep.mubr.bf16.mxu0 0
  %2251 = vmatmul.mubr.bf16.gmra.mrb[0].mxu0 %v2208
  %v2252 = vpop.f32.mrb[0].mxu0
  %v2253 = vadd.f32 0.0, %v2252
  %v2254 = vpop.f32.mrb[0].mxu0
  %v2255 = vpop.f32.mrb[0].mxu0
  %v2256 = vadd.f32 0.0, %v2255
  %v2257 = vpop.f32.mrb[0].mxu0
  %2258 = vdwg.mxu0
  %v2261 = vunpack.c.l.b16 %v1820
  %v2262 = vunpack.c.l.b16 %v1821
  %v2263 = vpack.c.b16 %v2262, %v2261
  %v2266 = vsel %vm287, %v2008, 0
  %v2269 = vsel %vm287, %v2009, 0
  %2271 = vmatprep.subr.bf16.mxu0 0
  %2272 = vmatpush1.bf16.msra.mxu0 %v2263
  %2273 = vmatprep.subr.bf16.mxu0 0
  %2274 = vmatpush1.bf16.msra.mxu0 0
  %2275 = vmatprep.subr.bf16.mxu0 0
  %2276 = vmatpush1.bf16.msra.mxu0 0
  %2277 = vmatprep.subr.bf16.mxu0 0
  %2278 = vmatpush1.bf16.msra.mxu0 0
  %2279 = vmatprep.subr.bf16.mxu0 0
  %2280 = vmatpush1.bf16.msra.mxu0 0
  %2281 = vmatprep.subr.bf16.mxu0 0
  %2282 = vmatpush1.bf16.msra.mxu0 0
  %2283 = vmatprep.subr.bf16.mxu0 0
  %2284 = vmatpush1.bf16.msra.mxu0 0
  %2285 = vmatprep.subr.bf16.mxu0 0
  %2286 = vmatpush1.bf16.msra.mxu0 0
  %2287 = vmatprep.subr.bf16.mxu0 0
  %2288 = vmatpush1.bf16.msra.mxu0 0
  %2289 = vmatprep.subr.bf16.mxu0 0
  %2290 = vmatpush1.bf16.msra.mxu0 0
  %2291 = vmatprep.subr.bf16.mxu0 0
  %2292 = vmatpush1.bf16.msra.mxu0 0
  %2293 = vmatprep.subr.bf16.mxu0 0
  %2294 = vmatpush1.bf16.msra.mxu0 0
  %2295 = vmatprep.subr.bf16.mxu0 0
  %2296 = vmatpush1.bf16.msra.mxu0 0
  %2297 = vmatprep.subr.bf16.mxu0 0
  %2298 = vmatpush1.bf16.msra.mxu0 0
  %2299 = vmatprep.subr.bf16.mxu0 0
  %2300 = vmatpush1.bf16.msra.mxu0 0
  %2301 = vmatprep.subr.bf16.mxu0 0
  %2302 = vmatpush1.bf16.msra.mxu0 0
  %2303 = vmatprep.mubr.bf16.mxu0 0
  %2304 = vmatmul.mubr.bf16.gmra.mrb[0].mxu0 %v2266
  %v2305 = vpop.f32.mrb[0].mxu0
  %v2306 = vadd.f32 %v2245, %v2305
  %v2307 = vpop.f32.mrb[0].mxu0
  %v2308 = vpop.f32.mrb[0].mxu0
  %v2309 = vadd.f32 %v2248, %v2308
  %v2310 = vpop.f32.mrb[0].mxu0
  %2311 = vmatprep.mubr.bf16.mxu0 0
  %2312 = vmatmul.mubr.bf16.gmra.mrb[0].mxu0 %v2269
  %v2313 = vpop.f32.mrb[0].mxu0
  %v2314 = vadd.f32 %v2253, %v2313
  %v2315 = vpop.f32.mrb[0].mxu0
  %v2316 = vpop.f32.mrb[0].mxu0
  %v2317 = vadd.f32 %v2256, %v2316
  %v2318 = vpop.f32.mrb[0].mxu0
  %2319 = vdwg.mxu0
  %2320 = vrot.lane.b32.xlu0 %v1828, 96
  %v2321 = vpop.permute.xlu0 %2320
  %2322 = vrot.lane.b32.xlu0 %v1829, 96
  %v2323 = vpop.permute.xlu0 %2322
  %2324 = vrot.lane.b32.xlu0 %v1828, 32
  %v2325 = vpop.permute.xlu0 %2324
  %2326 = vrot.lane.b32.xlu0 %v1829, 32
  %v2327 = vpop.permute.xlu0 %2326
  %v2329 = vsel %vm287, %v2321, 0
  %v2332 = vsel %vm287, %v2323, 0
  %v2335 = vsel %vm287, %v2325, 0
  %v2338 = vsel %vm287, %v2327, 0
  %2340 = vmatprep.subr.bf16.mxu0 0
  %2341 = vmatpush1.bf16.xpose.msra.mxu0 %v2335
  %2342 = vmatprep.subr.bf16.mxu0 0
  %2343 = vmatpush1.bf16.xpose.msra.mxu0 %v2338
  %2344 = vmatprep.subr.bf16.mxu0 0
  %2345 = vmatpush1.bf16.xpose.msra.mxu0 0
  %2346 = vmatprep.subr.bf16.mxu0 0
  %2347 = vmatpush1.bf16.xpose.msra.mxu0 0
  %2348 = vmatprep.subr.bf16.mxu0 0
  %2349 = vmatpush1.bf16.xpose.msra.mxu0 0
  %2350 = vmatprep.subr.bf16.mxu0 0
  %2351 = vmatpush1.bf16.xpose.msra.mxu0 0
  %2352 = vmatprep.subr.bf16.mxu0 0
  %2353 = vmatpush1.bf16.xpose.msra.mxu0 0
  %2354 = vmatprep.subr.bf16.mxu0 0
  %2355 = vmatpush1.bf16.xpose.msra.mxu0 0
  %2356 = vmatprep.subr.bf16.mxu0 0
  %2357 = vmatpush1.bf16.xpose.msra.mxu0 0
  %2358 = vmatprep.subr.bf16.mxu0 0
  %2359 = vmatpush1.bf16.xpose.msra.mxu0 0
  %2360 = vmatprep.subr.bf16.mxu0 0
  %2361 = vmatpush1.bf16.xpose.msra.mxu0 0
  %2362 = vmatprep.subr.bf16.mxu0 0
  %2363 = vmatpush1.bf16.xpose.msra.mxu0 0
  %2364 = vmatprep.subr.bf16.mxu0 0
  %2365 = vmatpush1.bf16.xpose.msra.mxu0 0
  %2366 = vmatprep.subr.bf16.mxu0 0
  %2367 = vmatpush1.bf16.xpose.msra.mxu0 0
  %2368 = vmatprep.subr.bf16.mxu0 0
  %2369 = vmatpush1.bf16.xpose.msra.mxu0 0
  %2370 = vmatprep.subr.bf16.mxu0 0
  %2371 = vmatpush1.bf16.xpose.msra.mxu0 0
  %2372 = vmatprep.mubr.bf16.mxu0 0
  %2373 = vmatmul.mubr.bf16.gmra.mrb[0].mxu0 %v2329
  %v2374 = vpop.f32.mrb[0].mxu0
  %v2375 = vadd.f32 0.0, %v2374
  %v2376 = vpop.f32.mrb[0].mxu0
  %v2377 = vpop.f32.mrb[0].mxu0
  %v2378 = vadd.f32 0.0, %v2377
  %v2379 = vpop.f32.mrb[0].mxu0
  %2380 = vmatprep.mubr.bf16.mxu0 0
  %2381 = vmatmul.mubr.bf16.gmra.mrb[0].mxu0 %v2332
  %v2382 = vpop.f32.mrb[0].mxu0
  %v2383 = vadd.f32 0.0, %v2382
  %v2384 = vpop.f32.mrb[0].mxu0
  %v2385 = vpop.f32.mrb[0].mxu0
  %v2386 = vadd.f32 0.0, %v2385
  %v2387 = vpop.f32.mrb[0].mxu0
  %2388 = vdwg.mxu0
  %v2389 = vmul.f32 %v2375, 0.25
  %v2390 = vmul.f32 %v2378, 0.25
  %v2391 = vmul.f32 %v2383, 0.25
  %v2392 = vmul.f32 %v2386, 0.25
  %v2393 = vadd.f32 %v2389, %v66
  %v2394 = vadd.f32 %v2390, %v67
  %v2395 = vadd.f32 %v2391, %v68
  %v2396 = vadd.f32 %v2392, %v69
  %v2397 = vsel %vm357, %v2393, -inf
  %2398 = vmax.xlane.f32.xlu0 %v2397
  %v2399 = vpop.xlane.xlu0 %2398
  %v2400 = vsel %vm357, %v2394, -inf
  %2401 = vmax.xlane.f32.xlu0 %v2400
  %v2402 = vpop.xlane.xlu0 %2401
  %v2403 = vsel %vm357, %v2395, -inf
  %2404 = vmax.xlane.f32.xlu0 %v2403
  %v2405 = vpop.xlane.xlu0 %2404
  %v2406 = vsel %vm357, %v2396, -inf
  %2407 = vmax.xlane.f32.xlu0 %v2406
  %v2408 = vpop.xlane.xlu0 %2407
  %v2409 = vsub.f32 %v2393, %v2399
  %v2410 = vsub.f32 %v2394, %v2402
  %v2411 = vsub.f32 %v2395, %v2405
  %v2412 = vsub.f32 %v2396, %v2408
  %v2413 = vmul.f32 %v2409, 1.442695
  %v2414 = vpow.pop %v2413
  %v2415 = vmul.f32 %v2410, 1.442695
  %v2416 = vpow.pop %v2415
  %v2417 = vmul.f32 %v2411, 1.442695
  %v2418 = vpow.pop %v2417
  %v2419 = vmul.f32 %v2412, 1.442695
  %v2420 = vpow.pop %v2419
  %v2421 = vsel %vm357, %v2414, 0.0
  %2422 = vadd.xlane.f32.xlu0 %v2421
  %v2423 = vpop.xlane.xlu0 %2422
  %v2424 = vsel %vm357, %v2416, 0.0
  %2425 = vadd.xlane.f32.xlu0 %v2424
  %v2426 = vpop.xlane.xlu0 %2425
  %v2427 = vsel %vm357, %v2418, 0.0
  %2428 = vadd.xlane.f32.xlu0 %v2427
  %v2429 = vpop.xlane.xlu0 %2428
  %v2430 = vsel %vm357, %v2420, 0.0
  %2431 = vadd.xlane.f32.xlu0 %v2430
  %v2432 = vpop.xlane.xlu0 %2431
  %v2433 = vrcp.pop %v2423
  %v2434 = vrcp.pop %v2426
  %v2435 = vrcp.pop %v2429
  %v2436 = vrcp.pop %v2432
  %v2437 = vmul.f32 %v2414, %v2433
  %v2438 = vmul.f32 %v2416, %v2434
  %v2439 = vmul.f32 %v2418, %v2435
  %v2440 = vmul.f32 %v2420, %v2436
  %v2441 = vpack.c.bf16 %v2438, %v2437
  %v2442 = vpack.c.bf16 %v2440, %v2439
  %2443 = vrot.lane.b32.xlu0 %v1951, 96
  %v2444 = vpop.permute.xlu0 %2443
  %2445 = vrot.lane.b32.xlu0 %v1952, 96
  %v2446 = vpop.permute.xlu0 %2445
  %v2450 = vsel %vm357, %v2441, 0
  %v2453 = vsel %vm357, %v2442, 0
  %2455 = vmatprep.subr.bf16.mxu0 0
  %2456 = vmatpush1.bf16.msra.mxu0 %v2444
  %2457 = vmatprep.subr.bf16.mxu0 0
  %2458 = vmatpush1.bf16.msra.mxu0 %v2446
  %2459 = vmatprep.subr.bf16.mxu0 0
  %2460 = vmatpush1.bf16.msra.mxu0 0
  %2461 = vmatprep.subr.bf16.mxu0 0
  %2462 = vmatpush1.bf16.msra.mxu0 0
  %2463 = vmatprep.subr.bf16.mxu0 0
  %2464 = vmatpush1.bf16.msra.mxu0 0
  %2465 = vmatprep.subr.bf16.mxu0 0
  %2466 = vmatpush1.bf16.msra.mxu0 0
  %2467 = vmatprep.subr.bf16.mxu0 0
  %2468 = vmatpush1.bf16.msra.mxu0 0
  %2469 = vmatprep.subr.bf16.mxu0 0
  %2470 = vmatpush1.bf16.msra.mxu0 0
  %2471 = vmatprep.subr.bf16.mxu0 0
  %2472 = vmatpush1.bf16.msra.mxu0 0
  %2473 = vmatprep.subr.bf16.mxu0 0
  %2474 = vmatpush1.bf16.msra.mxu0 0
  %2475 = vmatprep.subr.bf16.mxu0 0
  %2476 = vmatpush1.bf16.msra.mxu0 0
  %2477 = vmatprep.subr.bf16.mxu0 0
  %2478 = vmatpush1.bf16.msra.mxu0 0
  %2479 = vmatprep.subr.bf16.mxu0 0
  %2480 = vmatpush1.bf16.msra.mxu0 0
  %2481 = vmatprep.subr.bf16.mxu0 0
  %2482 = vmatpush1.bf16.msra.mxu0 0
  %2483 = vmatprep.subr.bf16.mxu0 0
  %2484 = vmatpush1.bf16.msra.mxu0 0
  %2485 = vmatprep.subr.bf16.mxu0 0
  %2486 = vmatpush1.bf16.msra.mxu0 0
  %2487 = vmatprep.mubr.bf16.mxu0 0
  %2488 = vmatmul.mubr.bf16.gmra.mrb[0].mxu0 %v2450
  %v2489 = vpop.f32.mrb[0].mxu0
  %v2490 = vadd.f32 0.0, %v2489
  %v2491 = vpop.f32.mrb[0].mxu0
  %v2492 = vpop.f32.mrb[0].mxu0
  %v2493 = vadd.f32 0.0, %v2492
  %v2494 = vpop.f32.mrb[0].mxu0
  %2495 = vmatprep.mubr.bf16.mxu0 0
  %2496 = vmatmul.mubr.bf16.gmra.mrb[0].mxu0 %v2453
  %v2497 = vpop.f32.mrb[0].mxu0
  %v2498 = vadd.f32 0.0, %v2497
  %v2499 = vpop.f32.mrb[0].mxu0
  %v2500 = vpop.f32.mrb[0].mxu0
  %v2501 = vadd.f32 0.0, %v2500
  %v2502 = vpop.f32.mrb[0].mxu0
  %2503 = vdwg.mxu0
  %v2504 = vpack.c.bf16 %v2493, %v2490
  %v2505 = vpack.c.bf16 %v2501, %v2498
  %v2508 = vunpack.c.l.b16 %v1824
  %v2509 = vunpack.c.l.b16 %v1825
  %v2510 = vpack.c.b16 %v2509, %v2508
  %v2513 = vsel %vm287, %v2504, 0
  %v2516 = vsel %vm287, %v2505, 0
  %2518 = vmatprep.subr.bf16.mxu0 0
  %2519 = vmatpush1.bf16.msra.mxu0 %v2510
  %2520 = vmatprep.subr.bf16.mxu0 0
  %2521 = vmatpush1.bf16.msra.mxu0 0
  %2522 = vmatprep.subr.bf16.mxu0 0
  %2523 = vmatpush1.bf16.msra.mxu0 0
  %2524 = vmatprep.subr.bf16.mxu0 0
  %2525 = vmatpush1.bf16.msra.mxu0 0
  %2526 = vmatprep.subr.bf16.mxu0 0
  %2527 = vmatpush1.bf16.msra.mxu0 0
  %2528 = vmatprep.subr.bf16.mxu0 0
  %2529 = vmatpush1.bf16.msra.mxu0 0
  %2530 = vmatprep.subr.bf16.mxu0 0
  %2531 = vmatpush1.bf16.msra.mxu0 0
  %2532 = vmatprep.subr.bf16.mxu0 0
  %2533 = vmatpush1.bf16.msra.mxu0 0
  %2534 = vmatprep.subr.bf16.mxu0 0
  %2535 = vmatpush1.bf16.msra.mxu0 0
  %2536 = vmatprep.subr.bf16.mxu0 0
  %2537 = vmatpush1.bf16.msra.mxu0 0
  %2538 = vmatprep.subr.bf16.mxu0 0
  %2539 = vmatpush1.bf16.msra.mxu0 0
  %2540 = vmatprep.subr.bf16.mxu0 0
  %2541 = vmatpush1.bf16.msra.mxu0 0
  %2542 = vmatprep.subr.bf16.mxu0 0
  %2543 = vmatpush1.bf16.msra.mxu0 0
  %2544 = vmatprep.subr.bf16.mxu0 0
  %2545 = vmatpush1.bf16.msra.mxu0 0
  %2546 = vmatprep.subr.bf16.mxu0 0
  %2547 = vmatpush1.bf16.msra.mxu0 0
  %2548 = vmatprep.subr.bf16.mxu0 0
  %2549 = vmatpush1.bf16.msra.mxu0 0
  %2550 = vmatprep.mubr.bf16.mxu0 0
  %2551 = vmatmul.mubr.bf16.gmra.mrb[0].mxu0 %v2513
  %v2552 = vpop.f32.mrb[0].mxu0
  %v2553 = vadd.f32 0.0, %v2552
  %v2554 = vpop.f32.mrb[0].mxu0
  %v2555 = vpop.f32.mrb[0].mxu0
  %v2556 = vadd.f32 0.0, %v2555
  %v2557 = vpop.f32.mrb[0].mxu0
  %2558 = vmatprep.mubr.bf16.mxu0 0
  %2559 = vmatmul.mubr.bf16.gmra.mrb[0].mxu0 %v2516
  %v2560 = vpop.f32.mrb[0].mxu0
  %v2561 = vadd.f32 0.0, %v2560
  %v2562 = vpop.f32.mrb[0].mxu0
  %v2563 = vpop.f32.mrb[0].mxu0
  %v2564 = vadd.f32 0.0, %v2563
  %v2565 = vpop.f32.mrb[0].mxu0
  %2566 = vdwg.mxu0
  %v2567 = vadd.f32 %v2306, %v2553
  %v2568 = vadd.f32 %v2309, %v2556
  %v2569 = vadd.f32 %v2314, %v2561
  %v2570 = vadd.f32 %v2317, %v2564
  %2571 = vrot.lane.b32.xlu0 %v1828, 80
  %v2572 = vpop.permute.xlu0 %2571
  %2573 = vrot.lane.b32.xlu0 %v1829, 80
  %v2574 = vpop.permute.xlu0 %2573
  %2575 = vrot.lane.b32.xlu0 %v1828, 16
  %v2576 = vpop.permute.xlu0 %2575
  %2577 = vrot.lane.b32.xlu0 %v1829, 16
  %v2578 = vpop.permute.xlu0 %2577
  %v2580 = vsel %vm287, %v2572, 0
  %v2583 = vsel %vm287, %v2574, 0
  %v2586 = vsel %vm287, %v2576, 0
  %v2589 = vsel %vm287, %v2578, 0
  %2591 = vmatprep.subr.bf16.mxu0 0
  %2592 = vmatpush1.bf16.xpose.msra.mxu0 %v2586
  %2593 = vmatprep.subr.bf16.mxu0 0
  %2594 = vmatpush1.bf16.xpose.msra.mxu0 %v2589
  %2595 = vmatprep.subr.bf16.mxu0 0
  %2596 = vmatpush1.bf16.xpose.msra.mxu0 0
  %2597 = vmatprep.subr.bf16.mxu0 0
  %2598 = vmatpush1.bf16.xpose.msra.mxu0 0
  %2599 = vmatprep.subr.bf16.mxu0 0
  %2600 = vmatpush1.bf16.xpose.msra.mxu0 0
  %2601 = vmatprep.subr.bf16.mxu0 0
  %2602 = vmatpush1.bf16.xpose.msra.mxu0 0
  %2603 = vmatprep.subr.bf16.mxu0 0
  %2604 = vmatpush1.bf16.xpose.msra.mxu0 0
  %2605 = vmatprep.subr.bf16.mxu0 0
  %2606 = vmatpush1.bf16.xpose.msra.mxu0 0
  %2607 = vmatprep.subr.bf16.mxu0 0
  %2608 = vmatpush1.bf16.xpose.msra.mxu0 0
  %2609 = vmatprep.subr.bf16.mxu0 0
  %2610 = vmatpush1.bf16.xpose.msra.mxu0 0
  %2611 = vmatprep.subr.bf16.mxu0 0
  %2612 = vmatpush1.bf16.xpose.msra.mxu0 0
  %2613 = vmatprep.subr.bf16.mxu0 0
  %2614 = vmatpush1.bf16.xpose.msra.mxu0 0
  %2615 = vmatprep.subr.bf16.mxu0 0
  %2616 = vmatpush1.bf16.xpose.msra.mxu0 0
  %2617 = vmatprep.subr.bf16.mxu0 0
  %2618 = vmatpush1.bf16.xpose.msra.mxu0 0
  %2619 = vmatprep.subr.bf16.mxu0 0
  %2620 = vmatpush1.bf16.xpose.msra.mxu0 0
  %2621 = vmatprep.subr.bf16.mxu0 0
  %2622 = vmatpush1.bf16.xpose.msra.mxu0 0
  %2623 = vmatprep.mubr.bf16.mxu0 0
  %2624 = vmatmul.mubr.bf16.gmra.mrb[0].mxu0 %v2580
  %v2625 = vpop.f32.mrb[0].mxu0
  %v2626 = vadd.f32 0.0, %v2625
  %v2627 = vpop.f32.mrb[0].mxu0
  %v2628 = vpop.f32.mrb[0].mxu0
  %v2629 = vadd.f32 0.0, %v2628
  %v2630 = vpop.f32.mrb[0].mxu0
  %2631 = vmatprep.mubr.bf16.mxu0 0
  %2632 = vmatmul.mubr.bf16.gmra.mrb[0].mxu0 %v2583
  %v2633 = vpop.f32.mrb[0].mxu0
  %v2634 = vadd.f32 0.0, %v2633
  %v2635 = vpop.f32.mrb[0].mxu0
  %v2636 = vpop.f32.mrb[0].mxu0
  %v2637 = vadd.f32 0.0, %v2636
  %v2638 = vpop.f32.mrb[0].mxu0
  %2639 = vdwg.mxu0
  %v2640 = vmul.f32 %v2626, 0.25
  %v2641 = vmul.f32 %v2629, 0.25
  %v2642 = vmul.f32 %v2634, 0.25
  %v2643 = vmul.f32 %v2637, 0.25
  %v2644 = vadd.f32 %v2640, %v66
  %v2645 = vadd.f32 %v2641, %v67
  %v2646 = vadd.f32 %v2642, %v68
  %v2647 = vadd.f32 %v2643, %v69
  %v2648 = vsel %vm357, %v2644, -inf
  %2649 = vmax.xlane.f32.xlu0 %v2648
  %v2650 = vpop.xlane.xlu0 %2649
  %v2651 = vsel %vm357, %v2645, -inf
  %2652 = vmax.xlane.f32.xlu0 %v2651
  %v2653 = vpop.xlane.xlu0 %2652
  %v2654 = vsel %vm357, %v2646, -inf
  %2655 = vmax.xlane.f32.xlu0 %v2654
  %v2656 = vpop.xlane.xlu0 %2655
  %v2657 = vsel %vm357, %v2647, -inf
  %2658 = vmax.xlane.f32.xlu0 %v2657
  %v2659 = vpop.xlane.xlu0 %2658
  %v2660 = vsub.f32 %v2644, %v2650
  %v2661 = vsub.f32 %v2645, %v2653
  %v2662 = vsub.f32 %v2646, %v2656
  %v2663 = vsub.f32 %v2647, %v2659
  %v2664 = vmul.f32 %v2660, 1.442695
  %v2665 = vpow.pop %v2664
  %v2666 = vmul.f32 %v2661, 1.442695
  %v2667 = vpow.pop %v2666
  %v2668 = vmul.f32 %v2662, 1.442695
  %v2669 = vpow.pop %v2668
  %v2670 = vmul.f32 %v2663, 1.442695
  %v2671 = vpow.pop %v2670
  %v2672 = vsel %vm357, %v2665, 0.0
  %2673 = vadd.xlane.f32.xlu0 %v2672
  %v2674 = vpop.xlane.xlu0 %2673
  %v2675 = vsel %vm357, %v2667, 0.0
  %2676 = vadd.xlane.f32.xlu0 %v2675
  %v2677 = vpop.xlane.xlu0 %2676
  %v2678 = vsel %vm357, %v2669, 0.0
  %2679 = vadd.xlane.f32.xlu0 %v2678
  %v2680 = vpop.xlane.xlu0 %2679
  %v2681 = vsel %vm357, %v2671, 0.0
  %2682 = vadd.xlane.f32.xlu0 %v2681
  %v2683 = vpop.xlane.xlu0 %2682
  %v2684 = vrcp.pop %v2674
  %v2685 = vrcp.pop %v2677
  %v2686 = vrcp.pop %v2680
  %v2687 = vrcp.pop %v2683
  %v2688 = vmul.f32 %v2665, %v2684
  %v2689 = vmul.f32 %v2667, %v2685
  %v2690 = vmul.f32 %v2669, %v2686
  %v2691 = vmul.f32 %v2671, %v2687
  %v2692 = vpack.c.bf16 %v2689, %v2688
  %v2693 = vpack.c.bf16 %v2691, %v2690
  %2694 = vrot.lane.b32.xlu0 %v1951, 80
  %v2695 = vpop.permute.xlu0 %2694
  %2696 = vrot.lane.b32.xlu0 %v1952, 80
  %v2697 = vpop.permute.xlu0 %2696
  %v2701 = vsel %vm357, %v2692, 0
  %v2704 = vsel %vm357, %v2693, 0
  %2706 = vmatprep.subr.bf16.mxu0 0
  %2707 = vmatpush1.bf16.msra.mxu0 %v2695
  %2708 = vmatprep.subr.bf16.mxu0 0
  %2709 = vmatpush1.bf16.msra.mxu0 %v2697
  %2710 = vmatprep.subr.bf16.mxu0 0
  %2711 = vmatpush1.bf16.msra.mxu0 0
  %2712 = vmatprep.subr.bf16.mxu0 0
  %2713 = vmatpush1.bf16.msra.mxu0 0
  %2714 = vmatprep.subr.bf16.mxu0 0
  %2715 = vmatpush1.bf16.msra.mxu0 0
  %2716 = vmatprep.subr.bf16.mxu0 0
  %2717 = vmatpush1.bf16.msra.mxu0 0
  %2718 = vmatprep.subr.bf16.mxu0 0
  %2719 = vmatpush1.bf16.msra.mxu0 0
  %2720 = vmatprep.subr.bf16.mxu0 0
  %2721 = vmatpush1.bf16.msra.mxu0 0
  %2722 = vmatprep.subr.bf16.mxu0 0
  %2723 = vmatpush1.bf16.msra.mxu0 0
  %2724 = vmatprep.subr.bf16.mxu0 0
  %2725 = vmatpush1.bf16.msra.mxu0 0
  %2726 = vmatprep.subr.bf16.mxu0 0
  %2727 = vmatpush1.bf16.msra.mxu0 0
  %2728 = vmatprep.subr.bf16.mxu0 0
  %2729 = vmatpush1.bf16.msra.mxu0 0
  %2730 = vmatprep.subr.bf16.mxu0 0
  %2731 = vmatpush1.bf16.msra.mxu0 0
  %2732 = vmatprep.subr.bf16.mxu0 0
  %2733 = vmatpush1.bf16.msra.mxu0 0
  %2734 = vmatprep.subr.bf16.mxu0 0
  %2735 = vmatpush1.bf16.msra.mxu0 0
  %2736 = vmatprep.subr.bf16.mxu0 0
  %2737 = vmatpush1.bf16.msra.mxu0 0
  %2738 = vmatprep.mubr.bf16.mxu0 0
  %2739 = vmatmul.mubr.bf16.gmra.mrb[0].mxu0 %v2701
  %v2740 = vpop.f32.mrb[0].mxu0
  %v2741 = vadd.f32 0.0, %v2740
  %v2742 = vpop.f32.mrb[0].mxu0
  %v2743 = vpop.f32.mrb[0].mxu0
  %v2744 = vadd.f32 0.0, %v2743
  %v2745 = vpop.f32.mrb[0].mxu0
  %2746 = vmatprep.mubr.bf16.mxu0 0
  %2747 = vmatmul.mubr.bf16.gmra.mrb[0].mxu0 %v2704
  %v2748 = vpop.f32.mrb[0].mxu0
  %v2749 = vadd.f32 0.0, %v2748
  %v2750 = vpop.f32.mrb[0].mxu0
  %v2751 = vpop.f32.mrb[0].mxu0
  %v2752 = vadd.f32 0.0, %v2751
  %v2753 = vpop.f32.mrb[0].mxu0
  %2754 = vdwg.mxu0
  %v2755 = vpack.c.bf16 %v2744, %v2741
  %v2756 = vpack.c.bf16 %v2752, %v2749
  %v2759 = vunpack.c.l.b16 %v1826
  %v2760 = vunpack.c.l.b16 %v1827
  %v2761 = vpack.c.b16 %v2760, %v2759
  %v2764 = vsel %vm287, %v2755, 0
  %v2767 = vsel %vm287, %v2756, 0
  %2769 = vmatprep.subr.bf16.mxu0 0
  %2770 = vmatpush1.bf16.msra.mxu0 %v2761
  %2771 = vmatprep.subr.bf16.mxu0 0
  %2772 = vmatpush1.bf16.msra.mxu0 0
  %2773 = vmatprep.subr.bf16.mxu0 0
  %2774 = vmatpush1.bf16.msra.mxu0 0
  %2775 = vmatprep.subr.bf16.mxu0 0
  %2776 = vmatpush1.bf16.msra.mxu0 0
  %2777 = vmatprep.subr.bf16.mxu0 0
  %2778 = vmatpush1.bf16.msra.mxu0 0
  %2779 = vmatprep.subr.bf16.mxu0 0
  %2780 = vmatpush1.bf16.msra.mxu0 0
  %2781 = vmatprep.subr.bf16.mxu0 0
  %2782 = vmatpush1.bf16.msra.mxu0 0
  %2783 = vmatprep.subr.bf16.mxu0 0
  %2784 = vmatpush1.bf16.msra.mxu0 0
  %2785 = vmatprep.subr.bf16.mxu0 0
  %2786 = vmatpush1.bf16.msra.mxu0 0
  %2787 = vmatprep.subr.bf16.mxu0 0
  %2788 = vmatpush1.bf16.msra.mxu0 0
  %2789 = vmatprep.subr.bf16.mxu0 0
  %2790 = vmatpush1.bf16.msra.mxu0 0
  %2791 = vmatprep.subr.bf16.mxu0 0
  %2792 = vmatpush1.bf16.msra.mxu0 0
  %2793 = vmatprep.subr.bf16.mxu0 0
  %2794 = vmatpush1.bf16.msra.mxu0 0
  %2795 = vmatprep.subr.bf16.mxu0 0
  %2796 = vmatpush1.bf16.msra.mxu0 0
  %2797 = vmatprep.subr.bf16.mxu0 0
  %2798 = vmatpush1.bf16.msra.mxu0 0
  %2799 = vmatprep.subr.bf16.mxu0 0
  %2800 = vmatpush1.bf16.msra.mxu0 0
  %2801 = vmatprep.mubr.bf16.mxu0 0
  %2802 = vmatmul.mubr.bf16.gmra.mrb[0].mxu0 %v2764
  %v2803 = vpop.f32.mrb[0].mxu0
  %v2804 = vadd.f32 0.0, %v2803
  %v2805 = vpop.f32.mrb[0].mxu0
  %v2806 = vpop.f32.mrb[0].mxu0
  %v2807 = vadd.f32 0.0, %v2806
  %v2808 = vpop.f32.mrb[0].mxu0
  %2809 = vmatprep.mubr.bf16.mxu0 0
  %2810 = vmatmul.mubr.bf16.gmra.mrb[0].mxu0 %v2767
  %v2811 = vpop.f32.mrb[0].mxu0
  %v2812 = vadd.f32 0.0, %v2811
  %v2813 = vpop.f32.mrb[0].mxu0
  %v2814 = vpop.f32.mrb[0].mxu0
  %v2815 = vadd.f32 0.0, %v2814
  %v2816 = vpop.f32.mrb[0].mxu0
  %2817 = vdwg.mxu0
  %v2818 = vadd.f32 %v2567, %v2804
  %v2819 = vadd.f32 %v2568, %v2807
  %v2820 = vadd.f32 %v2569, %v2812
  %v2821 = vadd.f32 %v2570, %v2815
  %s2822 = scalar_lea.vmem %s7, 1
  %v2823 = vld [vmem:[%s2822] sm:$0x1]
  %v2825 = vlaneseq
  %v2826 = vshrl.u32 %v2825, 7
  %v2827 = vsub.s32 0, %v2826
  %v2828 = vrot.slane %v2823, %v2827
  %v2830 = vadd.f32 %v2818, %v2828
  %v2831 = vadd.f32 %v2819, %v2828
  %v2832 = vadd.f32 %v2820, %v2828
  %v2833 = vadd.f32 %v2821, %v2828
  %v2834 = vadd.f32 %v2830, %v1692
  %v2835 = vadd.f32 %v2831, %v1693
  %v2836 = vadd.f32 %v2832, %v1694
  %v2837 = vadd.f32 %v2833, %v1695
  %s2838 = scalar_lea.vmem %s8, 1
  %v2839 = vld [vmem:[%s2838] sm:$0x1]
  %s2840 = scalar_lea.vmem %s9, 1
  %v2841 = vld [vmem:[%s2840] sm:$0x1]
  %v2842 = vsel %vm76, %v2834, 0.0
  %2843 = vadd.xlane.f32.xlu0 %v2842
  %v2844 = vpop.xlane.xlu0 %2843
  %v2845 = vsel %vm76, %v2835, 0.0
  %2846 = vadd.xlane.f32.xlu0 %v2845
  %v2847 = vpop.xlane.xlu0 %2846
  %v2848 = vsel %vm76, %v2836, 0.0
  %2849 = vadd.xlane.f32.xlu0 %v2848
  %v2850 = vpop.xlane.xlu0 %2849
  %v2851 = vsel %vm76, %v2837, 0.0
  %2852 = vadd.xlane.f32.xlu0 %v2851
  %v2853 = vpop.xlane.xlu0 %2852
  %v2854 = vmul.f32 %v2844, %v89
  %v2855 = vmul.f32 %v2847, %v89
  %v2856 = vmul.f32 %v2850, %v89
  %v2857 = vmul.f32 %v2853, %v89
  %v2858 = vsub.f32 %v2834, %v2854
  %v2859 = vsub.f32 %v2835, %v2855
  %v2860 = vsub.f32 %v2836, %v2856
  %v2861 = vsub.f32 %v2837, %v2857
  %v2862 = vmul.f32 %v2858, %v2858
  %v2863 = vmul.f32 %v2859, %v2859
  %v2864 = vmul.f32 %v2860, %v2860
  %v2865 = vmul.f32 %v2861, %v2861
  %v2866 = vsel %vm76, %v2862, 0.0
  %2867 = vadd.xlane.f32.xlu0 %v2866
  %v2868 = vpop.xlane.xlu0 %2867
  %v2869 = vsel %vm76, %v2863, 0.0
  %2870 = vadd.xlane.f32.xlu0 %v2869
  %v2871 = vpop.xlane.xlu0 %2870
  %v2872 = vsel %vm76, %v2864, 0.0
  %2873 = vadd.xlane.f32.xlu0 %v2872
  %v2874 = vpop.xlane.xlu0 %2873
  %v2875 = vsel %vm76, %v2865, 0.0
  %2876 = vadd.xlane.f32.xlu0 %v2875
  %v2877 = vpop.xlane.xlu0 %2876
  %v2878 = vmul.f32 %v2868, %v89
  %v2879 = vmul.f32 %v2871, %v89
  %v2880 = vmul.f32 %v2874, %v89
  %v2881 = vmul.f32 %v2877, %v89
  %v2882 = vadd.f32 %v2878, 1e-07
  %v2883 = vadd.f32 %v2879, 1e-07
  %v2884 = vadd.f32 %v2880, 1e-07
  %v2885 = vadd.f32 %v2881, 1e-07
  %v2886 = vrsqrt.pop %v2882
  %v2887 = vrsqrt.pop %v2883
  %v2888 = vrsqrt.pop %v2884
  %v2889 = vrsqrt.pop %v2885
  %v2890 = vmul.f32 %v2858, %v2886
  %v2891 = vmul.f32 %v2859, %v2887
  %v2892 = vmul.f32 %v2860, %v2888
  %v2893 = vmul.f32 %v2861, %v2889
  %v2895 = vlaneseq
  %v2896 = vshrl.u32 %v2895, 7
  %v2897 = vsub.s32 0, %v2896
  %v2898 = vrot.slane %v2839, %v2897
  %v2900 = vmul.f32 %v2890, %v2898
  %v2901 = vmul.f32 %v2891, %v2898
  %v2902 = vmul.f32 %v2892, %v2898
  %v2903 = vmul.f32 %v2893, %v2898
  %v2905 = vlaneseq
  %v2906 = vshrl.u32 %v2905, 7
  %v2907 = vsub.s32 0, %v2906
  %v2908 = vrot.slane %v2841, %v2907
  %v2910 = vadd.f32 %v2900, %v2908
  %v2911 = vadd.f32 %v2901, %v2908
  %v2912 = vadd.f32 %v2902, %v2908
  %v2913 = vadd.f32 %v2903, %v2908
  %s2914 = scalar_lea.vmem %s10, 32
  %v2915 = vld [vmem:[%s2914] sm:$0xf]
  %v2916 = vld [vmem:[%s2914 + $0x4] sm:$0xf]
  %v2917 = vld [vmem:[%s2914 + $0x8] sm:$0xf]
  %v2918 = vld [vmem:[%s2914 + $0xc] sm:$0xf]
  %v2919 = vld [vmem:[%s2914 + $0x10] sm:$0xf]
  %v2920 = vld [vmem:[%s2914 + $0x14] sm:$0xf]
  %v2921 = vld [vmem:[%s2914 + $0x18] sm:$0xf]
  %v2922 = vld [vmem:[%s2914 + $0x1c] sm:$0xf]
  %v2923 = vpack.c.bf16 %v2911, %v2910
  %v2924 = vpack.c.bf16 %v2913, %v2912
  %s2925 = scalar_lea.vmem %s11, 1
  %v2926 = vld [vmem:[%s2925] sm:$0x1]
  %v2928 = vlaneseq
  %v2929 = vshrl.u32 %v2928, 7
  %v2930 = vsub.s32 0, %v2929
  %v2931 = vrot.slane %v2926, %v2930
  %v2941 = vunpack.c.l.b16 %v2915
  %v2942 = vunpack.c.l.b16 %v2916
  %v2943 = vunpack.c.l.b16 %v2917
  %v2944 = vunpack.c.l.b16 %v2918
  %v2945 = vunpack.c.l.b16 %v2919
  %v2946 = vunpack.c.l.b16 %v2920
  %v2947 = vunpack.c.l.b16 %v2921
  %v2948 = vunpack.c.l.b16 %v2922
  %v2949 = vpack.c.b16 %v2942, %v2941
  %v2950 = vpack.c.b16 %v2944, %v2943
  %v2951 = vpack.c.b16 %v2946, %v2945
  %v2952 = vpack.c.b16 %v2948, %v2947
  %v2958 = vsel %vm76, %v2923, 0
  %v2961 = vsel %vm76, %v2924, 0
  %2963 = vmatprep.subr.bf16.mxu0 0
  %2964 = vmatpush1.bf16.msra.mxu0 %v2949
  %2965 = vmatprep.subr.bf16.mxu0 0
  %2966 = vmatpush1.bf16.msra.mxu0 %v2950
  %2967 = vmatprep.subr.bf16.mxu0 0
  %2968 = vmatpush1.bf16.msra.mxu0 %v2951
  %2969 = vmatprep.subr.bf16.mxu0 0
  %2970 = vmatpush1.bf16.msra.mxu0 %v2952
  %2971 = vmatprep.subr.bf16.mxu0 0
  %2972 = vmatpush1.bf16.msra.mxu0 0
  %2973 = vmatprep.subr.bf16.mxu0 0
  %2974 = vmatpush1.bf16.msra.mxu0 0
  %2975 = vmatprep.subr.bf16.mxu0 0
  %2976 = vmatpush1.bf16.msra.mxu0 0
  %2977 = vmatprep.subr.bf16.mxu0 0
  %2978 = vmatpush1.bf16.msra.mxu0 0
  %2979 = vmatprep.subr.bf16.mxu0 0
  %2980 = vmatpush1.bf16.msra.mxu0 0
  %2981 = vmatprep.subr.bf16.mxu0 0
  %2982 = vmatpush1.bf16.msra.mxu0 0
  %2983 = vmatprep.subr.bf16.mxu0 0
  %2984 = vmatpush1.bf16.msra.mxu0 0
  %2985 = vmatprep.subr.bf16.mxu0 0
  %2986 = vmatpush1.bf16.msra.mxu0 0
  %2987 = vmatprep.subr.bf16.mxu0 0
  %2988 = vmatpush1.bf16.msra.mxu0 0
  %2989 = vmatprep.subr.bf16.mxu0 0
  %2990 = vmatpush1.bf16.msra.mxu0 0
  %2991 = vmatprep.subr.bf16.mxu0 0
  %2992 = vmatpush1.bf16.msra.mxu0 0
  %2993 = vmatprep.subr.bf16.mxu0 0
  %2994 = vmatpush1.bf16.msra.mxu0 0
  %2995 = vmatprep.mubr.bf16.mxu0 0
  %2996 = vmatmul.mubr.bf16.gmra.mrb[0].mxu0 %v2958
  %v2997 = vpop.f32.mrb[0].mxu0
  %v2998 = vadd.f32 %v2931, %v2997
  %v2999 = vpop.f32.mrb[0].mxu0
  %v3000 = vpop.f32.mrb[0].mxu0
  %v3001 = vadd.f32 %v2931, %v3000
  %v3002 = vpop.f32.mrb[0].mxu0
  %3003 = vmatprep.mubr.bf16.mxu0 0
  %3004 = vmatmul.mubr.bf16.gmra.mrb[0].mxu0 %v2961
  %v3005 = vpop.f32.mrb[0].mxu0
  %v3006 = vadd.f32 %v2931, %v3005
  %v3007 = vpop.f32.mrb[0].mxu0
  %v3008 = vpop.f32.mrb[0].mxu0
  %v3009 = vadd.f32 %v2931, %v3008
  %v3010 = vpop.f32.mrb[0].mxu0
  %3011 = vdwg.mxu0
  %v3012 = vmul.f32 %v2998, %v2998
  %v3013 = vmul.f32 %v3001, %v3001
  %v3014 = vmul.f32 %v3006, %v3006
  %v3015 = vmul.f32 %v3009, %v3009
  %v3016 = vmul.f32 %v2998, %v3012
  %v3017 = vmul.f32 %v3001, %v3013
  %v3018 = vmul.f32 %v3006, %v3014
  %v3019 = vmul.f32 %v3009, %v3015
  %v3020 = vmul.f32 %v3016, 0.044715
  %v3021 = vmul.f32 %v3017, 0.044715
  %v3022 = vmul.f32 %v3018, 0.044715
  %v3023 = vmul.f32 %v3019, 0.044715
  %v3024 = vadd.f32 %v2998, %v3020
  %v3025 = vadd.f32 %v3001, %v3021
  %v3026 = vadd.f32 %v3006, %v3022
  %v3027 = vadd.f32 %v3009, %v3023
  %v3028 = vmul.f32 %v3024, 0.7978846
  %v3029 = vmul.f32 %v3025, 0.7978846
  %v3030 = vmul.f32 %v3026, 0.7978846
  %v3031 = vmul.f32 %v3027, 0.7978846
  %v3032 = vtanh.pop %v3028
  %v3033 = vtanh.pop %v3029
  %v3034 = vtanh.pop %v3030
  %v3035 = vtanh.pop %v3031
  %v3036 = vadd.f32 %v3032, 1.0
  %v3037 = vadd.f32 %v3033, 1.0
  %v3038 = vadd.f32 %v3034, 1.0
  %v3039 = vadd.f32 %v3035, 1.0
  %v3040 = vmul.f32 %v3036, 0.5
  %v3041 = vmul.f32 %v3037, 0.5
  %v3042 = vmul.f32 %v3038, 0.5
  %v3043 = vmul.f32 %v3039, 0.5
  %v3044 = vmul.f32 %v2998, %v3040
  %v3045 = vmul.f32 %v3001, %v3041
  %v3046 = vmul.f32 %v3006, %v3042
  %v3047 = vmul.f32 %v3009, %v3043
  %s3048 = scalar_lea.vmem %s12, 64
  %v3049 = vld [vmem:[%s3048] sm:$0xf]
  %v3050 = vld [vmem:[%s3048 + $0x4] sm:$0xf]
  %v3051 = vld [vmem:[%s3048 + $0x8] sm:$0xf]
  %v3052 = vld [vmem:[%s3048 + $0xc] sm:$0xf]
  %v3053 = vld [vmem:[%s3048 + $0x10] sm:$0xf]
  %v3054 = vld [vmem:[%s3048 + $0x14] sm:$0xf]
  %v3055 = vld [vmem:[%s3048 + $0x18] sm:$0xf]
  %v3056 = vld [vmem:[%s3048 + $0x1c] sm:$0xf]
  %v3057 = vld [vmem:[%s3048 + $0x20] sm:$0xf]
  %v3058 = vld [vmem:[%s3048 + $0x24] sm:$0xf]
  %v3059 = vld [vmem:[%s3048 + $0x28] sm:$0xf]
  %v3060 = vld [vmem:[%s3048 + $0x2c] sm:$0xf]
  %v3061 = vld [vmem:[%s3048 + $0x30] sm:$0xf]
  %v3062 = vld [vmem:[%s3048 + $0x34] sm:$0xf]
  %v3063 = vld [vmem:[%s3048 + $0x38] sm:$0xf]
  %v3064 = vld [vmem:[%s3048 + $0x3c] sm:$0xf]
  %v3065 = vpack.c.bf16 %v3045, %v3044
  %v3066 = vpack.c.bf16 %v3047, %v3046
  %s3067 = scalar_lea.vmem %s13, 1
  %v3068 = vld [vmem:[%s3067] sm:$0x1]
  %v3070 = vlaneseq
  %v3071 = vshrl.u32 %v3070, 7
  %v3072 = vsub.s32 0, %v3071
  %v3073 = vrot.slane %v3068, %v3072
  %v3091 = vunpack.c.l.b16 %v3049
  %v3092 = vunpack.c.l.b16 %v3050
  %v3093 = vunpack.c.l.b16 %v3051
  %v3094 = vunpack.c.l.b16 %v3052
  %v3095 = vunpack.c.l.b16 %v3053
  %v3096 = vunpack.c.l.b16 %v3054
  %v3097 = vunpack.c.l.b16 %v3055
  %v3098 = vunpack.c.l.b16 %v3056
  %v3099 = vunpack.c.l.b16 %v3057
  %v3100 = vunpack.c.l.b16 %v3058
  %v3101 = vunpack.c.l.b16 %v3059
  %v3102 = vunpack.c.l.b16 %v3060
  %v3103 = vunpack.c.l.b16 %v3061
  %v3104 = vunpack.c.l.b16 %v3062
  %v3105 = vunpack.c.l.b16 %v3063
  %v3106 = vunpack.c.l.b16 %v3064
  %v3107 = vpack.c.b16 %v3092, %v3091
  %v3108 = vpack.c.b16 %v3094, %v3093
  %v3109 = vpack.c.b16 %v3096, %v3095
  %v3110 = vpack.c.b16 %v3098, %v3097
  %v3111 = vpack.c.b16 %v3100, %v3099
  %v3112 = vpack.c.b16 %v3102, %v3101
  %v3113 = vpack.c.b16 %v3104, %v3103
  %v3114 = vpack.c.b16 %v3106, %v3105
  %3123 = vmatprep.subr.bf16.mxu0 0
  %3124 = vmatpush1.bf16.msra.mxu0 %v3107
  %3125 = vmatprep.subr.bf16.mxu0 0
  %3126 = vmatpush1.bf16.msra.mxu0 %v3108
  %3127 = vmatprep.subr.bf16.mxu0 0
  %3128 = vmatpush1.bf16.msra.mxu0 %v3109
  %3129 = vmatprep.subr.bf16.mxu0 0
  %3130 = vmatpush1.bf16.msra.mxu0 %v3110
  %3131 = vmatprep.subr.bf16.mxu0 0
  %3132 = vmatpush1.bf16.msra.mxu0 %v3111
  %3133 = vmatprep.subr.bf16.mxu0 0
  %3134 = vmatpush1.bf16.msra.mxu0 %v3112
  %3135 = vmatprep.subr.bf16.mxu0 0
  %3136 = vmatpush1.bf16.msra.mxu0 %v3113
  %3137 = vmatprep.subr.bf16.mxu0 0
  %3138 = vmatpush1.bf16.msra.mxu0 %v3114
  %3139 = vmatprep.subr.bf16.mxu0 0
  %3140 = vmatpush1.bf16.msra.mxu0 0
  %3141 = vmatprep.subr.bf16.mxu0 0
  %3142 = vmatpush1.bf16.msra.mxu0 0
  %3143 = vmatprep.subr.bf16.mxu0 0
  %3144 = vmatpush1.bf16.msra.mxu0 0
  %3145 = vmatprep.subr.bf16.mxu0 0
  %3146 = vmatpush1.bf16.msra.mxu0 0
  %3147 = vmatprep.subr.bf16.mxu0 0
  %3148 = vmatpush1.bf16.msra.mxu0 0
  %3149 = vmatprep.subr.bf16.mxu0 0
  %3150 = vmatpush1.bf16.msra.mxu0 0
  %3151 = vmatprep.subr.bf16.mxu0 0
  %3152 = vmatpush1.bf16.msra.mxu0 0
  %3153 = vmatprep.subr.bf16.mxu0 0
  %3154 = vmatpush1.bf16.msra.mxu0 0
  %3155 = vmatprep.mubr.bf16.mxu0 0
  %3156 = vmatmul.mubr.bf16.gmra.mrb[0].mxu0 %v3065
  %v3157 = vpop.f32.mrb[0].mxu0
  %v3158 = vadd.f32 %v3073, %v3157
  %v3159 = vpop.f32.mrb[0].mxu0
  %v3160 = vpop.f32.mrb[0].mxu0
  %v3161 = vadd.f32 %v3073, %v3160
  %v3162 = vpop.f32.mrb[0].mxu0
  %3163 = vmatprep.mubr.bf16.mxu0 0
  %3164 = vmatmul.mubr.bf16.gmra.mrb[0].mxu0 %v3066
  %v3165 = vpop.f32.mrb[0].mxu0
  %v3166 = vadd.f32 %v3073, %v3165
  %v3167 = vpop.f32.mrb[0].mxu0
  %v3168 = vpop.f32.mrb[0].mxu0
  %v3169 = vadd.f32 %v3073, %v3168
  %v3170 = vpop.f32.mrb[0].mxu0
  %3171 = vdwg.mxu0
  %v3172 = vadd.f32 %v3158, %v2910
  %v3173 = vadd.f32 %v3161, %v2911
  %v3174 = vadd.f32 %v3166, %v2912
  %v3175 = vadd.f32 %v3169, %v2913
  %s3176 = scalar_lea.vmem %s14, 1
  %v3177 = vld [vmem:[%s3176] sm:$0x1]
  %s3178 = scalar_lea.vmem %s15, 1
  %v3179 = vld [vmem:[%s3178] sm:$0x1]
  %v3180 = vsel %vm76, %v3172, 0.0
  %3181 = vadd.xlane.f32.xlu0 %v3180
  %v3182 = vpop.xlane.xlu0 %3181
  %v3183 = vsel %vm76, %v3173, 0.0
  %3184 = vadd.xlane.f32.xlu0 %v3183
  %v3185 = vpop.xlane.xlu0 %3184
  %v3186 = vsel %vm76, %v3174, 0.0
  %3187 = vadd.xlane.f32.xlu0 %v3186
  %v3188 = vpop.xlane.xlu0 %3187
  %v3189 = vsel %vm76, %v3175, 0.0
  %3190 = vadd.xlane.f32.xlu0 %v3189
  %v3191 = vpop.xlane.xlu0 %3190
  %v3192 = vmul.f32 %v3182, %v89
  %v3193 = vmul.f32 %v3185, %v89
  %v3194 = vmul.f32 %v3188, %v89
  %v3195 = vmul.f32 %v3191, %v89
  %v3196 = vsub.f32 %v3172, %v3192
  %v3197 = vsub.f32 %v3173, %v3193
  %v3198 = vsub.f32 %v3174, %v3194
  %v3199 = vsub.f32 %v3175, %v3195
  %v3200 = vmul.f32 %v3196, %v3196
  %v3201 = vmul.f32 %v3197, %v3197
  %v3202 = vmul.f32 %v3198, %v3198
  %v3203 = vmul.f32 %v3199, %v3199
  %v3204 = vsel %vm76, %v3200, 0.0
  %3205 = vadd.xlane.f32.xlu0 %v3204
  %v3206 = vpop.xlane.xlu0 %3205
  %v3207 = vsel %vm76, %v3201, 0.0
  %3208 = vadd.xlane.f32.xlu0 %v3207
  %v3209 = vpop.xlane.xlu0 %3208
  %v3210 = vsel %vm76, %v3202, 0.0
  %3211 = vadd.xlane.f32.xlu0 %v3210
  %v3212 = vpop.xlane.xlu0 %3211
  %v3213 = vsel %vm76, %v3203, 0.0
  %3214 = vadd.xlane.f32.xlu0 %v3213
  %v3215 = vpop.xlane.xlu0 %3214
  %v3216 = vmul.f32 %v3206, %v89
  %v3217 = vmul.f32 %v3209, %v89
  %v3218 = vmul.f32 %v3212, %v89
  %v3219 = vmul.f32 %v3215, %v89
  %v3220 = vadd.f32 %v3216, 1e-07
  %v3221 = vadd.f32 %v3217, 1e-07
  %v3222 = vadd.f32 %v3218, 1e-07
  %v3223 = vadd.f32 %v3219, 1e-07
  %v3224 = vrsqrt.pop %v3220
  %v3225 = vrsqrt.pop %v3221
  %v3226 = vrsqrt.pop %v3222
  %v3227 = vrsqrt.pop %v3223
  %v3228 = vmul.f32 %v3196, %v3224
  %v3229 = vmul.f32 %v3197, %v3225
  %v3230 = vmul.f32 %v3198, %v3226
  %v3231 = vmul.f32 %v3199, %v3227
  %v3233 = vlaneseq
  %v3234 = vshrl.u32 %v3233, 7
  %v3235 = vsub.s32 0, %v3234
  %v3236 = vrot.slane %v3177, %v3235
  %v3238 = vmul.f32 %v3228, %v3236
  %v3239 = vmul.f32 %v3229, %v3236
  %v3240 = vmul.f32 %v3230, %v3236
  %v3241 = vmul.f32 %v3231, %v3236
  %v3243 = vlaneseq
  %v3244 = vshrl.u32 %v3243, 7
  %v3245 = vsub.s32 0, %v3244
  %v3246 = vrot.slane %v3179, %v3245
  %v3248 = vadd.f32 %v3238, %v3246
  %v3249 = vadd.f32 %v3239, %v3246
  %v3250 = vadd.f32 %v3240, %v3246
  %v3251 = vadd.f32 %v3241, %v3246
  %v3252 = vld [vmem:[%s16] sm:$0xf]
  %v3253 = vld [vmem:[%s16 + $0x4] sm:$0xf]
  %v3254 = vld [vmem:[%s16 + $0x8] sm:$0xf]
  %v3255 = vld [vmem:[%s16 + $0xc] sm:$0xf]
  %v3256 = vld [vmem:[%s16 + $0x10] sm:$0xf]
  %v3257 = vld [vmem:[%s16 + $0x14] sm:$0xf]
  %v3258 = vld [vmem:[%s16 + $0x18] sm:$0xf]
  %v3259 = vld [vmem:[%s16 + $0x1c] sm:$0xf]
  %v3260 = vpack.c.bf16 %v3249, %v3248
  %v3261 = vpack.c.bf16 %v3251, %v3250
  %v3262 = vld [vmem:[%s17] sm:$0x1]
  %v3264 = vlaneseq
  %v3265 = vshrl.u32 %v3264, 7
  %v3266 = vsub.s32 0, %v3265
  %v3267 = vrot.slane %v3262, %v3266
  %v3277 = vunpack.c.l.b16 %v3252
  %v3278 = vunpack.c.l.b16 %v3253
  %v3279 = vunpack.c.l.b16 %v3254
  %v3280 = vunpack.c.l.b16 %v3255
  %v3281 = vunpack.c.l.b16 %v3256
  %v3282 = vunpack.c.l.b16 %v3257
  %v3283 = vunpack.c.l.b16 %v3258
  %v3284 = vunpack.c.l.b16 %v3259
  %v3285 = vpack.c.b16 %v3278, %v3277
  %v3286 = vpack.c.b16 %v3280, %v3279
  %v3287 = vpack.c.b16 %v3282, %v3281
  %v3288 = vpack.c.b16 %v3284, %v3283
  %v3294 = vsel %vm76, %v3260, 0
  %v3297 = vsel %vm76, %v3261, 0
  %3299 = vmatprep.subr.bf16.mxu0 0
  %3300 = vmatpush1.bf16.msra.mxu0 %v3285
  %3301 = vmatprep.subr.bf16.mxu0 0
  %3302 = vmatpush1.bf16.msra.mxu0 %v3286
  %3303 = vmatprep.subr.bf16.mxu0 0
  %3304 = vmatpush1.bf16.msra.mxu0 %v3287
  %3305 = vmatprep.subr.bf16.mxu0 0
  %3306 = vmatpush1.bf16.msra.mxu0 %v3288
  %3307 = vmatprep.subr.bf16.mxu0 0
  %3308 = vmatpush1.bf16.msra.mxu0 0
  %3309 = vmatprep.subr.bf16.mxu0 0
  %3310 = vmatpush1.bf16.msra.mxu0 0
  %3311 = vmatprep.subr.bf16.mxu0 0
  %3312 = vmatpush1.bf16.msra.mxu0 0
  %3313 = vmatprep.subr.bf16.mxu0 0
  %3314 = vmatpush1.bf16.msra.mxu0 0
  %3315 = vmatprep.subr.bf16.mxu0 0
  %3316 = vmatpush1.bf16.msra.mxu0 0
  %3317 = vmatprep.subr.bf16.mxu0 0
  %3318 = vmatpush1.bf16.msra.mxu0 0
  %3319 = vmatprep.subr.bf16.mxu0 0
  %3320 = vmatpush1.bf16.msra.mxu0 0
  %3321 = vmatprep.subr.bf16.mxu0 0
  %3322 = vmatpush1.bf16.msra.mxu0 0
  %3323 = vmatprep.subr.bf16.mxu0 0
  %3324 = vmatpush1.bf16.msra.mxu0 0
  %3325 = vmatprep.subr.bf16.mxu0 0
  %3326 = vmatpush1.bf16.msra.mxu0 0
  %3327 = vmatprep.subr.bf16.mxu0 0
  %3328 = vmatpush1.bf16.msra.mxu0 0
  %3329 = vmatprep.subr.bf16.mxu0 0
  %3330 = vmatpush1.bf16.msra.mxu0 0
  %3331 = vmatprep.mubr.bf16.mxu0 0
  %3332 = vmatmul.mubr.bf16.gmra.mrb[0].mxu0 %v3294
  %v3333 = vpop.f32.mrb[0].mxu0
  %v3334 = vadd.f32 %v3267, %v3333
  %v3335 = vpop.f32.mrb[0].mxu0
  %v3336 = vpop.f32.mrb[0].mxu0
  %v3337 = vadd.f32 %v3267, %v3336
  %v3338 = vpop.f32.mrb[0].mxu0
  %3339 = vmatprep.mubr.bf16.mxu0 0
  %3340 = vmatmul.mubr.bf16.gmra.mrb[0].mxu0 %v3297
  %v3341 = vpop.f32.mrb[0].mxu0
  %v3342 = vadd.f32 %v3267, %v3341
  %v3343 = vpop.f32.mrb[0].mxu0
  %v3344 = vpop.f32.mrb[0].mxu0
  %v3345 = vadd.f32 %v3267, %v3344
  %v3346 = vpop.f32.mrb[0].mxu0
  %3347 = vdwg.mxu0
  %v3348 = vmul.f32 %v3334, %v3334
  %v3349 = vmul.f32 %v3337, %v3337
  %v3350 = vmul.f32 %v3342, %v3342
  %v3351 = vmul.f32 %v3345, %v3345
  %v3352 = vmul.f32 %v3334, %v3348
  %v3353 = vmul.f32 %v3337, %v3349
  %v3354 = vmul.f32 %v3342, %v3350
  %v3355 = vmul.f32 %v3345, %v3351
  %v3356 = vmul.f32 %v3352, 0.044715
  %v3357 = vmul.f32 %v3353, 0.044715
  %v3358 = vmul.f32 %v3354, 0.044715
  %v3359 = vmul.f32 %v3355, 0.044715
  %v3360 = vadd.f32 %v3334, %v3356
  %v3361 = vadd.f32 %v3337, %v3357
  %v3362 = vadd.f32 %v3342, %v3358
  %v3363 = vadd.f32 %v3345, %v3359
  %v3364 = vmul.f32 %v3360, 0.7978846
  %v3365 = vmul.f32 %v3361, 0.7978846
  %v3366 = vmul.f32 %v3362, 0.7978846
  %v3367 = vmul.f32 %v3363, 0.7978846
  %v3368 = vtanh.pop %v3364
  %v3369 = vtanh.pop %v3365
  %v3370 = vtanh.pop %v3366
  %v3371 = vtanh.pop %v3367
  %v3372 = vadd.f32 %v3368, 1.0
  %v3373 = vadd.f32 %v3369, 1.0
  %v3374 = vadd.f32 %v3370, 1.0
  %v3375 = vadd.f32 %v3371, 1.0
  %v3376 = vmul.f32 %v3372, 0.5
  %v3377 = vmul.f32 %v3373, 0.5
  %v3378 = vmul.f32 %v3374, 0.5
  %v3379 = vmul.f32 %v3375, 0.5
  %v3380 = vmul.f32 %v3334, %v3376
  %v3381 = vmul.f32 %v3337, %v3377
  %v3382 = vmul.f32 %v3342, %v3378
  %v3383 = vmul.f32 %v3345, %v3379
  %v3384 = vld [vmem:[%s18] sm:$0xf]
  %v3385 = vld [vmem:[%s18 + $0x4] sm:$0xf]
  %v3386 = vld [vmem:[%s18 + $0x8] sm:$0xf]
  %v3387 = vld [vmem:[%s18 + $0xc] sm:$0xf]
  %v3388 = vld [vmem:[%s18 + $0x10] sm:$0xf]
  %v3389 = vld [vmem:[%s18 + $0x14] sm:$0xf]
  %v3390 = vld [vmem:[%s18 + $0x18] sm:$0xf]
  %v3391 = vld [vmem:[%s18 + $0x1c] sm:$0xf]
  %v3392 = vpack.c.bf16 %v3381, %v3380
  %v3393 = vpack.c.bf16 %v3383, %v3382
  %v3394 = vld [vmem:[%s19] sm:$0x1]
  %v3396 = vlaneseq
  %v3397 = vshrl.u32 %v3396, 7
  %v3398 = vsub.s32 0, %v3397
  %v3399 = vrot.slane %v3394, %v3398
  %v3409 = vunpack.c.l.b16 %v3384
  %v3410 = vunpack.c.l.b16 %v3385
  %v3411 = vunpack.c.l.b16 %v3386
  %v3412 = vunpack.c.l.b16 %v3387
  %v3413 = vunpack.c.l.b16 %v3388
  %v3414 = vunpack.c.l.b16 %v3389
  %v3415 = vunpack.c.l.b16 %v3390
  %v3416 = vunpack.c.l.b16 %v3391
  %v3417 = vpack.c.b16 %v3410, %v3409
  %v3418 = vpack.c.b16 %v3412, %v3411
  %v3419 = vpack.c.b16 %v3414, %v3413
  %v3420 = vpack.c.b16 %v3416, %v3415
  %v3426 = vsel %vm76, %v3392, 0
  %v3429 = vsel %vm76, %v3393, 0
  %3431 = vmatprep.subr.bf16.mxu0 0
  %3432 = vmatpush1.bf16.msra.mxu0 %v3417
  %3433 = vmatprep.subr.bf16.mxu0 0
  %3434 = vmatpush1.bf16.msra.mxu0 %v3418
  %3435 = vmatprep.subr.bf16.mxu0 0
  %3436 = vmatpush1.bf16.msra.mxu0 %v3419
  %3437 = vmatprep.subr.bf16.mxu0 0
  %3438 = vmatpush1.bf16.msra.mxu0 %v3420
  %3439 = vmatprep.subr.bf16.mxu0 0
  %3440 = vmatpush1.bf16.msra.mxu0 0
  %3441 = vmatprep.subr.bf16.mxu0 0
  %3442 = vmatpush1.bf16.msra.mxu0 0
  %3443 = vmatprep.subr.bf16.mxu0 0
  %3444 = vmatpush1.bf16.msra.mxu0 0
  %3445 = vmatprep.subr.bf16.mxu0 0
  %3446 = vmatpush1.bf16.msra.mxu0 0
  %3447 = vmatprep.subr.bf16.mxu0 0
  %3448 = vmatpush1.bf16.msra.mxu0 0
  %3449 = vmatprep.subr.bf16.mxu0 0
  %3450 = vmatpush1.bf16.msra.mxu0 0
  %3451 = vmatprep.subr.bf16.mxu0 0
  %3452 = vmatpush1.bf16.msra.mxu0 0
  %3453 = vmatprep.subr.bf16.mxu0 0
  %3454 = vmatpush1.bf16.msra.mxu0 0
  %3455 = vmatprep.subr.bf16.mxu0 0
  %3456 = vmatpush1.bf16.msra.mxu0 0
  %3457 = vmatprep.subr.bf16.mxu0 0
  %3458 = vmatpush1.bf16.msra.mxu0 0
  %3459 = vmatprep.subr.bf16.mxu0 0
  %3460 = vmatpush1.bf16.msra.mxu0 0
  %3461 = vmatprep.subr.bf16.mxu0 0
  %3462 = vmatpush1.bf16.msra.mxu0 0
  %3463 = vmatprep.mubr.bf16.mxu0 0
  %3464 = vmatmul.mubr.bf16.gmra.mrb[0].mxu0 %v3426
  %v3465 = vpop.f32.mrb[0].mxu0
  %v3466 = vadd.f32 %v3399, %v3465
  %v3467 = vpop.f32.mrb[0].mxu0
  %v3468 = vpop.f32.mrb[0].mxu0
  %v3469 = vadd.f32 %v3399, %v3468
  %v3470 = vpop.f32.mrb[0].mxu0
  %3471 = vmatprep.mubr.bf16.mxu0 0
  %3472 = vmatmul.mubr.bf16.gmra.mrb[0].mxu0 %v3429
  %v3473 = vpop.f32.mrb[0].mxu0
  %v3474 = vadd.f32 %v3399, %v3473
  %v3475 = vpop.f32.mrb[0].mxu0
  %v3476 = vpop.f32.mrb[0].mxu0
  %v3477 = vadd.f32 %v3399, %v3476
  %v3478 = vpop.f32.mrb[0].mxu0
  %3479 = vdwg.mxu0
  %3480 = vst [vmem:[%s20] sm:$0xff] %v3466
  %3481 = vst [vmem:[%s20 + $0x8] sm:$0xff] %v3469
  %3482 = vst [vmem:[%s20 + $0x10] sm:$0xff] %v3474
  %3483 = vst [vmem:[%s20 + $0x18] sm:$0xff] %v3477
  // Predicated region
  $region82: #{deberta_forward.1} parent=0 // pred_check
    _
  $region83: #{deberta_forward.1} parent=0 // pred_check_branch
    %3485 = sbr.rel (0) target = $region85
  $region84: #{deberta_forward.1} parent=0 // pred_region
    _
  $region85: #{deberta_forward.1} parent=0 // pred_fallthru
    _
  // Predicated region
  $region86: #{deberta_forward.1} parent=0 // pred_check
    _
  $region87: #{deberta_forward.1} parent=0 // pred_check_branch
    %3487 = sbr.rel (0) target = $region89
  $region88: #{deberta_forward.1} parent=0 // pred_region
    _
  $region89: #{deberta_forward.1} parent=0 // pred_fallthru
    _

</llo_original>
